<compile_context>
chip_gen: v5e
topology: v5e:2x2
jax: 0.10.0
libtpu: 0.0.40
codegen_flags: <defaults>
</compile_context>

<pallas_src>
import functools

import jax
import jax.numpy as jnp
from jax import lax
from jax.experimental import pallas as pl
from jax.experimental.pallas import tpu as pltpu


D_MODEL = 768
NUM_HEADS = 8
D_K = D_MODEL // NUM_HEADS          # 96 (unpadded; streamed as-is)
N_GROUPS = 2                        # grid over head groups (reduction axis for fc_o)
HPG = NUM_HEADS // N_GROUPS         # 4 heads per group
GQ = HPG * D_K                      # 384 q/k/v columns per group
GKV = 2 * GQ                        # 768 fused [K|V] columns per group


def _mha_kernel(x1_ref, x2_ref, wq_ref, bq_ref, wkv_ref, bkv_ref, wo_ref, bo_ref,
                out_ref, attn_ref, *, B, S, hpg, d_k):
    """One head group: fused Q / (K|V) projections, per-head attention on 96-wide
    slices, and this group's partial fc_o contraction accumulated into out_ref."""
    g = pl.program_id(0)
    f32 = jnp.float32
    bf16 = jnp.bfloat16

    x1 = x1_ref[...]                       # (B*S, 768) bf16 (pre-cast in wrapper)
    x2 = x2_ref[...]

    # --- fused projections (bf16 weights, f32 accumulation), results kept in bf16 ---
    q = (jnp.dot(x1, wq_ref[...], preferred_element_type=f32)
         + bq_ref[...]).astype(bf16)                                   # (B*S, 384)
    kv = (jnp.dot(x2, wkv_ref[...], preferred_element_type=f32)
          + bkv_ref[...]).astype(bf16)                                 # (B*S, 768)

    kw = hpg * d_k                          # v columns start here inside kv
    inv_scale = 1.0 / (float(d_k) ** 0.5)

    # --- attention, unrolled over (batch, head-in-group); 96-wide per-head slices ---
    for b in range(B):
        rs = slice(b * S, (b + 1) * S)
        for j in range(hpg):
            cs = slice(j * d_k, (j + 1) * d_k)
            vs = slice(kw + j * d_k, kw + (j + 1) * d_k)
            qh = q[rs, cs]                                             # (S, 96) bf16
            kh = kv[rs, cs]                                            # (S, 96) bf16
            vh = kv[rs, vs]                                            # (S, 96) bf16

            # scores = q @ k^T via dot_general contracting last dims (no explicit .T)
            s = lax.dot_general(qh, kh, (((1,), (1,)), ((), ())),
                                preferred_element_type=f32) * inv_scale  # (S, S) f32
            m = jnp.max(s, axis=-1, keepdims=True)
            e = jnp.exp(s - m)
            p = (e / jnp.sum(e, axis=-1, keepdims=True)).astype(bf16)

            attn_ref[rs, cs] = jnp.dot(p, vh,
                                       preferred_element_type=f32).astype(bf16)

    # --- partial output projection for this head group, accumulated across grid ---
    partial = jnp.dot(attn_ref[...], wo_ref[...], preferred_element_type=f32)  # (B*S, 768)

    @pl.when(g == 0)
    def _():
        out_ref[...] = partial + bo_ref[...]

    @pl.when(g > 0)
    def _():
        out_ref[...] += partial


def mha_forward(x1, x2, kparams):
    """x1, x2: (B, S, D) float32. kparams: packed (grouped, bf16) weights."""
    B, S, D = x1.shape
    assert D == D_MODEL
    BS = B * S

    x1f = x1.reshape(BS, D).astype(jnp.bfloat16)
    x2f = x2.reshape(BS, D).astype(jnp.bfloat16)

    kernel = functools.partial(_mha_kernel, B=B, S=S, hpg=HPG, d_k=D_K)

    out = pl.pallas_call(
        kernel,
        out_shape=jax.ShapeDtypeStruct((BS, D_MODEL), jnp.float32),
        grid=(N_GROUPS,),
        in_specs=[
            pl.BlockSpec((BS, D_MODEL), lambda g: (0, 0)),     # x1 (full, reused)
            pl.BlockSpec((BS, D_MODEL), lambda g: (0, 0)),     # x2 (full, reused)
            pl.BlockSpec((D_MODEL, GQ), lambda g: (0, g)),     # W_q cols for group g (bf16)
            pl.BlockSpec((1, GQ), lambda g: (0, g)),           # b_q for group g (f32)
            pl.BlockSpec((D_MODEL, GKV), lambda g: (0, g)),    # [W_k|W_v] cols for group g
            pl.BlockSpec((1, GKV), lambda g: (0, g)),          # [b_k|b_v] for group g
            pl.BlockSpec((GQ, D_MODEL), lambda g: (g, 0)),     # W_o rows for group g (bf16)
            pl.BlockSpec((1, D_MODEL), lambda g: (0, 0)),      # b_o (f32)
        ],
        out_specs=pl.BlockSpec((BS, D_MODEL), lambda g: (0, 0)),  # accumulator across g
        scratch_shapes=[pltpu.VMEM((BS, GQ), jnp.bfloat16)],
        compiler_params=pltpu.CompilerParams(dimension_semantics=("arbitrary",)),
    )(
        x1f, x2f,
        kparams["wq_p"], kparams["bq_p"],
        kparams["wkv_p"], kparams["bkv_p"],
        kparams["wo_p"], kparams["bo"],
    )
    return out.reshape(B, S, D)


# ---------------------------------------------------------------------------
# parameter construction / packing
# ---------------------------------------------------------------------------
def init_params(key):
    """Deterministic synthetic parameters (PyTorch Linear: weight (out, in), bias (out,)).
    Stored pre-transposed to (in, out) so y = x @ W_t + b."""
    ks = jax.random.split(key, 8)
    scale = 0.02

    def lin(kw, kb):
        w = jax.random.normal(kw, (D_MODEL, D_MODEL), jnp.float32) * scale
        b = jax.random.normal(kb, (D_MODEL,), jnp.float32) * scale
        return w.T, b.reshape(1, D_MODEL)

    wq_t, bq = lin(ks[0], ks[1])
    wk_t, bk = lin(ks[2], ks[3])
    wv_t, bv = lin(ks[4], ks[5])
    wo_t, bo = lin(ks[6], ks[7])
    return dict(wq_t=wq_t, bq=bq, wk_t=wk_t, bk=bk,
                wv_t=wv_t, bv=bv, wo_t=wo_t, bo=bo)


def pack_params(p):
    """Group-interleave K|V columns and cast weights to bf16 (no zero padding)."""
    bf16 = jnp.bfloat16

    # Heads are already contiguous column blocks of width D_K -> group g is cols
    # [g*GQ, (g+1)*GQ) of W_q (and rows [g*GQ, (g+1)*GQ) of W_o): no reorder needed.
    wq_p = p["wq_t"].astype(bf16)                                        # (768, 768)
    bq_p = p["bq"]                                                       # (1, 768) f32

    wkv_p = jnp.concatenate(
        [p["wk_t"].reshape(D_MODEL, N_GROUPS, GQ),
         p["wv_t"].reshape(D_MODEL, N_GROUPS, GQ)], axis=2,
    ).reshape(D_MODEL, N_GROUPS * GKV).astype(bf16)                      # (768, 1536)
    bkv_p = jnp.concatenate(
        [p["bk"].reshape(1, N_GROUPS, GQ),
         p["bv"].reshape(1, N_GROUPS, GQ)], axis=2,
    ).reshape(1, N_GROUPS * GKV)                                         # (1, 1536) f32

    wo_p = p["wo_t"].astype(bf16)                                        # (768, 768)
    return dict(wq_p=wq_p, bq_p=bq_p, wkv_p=wkv_p, bkv_p=bkv_p,
                wo_p=wo_p, bo=p["bo"])


# ---------------------------------------------------------------------------
# reference (mirrors the kernel's numeric scheme: bf16 weights/activations into
# the MXU, f32 accumulation, f32 softmax, bf16 probs/attn into the MXU)
# ---------------------------------------------------------------------------
def mha_reference(x1, x2, params):
    B, S, D = x1.shape
    H, dk = NUM_HEADS, D_K
    f32, bf16 = jnp.float32, jnp.bfloat16

    x1b = x1.reshape(B * S, D).astype(bf16)
    x2b = x2.reshape(B * S, D).astype(bf16)
    q = (jnp.dot(x1b, params["wq_t"].astype(bf16), preferred_element_type=f32)
         + params["bq"]).astype(bf16)
    k = (jnp.dot(x2b, params["wk_t"].astype(bf16), preferred_element_type=f32)
         + params["bk"]).astype(bf16)
    v = (jnp.dot(x2b, params["wv_t"].astype(bf16), preferred_element_type=f32)
         + params["bv"]).astype(bf16)

    q = q.reshape(B, S, H, dk).transpose(0, 2, 1, 3)
    k = k.reshape(B, S, H, dk).transpose(0, 2, 1, 3)
    v = v.reshape(B, S, H, dk).transpose(0, 2, 1, 3)
    s = jnp.einsum("bhqd,bhkd->bhqk", q, k, preferred_element_type=f32) / (dk ** 0.5)
    p = jax.nn.softmax(s, axis=-1).astype(bf16)
    a = jnp.einsum("bhqk,bhkd->bhqd", p, v, preferred_element_type=f32)

    a = a.transpose(0, 2, 1, 3).reshape(B * S, D).astype(bf16)
    o = jnp.dot(a, params["wo_t"].astype(bf16), preferred_element_type=f32) + params["bo"]
    return o.reshape(B, S, D)


if __name__ == "__main__":
    key = jax.random.PRNGKey(0)
    k_in1, k_in2, k_par = jax.random.split(key, 3)

    B, S = 2, 16
    x1 = jax.random.normal(k_in1, (B, S, D_MODEL), jnp.float32)
    x2 = jax.random.normal(k_in2, (B, S, D_MODEL), jnp.float32)

    params = init_params(k_par)
    kparams = pack_params(params)

    y = mha_forward(x1, x2, kparams)
    jax.block_until_ready(y)

    y_ref = mha_reference(x1, x2, params)
    assert y.shape == (B, S, D_MODEL), y.shape
    max_err = float(jnp.max(jnp.abs(y - y_ref)))
    assert jnp.allclose(y, y_ref, atol=5e-3, rtol=5e-3), \
        f"mismatch vs reference (max abs err {max_err})"

    print("KERNEL_OK")
</pallas_src>

<mosaic_0001>
module attributes {stable_mosaic.version = 11 : i64} {
  func.func @_mha_kernel(%arg0: i32, %arg1: memref<32x768xbf16, #tpu.memory_space<vmem>>, %arg2: memref<32x768xbf16, #tpu.memory_space<vmem>>, %arg3: memref<768x384xbf16, #tpu.memory_space<vmem>>, %arg4: memref<1x384xf32, #tpu.memory_space<vmem>>, %arg5: memref<768x768xbf16, #tpu.memory_space<vmem>>, %arg6: memref<1x768xf32, #tpu.memory_space<vmem>>, %arg7: memref<384x768xbf16, #tpu.memory_space<vmem>>, %arg8: memref<1x768xf32, #tpu.memory_space<vmem>>, %arg9: memref<32x768xf32, #tpu.memory_space<vmem>>, %arg10: memref<32x384xbf16, #tpu.memory_space<vmem>>) attributes {dimension_semantics = [#tpu.dimension_semantics<arbitrary>], iteration_bounds = array<i64: 2>, scalar_prefetch = 0 : i64, scratch_operands = 1 : i64, tpu.core_type = #tpu.core_type<tc>, window_params = [{pipeline_mode = #tpu.pipeline_mode<synchronous>, transform_indices = @transform_0, window_bounds = array<i64: 32, 768>}, {pipeline_mode = #tpu.pipeline_mode<synchronous>, transform_indices = @transform_1, window_bounds = array<i64: 32, 768>}, {transform_indices = @transform_2, window_bounds = array<i64: 768, 384>}, {transform_indices = @transform_3, window_bounds = array<i64: 1, 384>}, {transform_indices = @transform_4, window_bounds = array<i64: 768, 768>}, {transform_indices = @transform_5, window_bounds = array<i64: 1, 768>}, {transform_indices = @transform_6, window_bounds = array<i64: 384, 768>}, {pipeline_mode = #tpu.pipeline_mode<synchronous>, transform_indices = @transform_7, window_bounds = array<i64: 1, 768>}, {pipeline_mode = #tpu.pipeline_mode<synchronous>, transform_indices = @transform_8, window_bounds = array<i64: 32, 768>}]} {
    %c0 = arith.constant 0 : index
    %c0_0 = arith.constant 0 : index
    %0 = vector.load %arg1[%c0, %c0_0] : memref<32x768xbf16, #tpu.memory_space<vmem>>, vector<32x768xbf16>
    %c0_1 = arith.constant 0 : index
    %c0_2 = arith.constant 0 : index
    %1 = vector.load %arg2[%c0_1, %c0_2] : memref<32x768xbf16, #tpu.memory_space<vmem>>, vector<32x768xbf16>
    %c0_3 = arith.constant 0 : index
    %c0_4 = arith.constant 0 : index
    %2 = vector.load %arg3[%c0_3, %c0_4] : memref<768x384xbf16, #tpu.memory_space<vmem>>, vector<768x384xbf16>
    %cst = arith.constant dense<0.000000e+00> : vector<32x384xf32>
    %3 = tpu.matmul %0, %2, %cst {dimension_numbers = #tpu.dot_dimension_numbers<[1], [0], [0], [1], [0, 0, 1, 1], [], []>} : vector<32x768xbf16>, vector<768x384xbf16>, vector<32x384xf32> -> vector<32x384xf32>
    %c0_5 = arith.constant 0 : index
    %c0_6 = arith.constant 0 : index
    %4 = vector.load %arg4[%c0_5, %c0_6] : memref<1x384xf32, #tpu.memory_space<vmem>>, vector<1x384xf32>
    %5 = vector.broadcast %4 : vector<1x384xf32> to vector<32x384xf32>
    %6 = arith.addf %3, %5 : vector<32x384xf32>
    %7 = arith.truncf %6 : vector<32x384xf32> to vector<32x384xbf16>
    %c0_7 = arith.constant 0 : index
    %c0_8 = arith.constant 0 : index
    %8 = vector.load %arg5[%c0_7, %c0_8] : memref<768x768xbf16, #tpu.memory_space<vmem>>, vector<768x768xbf16>
    %cst_9 = arith.constant dense<0.000000e+00> : vector<32x768xf32>
    %9 = tpu.matmul %1, %8, %cst_9 {dimension_numbers = #tpu.dot_dimension_numbers<[1], [0], [0], [1], [0, 0, 1, 1], [], []>} : vector<32x768xbf16>, vector<768x768xbf16>, vector<32x768xf32> -> vector<32x768xf32>
    %c0_10 = arith.constant 0 : index
    %c0_11 = arith.constant 0 : index
    %10 = vector.load %arg6[%c0_10, %c0_11] : memref<1x768xf32, #tpu.memory_space<vmem>>, vector<1x768xf32>
    %11 = vector.broadcast %10 : vector<1x768xf32> to vector<32x768xf32>
    %12 = arith.addf %9, %11 : vector<32x768xf32>
    %13 = arith.truncf %12 : vector<32x768xf32> to vector<32x768xbf16>
    %14 = vector.extract_strided_slice %7 {offsets = [0, 0], sizes = [16, 96], strides = [1, 1]} : vector<32x384xbf16> to vector<16x96xbf16>
    %15 = vector.extract_strided_slice %13 {offsets = [0, 0], sizes = [16, 96], strides = [1, 1]} : vector<32x768xbf16> to vector<16x96xbf16>
    %16 = vector.extract_strided_slice %13 {offsets = [0, 384], sizes = [16, 96], strides = [1, 1]} : vector<32x768xbf16> to vector<16x96xbf16>
    %cst_12 = arith.constant dense<0.000000e+00> : vector<16x16xf32>
    %17 = tpu.matmul %14, %15, %cst_12 {dimension_numbers = #tpu.dot_dimension_numbers<[1], [1], [0], [0], [0, 0, 1, 0], [], []>} : vector<16x96xbf16>, vector<16x96xbf16>, vector<16x16xf32> -> vector<16x16xf32>
    %cst_13 = arith.constant 0.102062076 : f32
    %18 = vector.broadcast %cst_13 : f32 to vector<16x16xf32>
    %19 = arith.mulf %17, %18 : vector<16x16xf32>
    %cst_14 = arith.constant dense<0xFF800000> : vector<16xf32>
    %20 = vector.multi_reduction <maximumf>, %19, %cst_14 [1] : vector<16x16xf32> to vector<16xf32>
    %21 = vector.shape_cast %20 : vector<16xf32> to vector<16x1xf32>
    %22 = vector.broadcast %21 : vector<16x1xf32> to vector<16x16xf32>
    %23 = arith.subf %19, %22 : vector<16x16xf32>
    %24 = math.exp %23 : vector<16x16xf32>
    %cst_15 = arith.constant dense<0.000000e+00> : vector<16xf32>
    %25 = vector.multi_reduction <add>, %24, %cst_15 [1] : vector<16x16xf32> to vector<16xf32>
    %26 = vector.shape_cast %25 : vector<16xf32> to vector<16x1xf32>
    %27 = vector.broadcast %26 : vector<16x1xf32> to vector<16x16xf32>
    %28 = arith.divf %24, %27 : vector<16x16xf32>
    %29 = arith.truncf %28 : vector<16x16xf32> to vector<16x16xbf16>
    %cst_16 = arith.constant dense<0.000000e+00> : vector<16x96xf32>
    %30 = tpu.matmul %29, %16, %cst_16 {dimension_numbers = #tpu.dot_dimension_numbers<[1], [0], [0], [1], [0, 0, 1, 1], [], []>} : vector<16x16xbf16>, vector<16x96xbf16>, vector<16x96xf32> -> vector<16x96xf32>
    %31 = arith.truncf %30 : vector<16x96xf32> to vector<16x96xbf16>
    %c0_17 = arith.constant 0 : index
    %c0_18 = arith.constant 0 : index
    %32 = vector.load %arg10[%c0_17, %c0_18] : memref<32x384xbf16, #tpu.memory_space<vmem>>, vector<16x96xbf16>
    tpu.vector_store %arg10[%c0_17, %c0_18], %31 {strides = array<i32>} : memref<32x384xbf16, #tpu.memory_space<vmem>>, vector<16x96xbf16>,
    %33 = vector.extract_strided_slice %7 {offsets = [0, 96], sizes = [16, 96], strides = [1, 1]} : vector<32x384xbf16> to vector<16x96xbf16>
    %34 = vector.extract_strided_slice %13 {offsets = [0, 96], sizes = [16, 96], strides = [1, 1]} : vector<32x768xbf16> to vector<16x96xbf16>
    %35 = vector.extract_strided_slice %13 {offsets = [0, 480], sizes = [16, 96], strides = [1, 1]} : vector<32x768xbf16> to vector<16x96xbf16>
    %cst_19 = arith.constant dense<0.000000e+00> : vector<16x16xf32>
    %36 = tpu.matmul %33, %34, %cst_19 {dimension_numbers = #tpu.dot_dimension_numbers<[1], [1], [0], [0], [0, 0, 1, 0], [], []>} : vector<16x96xbf16>, vector<16x96xbf16>, vector<16x16xf32> -> vector<16x16xf32>
    %cst_20 = arith.constant 0.102062076 : f32
    %37 = vector.broadcast %cst_20 : f32 to vector<16x16xf32>
    %38 = arith.mulf %36, %37 : vector<16x16xf32>
    %cst_21 = arith.constant dense<0xFF800000> : vector<16xf32>
    %39 = vector.multi_reduction <maximumf>, %38, %cst_21 [1] : vector<16x16xf32> to vector<16xf32>
    %40 = vector.shape_cast %39 : vector<16xf32> to vector<16x1xf32>
    %41 = vector.broadcast %40 : vector<16x1xf32> to vector<16x16xf32>
    %42 = arith.subf %38, %41 : vector<16x16xf32>
    %43 = math.exp %42 : vector<16x16xf32>
    %cst_22 = arith.constant dense<0.000000e+00> : vector<16xf32>
    %44 = vector.multi_reduction <add>, %43, %cst_22 [1] : vector<16x16xf32> to vector<16xf32>
    %45 = vector.shape_cast %44 : vector<16xf32> to vector<16x1xf32>
    %46 = vector.broadcast %45 : vector<16x1xf32> to vector<16x16xf32>
    %47 = arith.divf %43, %46 : vector<16x16xf32>
    %48 = arith.truncf %47 : vector<16x16xf32> to vector<16x16xbf16>
    %cst_23 = arith.constant dense<0.000000e+00> : vector<16x96xf32>
    %49 = tpu.matmul %48, %35, %cst_23 {dimension_numbers = #tpu.dot_dimension_numbers<[1], [0], [0], [1], [0, 0, 1, 1], [], []>} : vector<16x16xbf16>, vector<16x96xbf16>, vector<16x96xf32> -> vector<16x96xf32>
    %50 = arith.truncf %49 : vector<16x96xf32> to vector<16x96xbf16>
    %c0_24 = arith.constant 0 : index
    %c96 = arith.constant 96 : index
    %51 = vector.load %arg10[%c0_24, %c96] : memref<32x384xbf16, #tpu.memory_space<vmem>>, vector<16x96xbf16>
    tpu.vector_store %arg10[%c0_24, %c96], %50 {strides = array<i32>} : memref<32x384xbf16, #tpu.memory_space<vmem>>, vector<16x96xbf16>,
    %52 = vector.extract_strided_slice %7 {offsets = [0, 192], sizes = [16, 96], strides = [1, 1]} : vector<32x384xbf16> to vector<16x96xbf16>
    %53 = vector.extract_strided_slice %13 {offsets = [0, 192], sizes = [16, 96], strides = [1, 1]} : vector<32x768xbf16> to vector<16x96xbf16>
    %54 = vector.extract_strided_slice %13 {offsets = [0, 576], sizes = [16, 96], strides = [1, 1]} : vector<32x768xbf16> to vector<16x96xbf16>
    %cst_25 = arith.constant dense<0.000000e+00> : vector<16x16xf32>
    %55 = tpu.matmul %52, %53, %cst_25 {dimension_numbers = #tpu.dot_dimension_numbers<[1], [1], [0], [0], [0, 0, 1, 0], [], []>} : vector<16x96xbf16>, vector<16x96xbf16>, vector<16x16xf32> -> vector<16x16xf32>
    %cst_26 = arith.constant 0.102062076 : f32
    %56 = vector.broadcast %cst_26 : f32 to vector<16x16xf32>
    %57 = arith.mulf %55, %56 : vector<16x16xf32>
    %cst_27 = arith.constant dense<0xFF800000> : vector<16xf32>
    %58 = vector.multi_reduction <maximumf>, %57, %cst_27 [1] : vector<16x16xf32> to vector<16xf32>
    %59 = vector.shape_cast %58 : vector<16xf32> to vector<16x1xf32>
    %60 = vector.broadcast %59 : vector<16x1xf32> to vector<16x16xf32>
    %61 = arith.subf %57, %60 : vector<16x16xf32>
    %62 = math.exp %61 : vector<16x16xf32>
    %cst_28 = arith.constant dense<0.000000e+00> : vector<16xf32>
    %63 = vector.multi_reduction <add>, %62, %cst_28 [1] : vector<16x16xf32> to vector<16xf32>
    %64 = vector.shape_cast %63 : vector<16xf32> to vector<16x1xf32>
    %65 = vector.broadcast %64 : vector<16x1xf32> to vector<16x16xf32>
    %66 = arith.divf %62, %65 : vector<16x16xf32>
    %67 = arith.truncf %66 : vector<16x16xf32> to vector<16x16xbf16>
    %cst_29 = arith.constant dense<0.000000e+00> : vector<16x96xf32>
    %68 = tpu.matmul %67, %54, %cst_29 {dimension_numbers = #tpu.dot_dimension_numbers<[1], [0], [0], [1], [0, 0, 1, 1], [], []>} : vector<16x16xbf16>, vector<16x96xbf16>, vector<16x96xf32> -> vector<16x96xf32>
    %69 = arith.truncf %68 : vector<16x96xf32> to vector<16x96xbf16>
    %c0_30 = arith.constant 0 : index
    %c192 = arith.constant 192 : index
    %70 = vector.load %arg10[%c0_30, %c192] : memref<32x384xbf16, #tpu.memory_space<vmem>>, vector<16x96xbf16>
    tpu.vector_store %arg10[%c0_30, %c192], %69 {strides = array<i32>} : memref<32x384xbf16, #tpu.memory_space<vmem>>, vector<16x96xbf16>,
    %71 = vector.extract_strided_slice %7 {offsets = [0, 288], sizes = [16, 96], strides = [1, 1]} : vector<32x384xbf16> to vector<16x96xbf16>
    %72 = vector.extract_strided_slice %13 {offsets = [0, 288], sizes = [16, 96], strides = [1, 1]} : vector<32x768xbf16> to vector<16x96xbf16>
    %73 = vector.extract_strided_slice %13 {offsets = [0, 672], sizes = [16, 96], strides = [1, 1]} : vector<32x768xbf16> to vector<16x96xbf16>
    %cst_31 = arith.constant dense<0.000000e+00> : vector<16x16xf32>
    %74 = tpu.matmul %71, %72, %cst_31 {dimension_numbers = #tpu.dot_dimension_numbers<[1], [1], [0], [0], [0, 0, 1, 0], [], []>} : vector<16x96xbf16>, vector<16x96xbf16>, vector<16x16xf32> -> vector<16x16xf32>
    %cst_32 = arith.constant 0.102062076 : f32
    %75 = vector.broadcast %cst_32 : f32 to vector<16x16xf32>
    %76 = arith.mulf %74, %75 : vector<16x16xf32>
    %cst_33 = arith.constant dense<0xFF800000> : vector<16xf32>
    %77 = vector.multi_reduction <maximumf>, %76, %cst_33 [1] : vector<16x16xf32> to vector<16xf32>
    %78 = vector.shape_cast %77 : vector<16xf32> to vector<16x1xf32>
    %79 = vector.broadcast %78 : vector<16x1xf32> to vector<16x16xf32>
    %80 = arith.subf %76, %79 : vector<16x16xf32>
    %81 = math.exp %80 : vector<16x16xf32>
    %cst_34 = arith.constant dense<0.000000e+00> : vector<16xf32>
    %82 = vector.multi_reduction <add>, %81, %cst_34 [1] : vector<16x16xf32> to vector<16xf32>
    %83 = vector.shape_cast %82 : vector<16xf32> to vector<16x1xf32>
    %84 = vector.broadcast %83 : vector<16x1xf32> to vector<16x16xf32>
    %85 = arith.divf %81, %84 : vector<16x16xf32>
    %86 = arith.truncf %85 : vector<16x16xf32> to vector<16x16xbf16>
    %cst_35 = arith.constant dense<0.000000e+00> : vector<16x96xf32>
    %87 = tpu.matmul %86, %73, %cst_35 {dimension_numbers = #tpu.dot_dimension_numbers<[1], [0], [0], [1], [0, 0, 1, 1], [], []>} : vector<16x16xbf16>, vector<16x96xbf16>, vector<16x96xf32> -> vector<16x96xf32>
    %88 = arith.truncf %87 : vector<16x96xf32> to vector<16x96xbf16>
    %c0_36 = arith.constant 0 : index
    %c288 = arith.constant 288 : index
    %89 = vector.load %arg10[%c0_36, %c288] : memref<32x384xbf16, #tpu.memory_space<vmem>>, vector<16x96xbf16>
    tpu.vector_store %arg10[%c0_36, %c288], %88 {strides = array<i32>} : memref<32x384xbf16, #tpu.memory_space<vmem>>, vector<16x96xbf16>,
    %90 = vector.extract_strided_slice %7 {offsets = [16, 0], sizes = [16, 96], strides = [1, 1]} : vector<32x384xbf16> to vector<16x96xbf16>
    %91 = vector.extract_strided_slice %13 {offsets = [16, 0], sizes = [16, 96], strides = [1, 1]} : vector<32x768xbf16> to vector<16x96xbf16>
    %92 = vector.extract_strided_slice %13 {offsets = [16, 384], sizes = [16, 96], strides = [1, 1]} : vector<32x768xbf16> to vector<16x96xbf16>
    %cst_37 = arith.constant dense<0.000000e+00> : vector<16x16xf32>
    %93 = tpu.matmul %90, %91, %cst_37 {dimension_numbers = #tpu.dot_dimension_numbers<[1], [1], [0], [0], [0, 0, 1, 0], [], []>} : vector<16x96xbf16>, vector<16x96xbf16>, vector<16x16xf32> -> vector<16x16xf32>
    %cst_38 = arith.constant 0.102062076 : f32
    %94 = vector.broadcast %cst_38 : f32 to vector<16x16xf32>
    %95 = arith.mulf %93, %94 : vector<16x16xf32>
    %cst_39 = arith.constant dense<0xFF800000> : vector<16xf32>
    %96 = vector.multi_reduction <maximumf>, %95, %cst_39 [1] : vector<16x16xf32> to vector<16xf32>
    %97 = vector.shape_cast %96 : vector<16xf32> to vector<16x1xf32>
    %98 = vector.broadcast %97 : vector<16x1xf32> to vector<16x16xf32>
    %99 = arith.subf %95, %98 : vector<16x16xf32>
    %100 = math.exp %99 : vector<16x16xf32>
    %cst_40 = arith.constant dense<0.000000e+00> : vector<16xf32>
    %101 = vector.multi_reduction <add>, %100, %cst_40 [1] : vector<16x16xf32> to vector<16xf32>
    %102 = vector.shape_cast %101 : vector<16xf32> to vector<16x1xf32>
    %103 = vector.broadcast %102 : vector<16x1xf32> to vector<16x16xf32>
    %104 = arith.divf %100, %103 : vector<16x16xf32>
    %105 = arith.truncf %104 : vector<16x16xf32> to vector<16x16xbf16>
    %cst_41 = arith.constant dense<0.000000e+00> : vector<16x96xf32>
    %106 = tpu.matmul %105, %92, %cst_41 {dimension_numbers = #tpu.dot_dimension_numbers<[1], [0], [0], [1], [0, 0, 1, 1], [], []>} : vector<16x16xbf16>, vector<16x96xbf16>, vector<16x96xf32> -> vector<16x96xf32>
    %107 = arith.truncf %106 : vector<16x96xf32> to vector<16x96xbf16>
    %c16 = arith.constant 16 : index
    %c0_42 = arith.constant 0 : index
    %108 = vector.load %arg10[%c16, %c0_42] : memref<32x384xbf16, #tpu.memory_space<vmem>>, vector<16x96xbf16>
    tpu.vector_store %arg10[%c16, %c0_42], %107 {strides = array<i32>} : memref<32x384xbf16, #tpu.memory_space<vmem>>, vector<16x96xbf16>,
    %109 = vector.extract_strided_slice %7 {offsets = [16, 96], sizes = [16, 96], strides = [1, 1]} : vector<32x384xbf16> to vector<16x96xbf16>
    %110 = vector.extract_strided_slice %13 {offsets = [16, 96], sizes = [16, 96], strides = [1, 1]} : vector<32x768xbf16> to vector<16x96xbf16>
    %111 = vector.extract_strided_slice %13 {offsets = [16, 480], sizes = [16, 96], strides = [1, 1]} : vector<32x768xbf16> to vector<16x96xbf16>
    %cst_43 = arith.constant dense<0.000000e+00> : vector<16x16xf32>
    %112 = tpu.matmul %109, %110, %cst_43 {dimension_numbers = #tpu.dot_dimension_numbers<[1], [1], [0], [0], [0, 0, 1, 0], [], []>} : vector<16x96xbf16>, vector<16x96xbf16>, vector<16x16xf32> -> vector<16x16xf32>
    %cst_44 = arith.constant 0.102062076 : f32
    %113 = vector.broadcast %cst_44 : f32 to vector<16x16xf32>
    %114 = arith.mulf %112, %113 : vector<16x16xf32>
    %cst_45 = arith.constant dense<0xFF800000> : vector<16xf32>
    %115 = vector.multi_reduction <maximumf>, %114, %cst_45 [1] : vector<16x16xf32> to vector<16xf32>
    %116 = vector.shape_cast %115 : vector<16xf32> to vector<16x1xf32>
    %117 = vector.broadcast %116 : vector<16x1xf32> to vector<16x16xf32>
    %118 = arith.subf %114, %117 : vector<16x16xf32>
    %119 = math.exp %118 : vector<16x16xf32>
    %cst_46 = arith.constant dense<0.000000e+00> : vector<16xf32>
    %120 = vector.multi_reduction <add>, %119, %cst_46 [1] : vector<16x16xf32> to vector<16xf32>
    %121 = vector.shape_cast %120 : vector<16xf32> to vector<16x1xf32>
    %122 = vector.broadcast %121 : vector<16x1xf32> to vector<16x16xf32>
    %123 = arith.divf %119, %122 : vector<16x16xf32>
    %124 = arith.truncf %123 : vector<16x16xf32> to vector<16x16xbf16>
    %cst_47 = arith.constant dense<0.000000e+00> : vector<16x96xf32>
    %125 = tpu.matmul %124, %111, %cst_47 {dimension_numbers = #tpu.dot_dimension_numbers<[1], [0], [0], [1], [0, 0, 1, 1], [], []>} : vector<16x16xbf16>, vector<16x96xbf16>, vector<16x96xf32> -> vector<16x96xf32>
    %126 = arith.truncf %125 : vector<16x96xf32> to vector<16x96xbf16>
    %c16_48 = arith.constant 16 : index
    %c96_49 = arith.constant 96 : index
    %127 = vector.load %arg10[%c16_48, %c96_49] : memref<32x384xbf16, #tpu.memory_space<vmem>>, vector<16x96xbf16>
    tpu.vector_store %arg10[%c16_48, %c96_49], %126 {strides = array<i32>} : memref<32x384xbf16, #tpu.memory_space<vmem>>, vector<16x96xbf16>,
    %128 = vector.extract_strided_slice %7 {offsets = [16, 192], sizes = [16, 96], strides = [1, 1]} : vector<32x384xbf16> to vector<16x96xbf16>
    %129 = vector.extract_strided_slice %13 {offsets = [16, 192], sizes = [16, 96], strides = [1, 1]} : vector<32x768xbf16> to vector<16x96xbf16>
    %130 = vector.extract_strided_slice %13 {offsets = [16, 576], sizes = [16, 96], strides = [1, 1]} : vector<32x768xbf16> to vector<16x96xbf16>
    %cst_50 = arith.constant dense<0.000000e+00> : vector<16x16xf32>
    %131 = tpu.matmul %128, %129, %cst_50 {dimension_numbers = #tpu.dot_dimension_numbers<[1], [1], [0], [0], [0, 0, 1, 0], [], []>} : vector<16x96xbf16>, vector<16x96xbf16>, vector<16x16xf32> -> vector<16x16xf32>
    %cst_51 = arith.constant 0.102062076 : f32
    %132 = vector.broadcast %cst_51 : f32 to vector<16x16xf32>
    %133 = arith.mulf %131, %132 : vector<16x16xf32>
    %cst_52 = arith.constant dense<0xFF800000> : vector<16xf32>
    %134 = vector.multi_reduction <maximumf>, %133, %cst_52 [1] : vector<16x16xf32> to vector<16xf32>
    %135 = vector.shape_cast %134 : vector<16xf32> to vector<16x1xf32>
    %136 = vector.broadcast %135 : vector<16x1xf32> to vector<16x16xf32>
    %137 = arith.subf %133, %136 : vector<16x16xf32>
    %138 = math.exp %137 : vector<16x16xf32>
    %cst_53 = arith.constant dense<0.000000e+00> : vector<16xf32>
    %139 = vector.multi_reduction <add>, %138, %cst_53 [1] : vector<16x16xf32> to vector<16xf32>
    %140 = vector.shape_cast %139 : vector<16xf32> to vector<16x1xf32>
    %141 = vector.broadcast %140 : vector<16x1xf32> to vector<16x16xf32>
    %142 = arith.divf %138, %141 : vector<16x16xf32>
    %143 = arith.truncf %142 : vector<16x16xf32> to vector<16x16xbf16>
    %cst_54 = arith.constant dense<0.000000e+00> : vector<16x96xf32>
    %144 = tpu.matmul %143, %130, %cst_54 {dimension_numbers = #tpu.dot_dimension_numbers<[1], [0], [0], [1], [0, 0, 1, 1], [], []>} : vector<16x16xbf16>, vector<16x96xbf16>, vector<16x96xf32> -> vector<16x96xf32>
    %145 = arith.truncf %144 : vector<16x96xf32> to vector<16x96xbf16>
    %c16_55 = arith.constant 16 : index
    %c192_56 = arith.constant 192 : index
    %146 = vector.load %arg10[%c16_55, %c192_56] : memref<32x384xbf16, #tpu.memory_space<vmem>>, vector<16x96xbf16>
    tpu.vector_store %arg10[%c16_55, %c192_56], %145 {strides = array<i32>} : memref<32x384xbf16, #tpu.memory_space<vmem>>, vector<16x96xbf16>,
    %147 = vector.extract_strided_slice %7 {offsets = [16, 288], sizes = [16, 96], strides = [1, 1]} : vector<32x384xbf16> to vector<16x96xbf16>
    %148 = vector.extract_strided_slice %13 {offsets = [16, 288], sizes = [16, 96], strides = [1, 1]} : vector<32x768xbf16> to vector<16x96xbf16>
    %149 = vector.extract_strided_slice %13 {offsets = [16, 672], sizes = [16, 96], strides = [1, 1]} : vector<32x768xbf16> to vector<16x96xbf16>
    %cst_57 = arith.constant dense<0.000000e+00> : vector<16x16xf32>
    %150 = tpu.matmul %147, %148, %cst_57 {dimension_numbers = #tpu.dot_dimension_numbers<[1], [1], [0], [0], [0, 0, 1, 0], [], []>} : vector<16x96xbf16>, vector<16x96xbf16>, vector<16x16xf32> -> vector<16x16xf32>
    %cst_58 = arith.constant 0.102062076 : f32
    %151 = vector.broadcast %cst_58 : f32 to vector<16x16xf32>
    %152 = arith.mulf %150, %151 : vector<16x16xf32>
    %cst_59 = arith.constant dense<0xFF800000> : vector<16xf32>
    %153 = vector.multi_reduction <maximumf>, %152, %cst_59 [1] : vector<16x16xf32> to vector<16xf32>
    %154 = vector.shape_cast %153 : vector<16xf32> to vector<16x1xf32>
    %155 = vector.broadcast %154 : vector<16x1xf32> to vector<16x16xf32>
    %156 = arith.subf %152, %155 : vector<16x16xf32>
    %157 = math.exp %156 : vector<16x16xf32>
    %cst_60 = arith.constant dense<0.000000e+00> : vector<16xf32>
    %158 = vector.multi_reduction <add>, %157, %cst_60 [1] : vector<16x16xf32> to vector<16xf32>
    %159 = vector.shape_cast %158 : vector<16xf32> to vector<16x1xf32>
    %160 = vector.broadcast %159 : vector<16x1xf32> to vector<16x16xf32>
    %161 = arith.divf %157, %160 : vector<16x16xf32>
    %162 = arith.truncf %161 : vector<16x16xf32> to vector<16x16xbf16>
    %cst_61 = arith.constant dense<0.000000e+00> : vector<16x96xf32>
    %163 = tpu.matmul %162, %149, %cst_61 {dimension_numbers = #tpu.dot_dimension_numbers<[1], [0], [0], [1], [0, 0, 1, 1], [], []>} : vector<16x16xbf16>, vector<16x96xbf16>, vector<16x96xf32> -> vector<16x96xf32>
    %164 = arith.truncf %163 : vector<16x96xf32> to vector<16x96xbf16>
    %c16_62 = arith.constant 16 : index
    %c288_63 = arith.constant 288 : index
    %165 = vector.load %arg10[%c16_62, %c288_63] : memref<32x384xbf16, #tpu.memory_space<vmem>>, vector<16x96xbf16>
    tpu.vector_store %arg10[%c16_62, %c288_63], %164 {strides = array<i32>} : memref<32x384xbf16, #tpu.memory_space<vmem>>, vector<16x96xbf16>,
    %c0_64 = arith.constant 0 : index
    %c0_65 = arith.constant 0 : index
    %166 = vector.load %arg10[%c0_64, %c0_65] : memref<32x384xbf16, #tpu.memory_space<vmem>>, vector<32x384xbf16>
    %c0_66 = arith.constant 0 : index
    %c0_67 = arith.constant 0 : index
    %167 = vector.load %arg7[%c0_66, %c0_67] : memref<384x768xbf16, #tpu.memory_space<vmem>>, vector<384x768xbf16>
    %cst_68 = arith.constant dense<0.000000e+00> : vector<32x768xf32>
    %168 = tpu.matmul %166, %167, %cst_68 {dimension_numbers = #tpu.dot_dimension_numbers<[1], [0], [0], [1], [0, 0, 1, 1], [], []>} : vector<32x384xbf16>, vector<384x768xbf16>, vector<32x768xf32> -> vector<32x768xf32>
    %c0_i32 = arith.constant 0 : i32
    %169 = arith.cmpi eq, %arg0, %c0_i32 : i32
    %170 = arith.extui %169 : i1 to i32
    %c0_i32_69 = arith.constant 0 : i32
    %171 = arith.cmpi ne, %170, %c0_i32_69 : i32
    scf.if %171 {
      %c0_72 = arith.constant 0 : index
      %c0_73 = arith.constant 0 : index
      %175 = vector.load %arg8[%c0_72, %c0_73] : memref<1x768xf32, #tpu.memory_space<vmem>>, vector<1x768xf32>
      %176 = vector.broadcast %175 : vector<1x768xf32> to vector<32x768xf32>
      %177 = arith.addf %168, %176 : vector<32x768xf32>
      %c0_74 = arith.constant 0 : index
      %c0_75 = arith.constant 0 : index
      %178 = vector.load %arg9[%c0_74, %c0_75] : memref<32x768xf32, #tpu.memory_space<vmem>>, vector<32x768xf32>
      tpu.vector_store %arg9[%c0_74, %c0_75], %177 {strides = array<i32>} : memref<32x768xf32, #tpu.memory_space<vmem>>, vector<32x768xf32>,
    } else {
    }
    %c0_i32_70 = arith.constant 0 : i32
    %172 = arith.cmpi sgt, %arg0, %c0_i32_70 : i32
    %173 = arith.extui %172 : i1 to i32
    %c0_i32_71 = arith.constant 0 : i32
    %174 = arith.cmpi ne, %173, %c0_i32_71 : i32
    scf.if %174 {
      %c0_72 = arith.constant 0 : index
      %c0_73 = arith.constant 0 : index
      %175 = vector.load %arg9[%c0_72, %c0_73] : memref<32x768xf32, #tpu.memory_space<vmem>>, vector<32x768xf32>
      %176 = arith.addf %175, %168 : vector<32x768xf32>
      %c0_74 = arith.constant 0 : index
      %c0_75 = arith.constant 0 : index
      %177 = vector.load %arg9[%c0_74, %c0_75] : memref<32x768xf32, #tpu.memory_space<vmem>>, vector<32x768xf32>
      tpu.vector_store %arg9[%c0_74, %c0_75], %176 {strides = array<i32>} : memref<32x768xf32, #tpu.memory_space<vmem>>, vector<32x768xf32>,
    } else {
    }
    return
  }
  func.func @transform_0(%arg0: i32) -> (i32, i32) {
    %c0_i32 = arith.constant 0 : i32
    %c0_i32_0 = arith.constant 0 : i32
    %c0_i32_1 = arith.constant 0 : i32
    return %c0_i32, %c0_i32_0 : i32, i32
  }
  func.func @transform_1(%arg0: i32) -> (i32, i32) {
    %c0_i32 = arith.constant 0 : i32
    %c0_i32_0 = arith.constant 0 : i32
    %c0_i32_1 = arith.constant 0 : i32
    return %c0_i32, %c0_i32_0 : i32, i32
  }
  func.func @transform_2(%arg0: i32) -> (i32, i32) {
    %c0_i32 = arith.constant 0 : i32
    %c0_i32_0 = arith.constant 0 : i32
    return %c0_i32, %arg0 : i32, i32
  }
  func.func @transform_3(%arg0: i32) -> (i32, i32) {
    %c0_i32 = arith.constant 0 : i32
    %c0_i32_0 = arith.constant 0 : i32
    return %c0_i32, %arg0 : i32, i32
  }
  func.func @transform_4(%arg0: i32) -> (i32, i32) {
    %c0_i32 = arith.constant 0 : i32
    %c0_i32_0 = arith.constant 0 : i32
    return %c0_i32, %arg0 : i32, i32
  }
  func.func @transform_5(%arg0: i32) -> (i32, i32) {
    %c0_i32 = arith.constant 0 : i32
    %c0_i32_0 = arith.constant 0 : i32
    return %c0_i32, %arg0 : i32, i32
  }
  func.func @transform_6(%arg0: i32) -> (i32, i32) {
    %c0_i32 = arith.constant 0 : i32
    %c0_i32_0 = arith.constant 0 : i32
    return %arg0, %c0_i32 : i32, i32
  }
  func.func @transform_7(%arg0: i32) -> (i32, i32) {
    %c0_i32 = arith.constant 0 : i32
    %c0_i32_0 = arith.constant 0 : i32
    %c0_i32_1 = arith.constant 0 : i32
    return %c0_i32, %c0_i32_0 : i32, i32
  }
  func.func @transform_8(%arg0: i32) -> (i32, i32) {
    %c0_i32 = arith.constant 0 : i32
    %c0_i32_0 = arith.constant 0 : i32
    %c0_i32_1 = arith.constant 0 : i32
    return %c0_i32, %c0_i32_0 : i32, i32
  }
}

</mosaic_0001>

<llo_original>
// kernel: tpu_custom_call.1
$region0: #{tpu_custom_call.1}
  #allocation0 [shape = 'u32[]', space=smem, size = 0x4, offset = 0x4, fixed_abs, tag = 'smem constant byte address 0x4 - core index']
  #allocation1 [shape = 'u32[72,128]{1,0:T(1,128)}', space=vmem, size = 0x9000, scoped, tag = 'internal scratch']
  #allocation2 [shape = 'bf16[32,384]{1,0:T(8,128)(2,1)}', space=vmem, size = 0x6000, scoped, tag = 'scratch operand']
  %s0 = inlined_call_operand.hbm [shape: bf16[32,768], index: 0, kind: input, shape index: {}]
  %s1 = inlined_call_operand.hbm [shape: bf16[32,768], index: 1, kind: input, shape index: {}]
  %s2 = inlined_call_operand.hbm [shape: bf16[768,768], index: 2, kind: input, shape index: {}]
  %s3 = inlined_call_operand.hbm [shape: f32[1,768], index: 3, kind: input, shape index: {}]
  %s4 = inlined_call_operand.hbm [shape: bf16[768,1536], index: 4, kind: input, shape index: {}]
  %s5 = inlined_call_operand.hbm [shape: f32[1,1536], index: 5, kind: input, shape index: {}]
  %s6 = inlined_call_operand.hbm [shape: bf16[768,768], index: 6, kind: input, shape index: {}]
  %s7 = inlined_call_operand.hbm [shape: f32[1,768], index: 7, kind: input, shape index: {}]
  %s8 = inlined_call_operand.hbm [shape: f32[32,768], index: 8, kind: output, shape index: {}]
  %s9 = sld [smem:[#allocation0]]
  $region105: #{tpu_custom_call.1} parent=0
    _
  %s11 = ssub.s32 1, %s9
  %s12 = scalar_select 0, %s11, %s9
  $region1: #{tpu_custom_call.1} parent=0
    #allocation3 [shape = 'u8[49152]{0}', space=vmem, size = 0xc000, scoped, tag = 'input window, operand 0, single buffered']
    #allocation4 [shape = 's32[2]{0}', space=sflag, size = 0x8, scoped, tag = 'scoped memory for tpu_custom_call.1']
    #allocation5 [shape = 's32[2]{0}', space=sflag, size = 0x8, scoped, tag = 'scoped memory for tpu_custom_call.1']
    #allocation6 [shape = 'u8[49152]{0}', space=vmem, size = 0xc000, scoped, tag = 'input window, operand 1, single buffered']
    #allocation7 [shape = 's32[1]{0}', space=sflag, size = 0x4, scoped, tag = 'scoped memory for tpu_custom_call.1']
    #allocation8 [shape = 'u8[1179648]{0}', space=vmem, size = 0x120000, scoped, tag = 'input window, operand 2']
    #allocation9 [shape = 'u8[3072]{0}', space=vmem, size = 0xc00, scoped, tag = 'input window, operand 3']
    #allocation10 [shape = 'u8[2359296]{0}', space=vmem, size = 0x240000, scoped, tag = 'input window, operand 4']
    #allocation11 [shape = 'u8[6144]{0}', space=vmem, size = 0x1800, scoped, tag = 'input window, operand 5']
    #allocation12 [shape = 'u8[1179648]{0}', space=vmem, size = 0x120000, scoped, tag = 'input window, operand 6']
    #allocation13 [shape = 'u8[3072]{0}', space=vmem, size = 0xc00, scoped, tag = 'input window, operand 7, single buffered']
    #allocation14 [shape = 'u8[98304]{0}', space=vmem, size = 0x18000, scoped, tag = 'output window, operand 0, single buffered']
    %13 = vsyncpa [#allocation4], 0
    %14 = vsyncpa [#allocation7], 0
    %15 = vsyncpa [#allocation5], 0
    loop: start=0, step=1, limit=4
    $region2: #{tpu_custom_call.1} parent=1 // loop_pre_header
      _
    $region3: #{tpu_custom_call.1} parent=1 // loop_header
      %s17 = sphi 0, %s21
      %p18 = scmp.ge.s32.totalorder %s17, 4
      %s25 = sphi 0, %s25
      %s27 = sphi 0, %s25
      %s28 = sphi 0, %s27
      %s42 = sphi 0, %s28
      %s46 = sphi 0, %s46
      %s48 = sphi 0, %s46
      %s49 = sphi 0, %s48
      %s63 = sphi 0, %s49
      %s69 = sphi 0, %s71
      %s72 = sphi 0, %s69
      %s73 = sphi 0, %s72
      %s89 = sphi 0, %s73
      %s95 = sphi 0, %s97
      %s98 = sphi 0, %s95
      %s99 = sphi 0, %s98
      %s115 = sphi 0, %s99
      %s121 = sphi 0, %s123
      %s124 = sphi 0, %s121
      %s125 = sphi 0, %s124
      %s141 = sphi 0, %s125
      %s147 = sphi 0, %s149
      %s150 = sphi 0, %s147
      %s151 = sphi 0, %s150
      %s167 = sphi 0, %s151
      %s173 = sphi 0, %s175
      %s176 = sphi 0, %s173
      %s177 = sphi 0, %s176
      %s193 = sphi 0, %s177
      %s197 = sphi 0, %s197
      %s199 = sphi 0, %s197
      %s200 = sphi 0, %s199
      %s214 = sphi 0, %s200
      %s218 = sphi 0, %s218
      %s220 = sphi 0, %s218
      %s221 = sphi 0, %s220
      %s235 = sphi 0, %s221
    $region4: #{tpu_custom_call.1} parent=1 // loop_header_branch
      %20 = sbr.rel (%p18) target = $region8
    $region5: #{tpu_custom_call.1} parent=1 // loop_body
      %s22 = ssub.s32 %s17, 1
      %s23 = ssub.s32 %s17, 2
      %s24 = sadd.s32 %s17, 1
      %s26 = sadd.s32 %s25, 1
      %p29 = scmp.eq.s32.totalorder %s17, 1
      %p30 = scmp.ne.s32.totalorder %s25, %s27
      %p31 = scmp.eq.s32.totalorder %s17, 0
      %p32 = por %p30, %p31
      %p33 = scmp.ne.s32.totalorder %s25, %s27
      %p34 = scmp.eq.s32.totalorder %s22, 1
      %p35 = por %p33, %p34
      %p36 = scmp.ne.s32.totalorder %s27, %s28
      %p37 = scmp.eq.s32.totalorder %s22, 0
      %p38 = por %p36, %p37
      %p39 = scmp.ne.s32.totalorder %s27, %s28
      %p40 = scmp.eq.s32.totalorder %s23, 1
      %p41 = por %p39, %p40
      %p43 = scmp.ne.s32.totalorder %s28, %s42
      %p44 = scmp.eq.s32.totalorder %s23, 0
      %p45 = por %p43, %p44
      %s47 = sadd.s32 %s46, 1
      %p50 = scmp.eq.s32.totalorder %s17, 1
      %p51 = scmp.ne.s32.totalorder %s46, %s48
      %p52 = scmp.eq.s32.totalorder %s17, 0
      %p53 = por %p51, %p52
      %p54 = scmp.ne.s32.totalorder %s46, %s48
      %p55 = scmp.eq.s32.totalorder %s22, 1
      %p56 = por %p54, %p55
      %p57 = scmp.ne.s32.totalorder %s48, %s49
      %p58 = scmp.eq.s32.totalorder %s22, 0
      %p59 = por %p57, %p58
      %p60 = scmp.ne.s32.totalorder %s48, %s49
      %p61 = scmp.eq.s32.totalorder %s23, 1
      %p62 = por %p60, %p61
      %p64 = scmp.ne.s32.totalorder %s49, %s63
      %p65 = scmp.eq.s32.totalorder %s23, 0
      %p66 = por %p64, %p65
      %s67 = ssub.s32 %s17, %s24
      %p68 = scmp.eq.s32.totalorder %s67, 0
      %s70 = sadd.s32 %s69, 1
      %s71 = scalar_select %p68, %s69, %s70
      %p74 = pneg %p68
      %p75 = scmp.eq.s32.totalorder %s17, 1
      %p76 = por %p74, %p75
      %p77 = scmp.ne.s32.totalorder %s69, %s72
      %p78 = scmp.eq.s32.totalorder %s17, 0
      %p79 = por %p77, %p78
      %p80 = scmp.ne.s32.totalorder %s69, %s72
      %p81 = scmp.eq.s32.totalorder %s22, 1
      %p82 = por %p80, %p81
      %p83 = scmp.ne.s32.totalorder %s72, %s73
      %p84 = scmp.eq.s32.totalorder %s22, 0
      %p85 = por %p83, %p84
      %p86 = scmp.ne.s32.totalorder %s72, %s73
      %p87 = scmp.eq.s32.totalorder %s23, 1
      %p88 = por %p86, %p87
      %p90 = scmp.ne.s32.totalorder %s73, %s89
      %p91 = scmp.eq.s32.totalorder %s23, 0
      %p92 = por %p90, %p91
      %s93 = ssub.s32 %s17, %s24
      %p94 = scmp.eq.s32.totalorder %s93, 0
      %s96 = sadd.s32 %s95, 1
      %s97 = scalar_select %p94, %s95, %s96
      %p100 = pneg %p94
      %p101 = scmp.eq.s32.totalorder %s17, 1
      %p102 = por %p100, %p101
      %p103 = scmp.ne.s32.totalorder %s95, %s98
      %p104 = scmp.eq.s32.totalorder %s17, 0
      %p105 = por %p103, %p104
      %p106 = scmp.ne.s32.totalorder %s95, %s98
      %p107 = scmp.eq.s32.totalorder %s22, 1
      %p108 = por %p106, %p107
      %p109 = scmp.ne.s32.totalorder %s98, %s99
      %p110 = scmp.eq.s32.totalorder %s22, 0
      %p111 = por %p109, %p110
      %p112 = scmp.ne.s32.totalorder %s98, %s99
      %p113 = scmp.eq.s32.totalorder %s23, 1
      %p114 = por %p112, %p113
      %p116 = scmp.ne.s32.totalorder %s99, %s115
      %p117 = scmp.eq.s32.totalorder %s23, 0
      %p118 = por %p116, %p117
      %s119 = ssub.s32 %s17, %s24
      %p120 = scmp.eq.s32.totalorder %s119, 0
      %s122 = sadd.s32 %s121, 1
      %s123 = scalar_select %p120, %s121, %s122
      %p126 = pneg %p120
      %p127 = scmp.eq.s32.totalorder %s17, 1
      %p128 = por %p126, %p127
      %p129 = scmp.ne.s32.totalorder %s121, %s124
      %p130 = scmp.eq.s32.totalorder %s17, 0
      %p131 = por %p129, %p130
      %p132 = scmp.ne.s32.totalorder %s121, %s124
      %p133 = scmp.eq.s32.totalorder %s22, 1
      %p134 = por %p132, %p133
      %p135 = scmp.ne.s32.totalorder %s124, %s125
      %p136 = scmp.eq.s32.totalorder %s22, 0
      %p137 = por %p135, %p136
      %p138 = scmp.ne.s32.totalorder %s124, %s125
      %p139 = scmp.eq.s32.totalorder %s23, 1
      %p140 = por %p138, %p139
      %p142 = scmp.ne.s32.totalorder %s125, %s141
      %p143 = scmp.eq.s32.totalorder %s23, 0
      %p144 = por %p142, %p143
      %s145 = ssub.s32 %s17, %s24
      %p146 = scmp.eq.s32.totalorder %s145, 0
      %s148 = sadd.s32 %s147, 1
      %s149 = scalar_select %p146, %s147, %s148
      %p152 = pneg %p146
      %p153 = scmp.eq.s32.totalorder %s17, 1
      %p154 = por %p152, %p153
      %p155 = scmp.ne.s32.totalorder %s147, %s150
      %p156 = scmp.eq.s32.totalorder %s17, 0
      %p157 = por %p155, %p156
      %p158 = scmp.ne.s32.totalorder %s147, %s150
      %p159 = scmp.eq.s32.totalorder %s22, 1
      %p160 = por %p158, %p159
      %p161 = scmp.ne.s32.totalorder %s150, %s151
      %p162 = scmp.eq.s32.totalorder %s22, 0
      %p163 = por %p161, %p162
      %p164 = scmp.ne.s32.totalorder %s150, %s151
      %p165 = scmp.eq.s32.totalorder %s23, 1
      %p166 = por %p164, %p165
      %p168 = scmp.ne.s32.totalorder %s151, %s167
      %p169 = scmp.eq.s32.totalorder %s23, 0
      %p170 = por %p168, %p169
      %s171 = ssub.s32 %s17, %s24
      %p172 = scmp.eq.s32.totalorder %s171, 0
      %s174 = sadd.s32 %s173, 1
      %s175 = scalar_select %p172, %s173, %s174
      %p178 = pneg %p172
      %p179 = scmp.eq.s32.totalorder %s17, 1
      %p180 = por %p178, %p179
      %p181 = scmp.ne.s32.totalorder %s173, %s176
      %p182 = scmp.eq.s32.totalorder %s17, 0
      %p183 = por %p181, %p182
      %p184 = scmp.ne.s32.totalorder %s173, %s176
      %p185 = scmp.eq.s32.totalorder %s22, 1
      %p186 = por %p184, %p185
      %p187 = scmp.ne.s32.totalorder %s176, %s177
      %p188 = scmp.eq.s32.totalorder %s22, 0
      %p189 = por %p187, %p188
      %p190 = scmp.ne.s32.totalorder %s176, %s177
      %p191 = scmp.eq.s32.totalorder %s23, 1
      %p192 = por %p190, %p191
      %p194 = scmp.ne.s32.totalorder %s177, %s193
      %p195 = scmp.eq.s32.totalorder %s23, 0
      %p196 = por %p194, %p195
      %s198 = sadd.s32 %s197, 1
      %p201 = scmp.eq.s32.totalorder %s17, 1
      %p202 = scmp.ne.s32.totalorder %s197, %s199
      %p203 = scmp.eq.s32.totalorder %s17, 0
      %p204 = por %p202, %p203
      %p205 = scmp.ne.s32.totalorder %s197, %s199
      %p206 = scmp.eq.s32.totalorder %s22, 1
      %p207 = por %p205, %p206
      %p208 = scmp.ne.s32.totalorder %s199, %s200
      %p209 = scmp.eq.s32.totalorder %s22, 0
      %p210 = por %p208, %p209
      %p211 = scmp.ne.s32.totalorder %s199, %s200
      %p212 = scmp.eq.s32.totalorder %s23, 1
      %p213 = por %p211, %p212
      %p215 = scmp.ne.s32.totalorder %s200, %s214
      %p216 = scmp.eq.s32.totalorder %s23, 0
      %p217 = por %p215, %p216
      %s219 = sadd.s32 %s218, 1
      %p222 = scmp.eq.s32.totalorder %s17, 1
      %p223 = scmp.ne.s32.totalorder %s218, %s220
      %p224 = scmp.eq.s32.totalorder %s17, 0
      %p225 = por %p223, %p224
      %p226 = scmp.ne.s32.totalorder %s218, %s220
      %p227 = scmp.eq.s32.totalorder %s22, 1
      %p228 = por %p226, %p227
      %p229 = scmp.ne.s32.totalorder %s220, %s221
      %p230 = scmp.eq.s32.totalorder %s22, 0
      %p231 = por %p229, %p230
      %p232 = scmp.ne.s32.totalorder %s220, %s221
      %p233 = scmp.eq.s32.totalorder %s23, 1
      %p234 = por %p232, %p233
      %p236 = scmp.ne.s32.totalorder %s221, %s235
      %p237 = scmp.eq.s32.totalorder %s23, 0
      %p238 = por %p236, %p237
      %p239 = scmp.le.s32.totalorder 1, %s17
      %p240 = scmp.lt.s32.totalorder %s17, 3
      %p241 = pnand %p239, %p240
      %p242 = pneg %p241
      // Predicated region
      $region9: #{tpu_custom_call.1} parent=5 // pred_check
        _
      $region10: #{tpu_custom_call.1} parent=5 // pred_check_branch
        %244 = sbr.rel (%p241) target = $region12
      $region11: #{tpu_custom_call.1} parent=5 // pred_region
        %s245 = ssub.s32 %s17, 1
        // Predicated region
        $region13: #{tpu_custom_call.1} parent=11 // pred_check
          %p246 = pneg %p38
        $region14: #{tpu_custom_call.1} parent=11 // pred_check_branch
          %248 = sbr.rel (%p246) target = $region16
        $region15: #{tpu_custom_call.1} parent=11 // pred_region
          %250 = vsyncadd [#allocation4], 0
          %s251 = sshll.u32 %s0, 4
          %s252 = int_to_ptr.hbm [resolvable:$true] %s251
          %s253 = sshll.u32 [#allocation3], 4
          %s254 = int_to_ptr.vmem [resolvable:$true] %s253
          %259 = dma.hbm_to_vmem [thread:$0]  %s252, 1536, %s254, [#allocation4], 384, 384, 24
        $region16: #{tpu_custom_call.1} parent=11 // pred_fallthru
          _
        // Predicated region
        $region17: #{tpu_custom_call.1} parent=11 // pred_check
          %p260 = pneg %p59
        $region18: #{tpu_custom_call.1} parent=11 // pred_check_branch
          %262 = sbr.rel (%p260) target = $region20
        $region19: #{tpu_custom_call.1} parent=11 // pred_region
          %264 = vsyncadd [#allocation7], 0
          %s265 = sshll.u32 %s1, 4
          %s266 = int_to_ptr.hbm [resolvable:$true] %s265
          %s267 = sshll.u32 [#allocation6], 4
          %s268 = int_to_ptr.vmem [resolvable:$true] %s267
          %273 = dma.hbm_to_vmem [thread:$0]  %s266, 1536, %s268, [#allocation7], 384, 384, 24
        $region20: #{tpu_custom_call.1} parent=11 // pred_fallthru
          _
        // Predicated region
        $region21: #{tpu_custom_call.1} parent=11 // pred_check
          %p274 = pneg %p210
        $region22: #{tpu_custom_call.1} parent=11 // pred_check_branch
          %276 = sbr.rel (%p274) target = $region24
        $region23: #{tpu_custom_call.1} parent=11 // pred_region
          %278 = vsyncadd [#allocation7], 0
          %s280 = sshll.u32 %s7, 4
          %s281 = int_to_ptr.hbm [resolvable:$true] %s280
          %s282 = sshll.u32 [#allocation13], 4
          %s283 = int_to_ptr.vmem [resolvable:$true] %s282
          %285 = dma.hbm_to_vmem [thread:$0]  %s281, 96, %s283, [#allocation7]
        $region24: #{tpu_custom_call.1} parent=11 // pred_fallthru
          _
      $region12: #{tpu_custom_call.1} parent=5 // pred_fallthru
        _
      %p286 = scmp.lt.s32.totalorder %s17, 2
      // Predicated region
      $region25: #{tpu_custom_call.1} parent=5 // pred_check
        %p287 = pneg %p286
      $region26: #{tpu_custom_call.1} parent=5 // pred_check_branch
        %289 = sbr.rel (%p287) target = $region28
      $region27: #{tpu_custom_call.1} parent=5 // pred_region
        // Predicated region
        $region29: #{tpu_custom_call.1} parent=27 // pred_check
          %p290 = pneg %p79
        $region30: #{tpu_custom_call.1} parent=27 // pred_check_branch
          %292 = sbr.rel (%p290) target = $region32
        $region31: #{tpu_custom_call.1} parent=27 // pred_region
          %s293 = sand.u32 %s17, 1
          %s294 = scalar_lea.sflag [#allocation4], %s293
          %s295 = sand.u32 %s69, 1
          %s296 = smul.addr %s295, 1152
          %s297 = scalar_lea.vmem [#allocation8], %s296
          %s298 = smul.u32 3, %s17
          %300 = vsyncadd %s294, 0
          %s301 = smul.addr %s298, 4
          %s302 = scalar_lea.hbm %s2, %s301
          %s303 = sshll.u32 %s302, 4
          %s304 = int_to_ptr.hbm [resolvable:$true] %s303
          %s305 = sshll.u32 %s297, 4
          %s306 = int_to_ptr.vmem [resolvable:$true] %s305
          %311 = dma.hbm_to_vmem [thread:$0]  %s304, 18432, %s306, %s294, 384, 192, 12
        $region32: #{tpu_custom_call.1} parent=27 // pred_fallthru
          _
        // Predicated region
        $region33: #{tpu_custom_call.1} parent=27 // pred_check
          %p312 = pneg %p105
        $region34: #{tpu_custom_call.1} parent=27 // pred_check_branch
          %314 = sbr.rel (%p312) target = $region36
        $region35: #{tpu_custom_call.1} parent=27 // pred_region
          %s315 = sand.u32 %s17, 1
          %s316 = scalar_lea.sflag [#allocation4], %s315
          %s317 = sand.u32 %s95, 1
          %s318 = smul.addr %s317, 3
          %s319 = scalar_lea.vmem [#allocation9], %s318
          %s320 = smul.u32 3, %s17
          %322 = vsyncadd %s316, 0
          %s323 = scalar_lea.hbm %s3, %s320
          %s325 = sshll.u32 %s323, 4
          %s326 = int_to_ptr.hbm [resolvable:$true] %s325
          %s327 = sshll.u32 %s319, 4
          %s328 = int_to_ptr.vmem [resolvable:$true] %s327
          %330 = dma.hbm_to_vmem [thread:$0]  %s326, 48, %s328, %s316
        $region36: #{tpu_custom_call.1} parent=27 // pred_fallthru
          _
        // Predicated region
        $region37: #{tpu_custom_call.1} parent=27 // pred_check
          %p331 = pneg %p131
        $region38: #{tpu_custom_call.1} parent=27 // pred_check_branch
          %333 = sbr.rel (%p331) target = $region40
        $region39: #{tpu_custom_call.1} parent=27 // pred_region
          %s334 = sand.u32 %s17, 1
          %s335 = scalar_lea.sflag [#allocation4], %s334
          %s336 = sand.u32 %s121, 1
          %s337 = smul.addr %s336, 2304
          %s338 = scalar_lea.vmem [#allocation10], %s337
          %s339 = smul.u32 6, %s17
          %341 = vsyncadd %s335, 0
          %s342 = smul.addr %s339, 4
          %s343 = scalar_lea.hbm %s4, %s342
          %s344 = sshll.u32 %s343, 4
          %s345 = int_to_ptr.hbm [resolvable:$true] %s344
          %s346 = sshll.u32 %s338, 4
          %s347 = int_to_ptr.vmem [resolvable:$true] %s346
          %352 = dma.hbm_to_vmem [thread:$0]  %s345, 36864, %s347, %s335, 768, 384, 24
        $region40: #{tpu_custom_call.1} parent=27 // pred_fallthru
          _
        // Predicated region
        $region41: #{tpu_custom_call.1} parent=27 // pred_check
          %p353 = pneg %p157
        $region42: #{tpu_custom_call.1} parent=27 // pred_check_branch
          %355 = sbr.rel (%p353) target = $region44
        $region43: #{tpu_custom_call.1} parent=27 // pred_region
          %s356 = sand.u32 %s17, 1
          %s357 = scalar_lea.sflag [#allocation4], %s356
          %s358 = sand.u32 %s147, 1
          %s359 = smul.addr %s358, 6
          %s360 = scalar_lea.vmem [#allocation11], %s359
          %s361 = smul.u32 6, %s17
          %363 = vsyncadd %s357, 0
          %s364 = scalar_lea.hbm %s5, %s361
          %s366 = sshll.u32 %s364, 4
          %s367 = int_to_ptr.hbm [resolvable:$true] %s366
          %s368 = sshll.u32 %s360, 4
          %s369 = int_to_ptr.vmem [resolvable:$true] %s368
          %371 = dma.hbm_to_vmem [thread:$0]  %s367, 96, %s369, %s357
        $region44: #{tpu_custom_call.1} parent=27 // pred_fallthru
          _
        // Predicated region
        $region45: #{tpu_custom_call.1} parent=27 // pred_check
          %p372 = pneg %p183
        $region46: #{tpu_custom_call.1} parent=27 // pred_check_branch
          %374 = sbr.rel (%p372) target = $region48
        $region47: #{tpu_custom_call.1} parent=27 // pred_region
          %s375 = sand.u32 %s17, 1
          %s376 = scalar_lea.sflag [#allocation4], %s375
          %s377 = sand.u32 %s173, 1
          %s378 = smul.addr %s377, 1152
          %s379 = scalar_lea.vmem [#allocation12], %s378
          %s380 = smul.u32 48, %s17
          %382 = vsyncadd %s376, 0
          %s383 = smul.addr %s380, 6
          %s384 = smul.addr %s383, 4
          %s385 = scalar_lea.hbm %s6, %s384
          %s386 = sshll.u32 %s385, 4
          %s387 = int_to_ptr.hbm [resolvable:$true] %s386
          %s388 = sshll.u32 %s379, 4
          %s389 = int_to_ptr.vmem [resolvable:$true] %s388
          %394 = dma.hbm_to_vmem [thread:$0]  %s387, 18432, %s389, %s376, 384, 384, 24
        $region48: #{tpu_custom_call.1} parent=27 // pred_fallthru
          _
      $region28: #{tpu_custom_call.1} parent=5 // pred_fallthru
        _
      %p395 = scmp.le.s32.totalorder 1, %s17
      %p396 = scmp.lt.s32.totalorder %s17, 3
      %p397 = pnand %p395, %p396
      %p398 = pneg %p397
      // Predicated region
      $region49: #{tpu_custom_call.1} parent=5 // pred_check
        _
      $region50: #{tpu_custom_call.1} parent=5 // pred_check_branch
        %400 = sbr.rel (%p397) target = $region52
      $region51: #{tpu_custom_call.1} parent=5 // pred_region
        %s401 = ssub.s32 %s17, 1
        // Predicated region
        $region53: #{tpu_custom_call.1} parent=51 // pred_check
          %p402 = pneg %p38
        $region54: #{tpu_custom_call.1} parent=51 // pred_check_branch
          %404 = sbr.rel (%p402) target = $region56
        $region55: #{tpu_custom_call.1} parent=51 // pred_region
          %406 = dma.done [#allocation4], 1536
        $region56: #{tpu_custom_call.1} parent=51 // pred_fallthru
          _
        // Predicated region
        $region57: #{tpu_custom_call.1} parent=51 // pred_check
          %p407 = pneg %p59
        $region58: #{tpu_custom_call.1} parent=51 // pred_check_branch
          %409 = sbr.rel (%p407) target = $region60
        $region59: #{tpu_custom_call.1} parent=51 // pred_region
          %411 = dma.done [#allocation7], 1536
        $region60: #{tpu_custom_call.1} parent=51 // pred_fallthru
          _
        %s412 = sand.u32 %s22, 1
        %s413 = scalar_lea.sflag [#allocation4], %s412
        %s414 = sand.u32 %s72, 1
        %s415 = smul.addr %s414, 1152
        %s416 = scalar_lea.vmem [#allocation8], %s415
        // Predicated region
        $region61: #{tpu_custom_call.1} parent=51 // pred_check
          %p417 = pneg %p85
        $region62: #{tpu_custom_call.1} parent=51 // pred_check_branch
          %419 = sbr.rel (%p417) target = $region64
        $region63: #{tpu_custom_call.1} parent=51 // pred_region
          %421 = dma.done %s413, 18432
        $region64: #{tpu_custom_call.1} parent=51 // pred_fallthru
          _
        %s422 = sand.u32 %s22, 1
        %s423 = scalar_lea.sflag [#allocation4], %s422
        %s424 = sand.u32 %s98, 1
        %s425 = smul.addr %s424, 3
        %s426 = scalar_lea.vmem [#allocation9], %s425
        // Predicated region
        $region65: #{tpu_custom_call.1} parent=51 // pred_check
          %p427 = pneg %p111
        $region66: #{tpu_custom_call.1} parent=51 // pred_check_branch
          %429 = sbr.rel (%p427) target = $region68
        $region67: #{tpu_custom_call.1} parent=51 // pred_region
          %431 = dma.done %s423, 48
        $region68: #{tpu_custom_call.1} parent=51 // pred_fallthru
          _
        %s432 = sand.u32 %s22, 1
        %s433 = scalar_lea.sflag [#allocation4], %s432
        %s434 = sand.u32 %s124, 1
        %s435 = smul.addr %s434, 2304
        %s436 = scalar_lea.vmem [#allocation10], %s435
        // Predicated region
        $region69: #{tpu_custom_call.1} parent=51 // pred_check
          %p437 = pneg %p137
        $region70: #{tpu_custom_call.1} parent=51 // pred_check_branch
          %439 = sbr.rel (%p437) target = $region72
        $region71: #{tpu_custom_call.1} parent=51 // pred_region
          %441 = dma.done %s433, 36864
        $region72: #{tpu_custom_call.1} parent=51 // pred_fallthru
          _
        %s442 = sand.u32 %s22, 1
        %s443 = scalar_lea.sflag [#allocation4], %s442
        %s444 = sand.u32 %s150, 1
        %s445 = smul.addr %s444, 6
        %s446 = scalar_lea.vmem [#allocation11], %s445
        // Predicated region
        $region73: #{tpu_custom_call.1} parent=51 // pred_check
          %p447 = pneg %p163
        $region74: #{tpu_custom_call.1} parent=51 // pred_check_branch
          %449 = sbr.rel (%p447) target = $region76
        $region75: #{tpu_custom_call.1} parent=51 // pred_region
          %451 = dma.done %s443, 96
        $region76: #{tpu_custom_call.1} parent=51 // pred_fallthru
          _
        %s452 = sand.u32 %s22, 1
        %s453 = scalar_lea.sflag [#allocation4], %s452
        %s454 = sand.u32 %s176, 1
        %s455 = smul.addr %s454, 1152
        %s456 = scalar_lea.vmem [#allocation12], %s455
        // Predicated region
        $region77: #{tpu_custom_call.1} parent=51 // pred_check
          %p457 = pneg %p189
        $region78: #{tpu_custom_call.1} parent=51 // pred_check_branch
          %459 = sbr.rel (%p457) target = $region80
        $region79: #{tpu_custom_call.1} parent=51 // pred_region
          %461 = dma.done %s453, 18432
        $region80: #{tpu_custom_call.1} parent=51 // pred_fallthru
          _
        // Predicated region
        $region81: #{tpu_custom_call.1} parent=51 // pred_check
          %p462 = pneg %p210
        $region82: #{tpu_custom_call.1} parent=51 // pred_check_branch
          %464 = sbr.rel (%p462) target = $region84
        $region83: #{tpu_custom_call.1} parent=51 // pred_region
          %466 = dma.done [#allocation7], 96
        $region84: #{tpu_custom_call.1} parent=51 // pred_fallthru
          _
        %p467 = pneg %p38
        %p468 = pneg %p35
        %p469 = pneg %p59
        %p470 = pneg %p56
        %s471 = sand.u32 %s22, 1
        %s472 = scalar_lea.sflag [#allocation4], %s471
        %s473 = sand.u32 %s72, 1
        %s474 = smul.addr %s473, 1152
        %s475 = scalar_lea.vmem [#allocation8], %s474
        %p476 = pneg %p85
        %p477 = pneg %p82
        %s478 = sand.u32 %s22, 1
        %s479 = scalar_lea.sflag [#allocation4], %s478
        %s480 = sand.u32 %s98, 1
        %s481 = smul.addr %s480, 3
        %s482 = scalar_lea.vmem [#allocation9], %s481
        %p483 = pneg %p111
        %p484 = pneg %p108
        %s485 = sand.u32 %s22, 1
        %s486 = scalar_lea.sflag [#allocation4], %s485
        %s487 = sand.u32 %s124, 1
        %s488 = smul.addr %s487, 2304
        %s489 = scalar_lea.vmem [#allocation10], %s488
        %p490 = pneg %p137
        %p491 = pneg %p134
        %s492 = sand.u32 %s22, 1
        %s493 = scalar_lea.sflag [#allocation4], %s492
        %s494 = sand.u32 %s150, 1
        %s495 = smul.addr %s494, 6
        %s496 = scalar_lea.vmem [#allocation11], %s495
        %p497 = pneg %p163
        %p498 = pneg %p160
        %s499 = sand.u32 %s22, 1
        %s500 = scalar_lea.sflag [#allocation4], %s499
        %s501 = sand.u32 %s176, 1
        %s502 = smul.addr %s501, 1152
        %s503 = scalar_lea.vmem [#allocation12], %s502
        %p504 = pneg %p189
        %p505 = pneg %p186
        %p506 = pneg %p210
        %p507 = pneg %p207
        %p508 = pneg %p231
        %p509 = pneg %p228
        %s510 = smul.u32 3, %s22
        %s511 = smul.u32 3, %s22
        %s512 = smul.u32 6, %s22
        %s513 = smul.u32 6, %s22
        %s514 = smul.u32 48, %s22
        %v516 = vld [vmem:[#allocation3] sm:$0xff]
        %v517 = vld [vmem:[#allocation3 + $0x8] sm:$0xff]
        %v518 = vld [vmem:[#allocation3 + $0x10] sm:$0xff]
        %v519 = vld [vmem:[#allocation3 + $0x18] sm:$0xff]
        %v520 = vld [vmem:[#allocation3 + $0x20] sm:$0xff]
        %v521 = vld [vmem:[#allocation3 + $0x28] sm:$0xff]
        %v522 = vld [vmem:[#allocation3 + $0x30] sm:$0xff]
        %v523 = vld [vmem:[#allocation3 + $0x38] sm:$0xff]
        %v524 = vld [vmem:[#allocation3 + $0x40] sm:$0xff]
        %v525 = vld [vmem:[#allocation3 + $0x48] sm:$0xff]
        %v526 = vld [vmem:[#allocation3 + $0x50] sm:$0xff]
        %v527 = vld [vmem:[#allocation3 + $0x58] sm:$0xff]
        %v528 = vld [vmem:[#allocation6] sm:$0xff]
        %v529 = vld [vmem:[#allocation6 + $0x8] sm:$0xff]
        %v530 = vld [vmem:[#allocation6 + $0x10] sm:$0xff]
        %v531 = vld [vmem:[#allocation6 + $0x18] sm:$0xff]
        %v532 = vld [vmem:[#allocation6 + $0x20] sm:$0xff]
        %v533 = vld [vmem:[#allocation6 + $0x28] sm:$0xff]
        %v534 = vld [vmem:[#allocation6 + $0x30] sm:$0xff]
        %v535 = vld [vmem:[#allocation6 + $0x38] sm:$0xff]
        %v536 = vld [vmem:[#allocation6 + $0x40] sm:$0xff]
        %v537 = vld [vmem:[#allocation6 + $0x48] sm:$0xff]
        %v538 = vld [vmem:[#allocation6 + $0x50] sm:$0xff]
        %v539 = vld [vmem:[#allocation6 + $0x58] sm:$0xff]
        %v540 = vld [vmem:[%s416] sm:$0xff]
        %v541 = vld [vmem:[%s416 + $0x8] sm:$0xf]
        %v542 = vld [vmem:[%s416 + $0xc] sm:$0xff]
        %v543 = vld [vmem:[%s416 + $0x14] sm:$0xf]
        %v544 = vld [vmem:[%s416 + $0x18] sm:$0xff]
        %v545 = vld [vmem:[%s416 + $0x20] sm:$0xf]
        %v546 = vld [vmem:[%s416 + $0x24] sm:$0xff]
        %v547 = vld [vmem:[%s416 + $0x2c] sm:$0xf]
        %v548 = vld [vmem:[%s416 + $0x30] sm:$0xff]
        %v549 = vld [vmem:[%s416 + $0x38] sm:$0xf]
        %v550 = vld [vmem:[%s416 + $0x3c] sm:$0xff]
        %v551 = vld [vmem:[%s416 + $0x44] sm:$0xf]
        %v552 = vld [vmem:[%s416 + $0x48] sm:$0xff]
        %v553 = vld [vmem:[%s416 + $0x50] sm:$0xf]
        %v554 = vld [vmem:[%s416 + $0x54] sm:$0xff]
        %v555 = vld [vmem:[%s416 + $0x5c] sm:$0xf]
        %v556 = vld [vmem:[%s416 + $0x60] sm:$0xff]
        %v557 = vld [vmem:[%s416 + $0x68] sm:$0xf]
        %v558 = vld [vmem:[%s416 + $0x6c] sm:$0xff]
        %v559 = vld [vmem:[%s416 + $0x74] sm:$0xf]
        %v560 = vld [vmem:[%s416 + $0x78] sm:$0xff]
        %v561 = vld [vmem:[%s416 + $0x80] sm:$0xf]
        %v562 = vld [vmem:[%s416 + $0x84] sm:$0xff]
        %v563 = vld [vmem:[%s416 + $0x8c] sm:$0xf]
        %v564 = vld [vmem:[%s416 + $0x90] sm:$0xff]
        %v565 = vld [vmem:[%s416 + $0x98] sm:$0xf]
        %v566 = vld [vmem:[%s416 + $0x9c] sm:$0xff]
        %v567 = vld [vmem:[%s416 + $0xa4] sm:$0xf]
        %v568 = vld [vmem:[%s416 + $0xa8] sm:$0xff]
        %v569 = vld [vmem:[%s416 + $0xb0] sm:$0xf]
        %v570 = vld [vmem:[%s416 + $0xb4] sm:$0xff]
        %v571 = vld [vmem:[%s416 + $0xbc] sm:$0xf]
        %v572 = vld [vmem:[%s416 + $0xc0] sm:$0xff]
        %v573 = vld [vmem:[%s416 + $0xc8] sm:$0xf]
        %v574 = vld [vmem:[%s416 + $0xcc] sm:$0xff]
        %v575 = vld [vmem:[%s416 + $0xd4] sm:$0xf]
        %v576 = vld [vmem:[%s416 + $0xd8] sm:$0xff]
        %v577 = vld [vmem:[%s416 + $0xe0] sm:$0xf]
        %v578 = vld [vmem:[%s416 + $0xe4] sm:$0xff]
        %v579 = vld [vmem:[%s416 + $0xec] sm:$0xf]
        %v580 = vld [vmem:[%s416 + $0xf0] sm:$0xff]
        %v581 = vld [vmem:[%s416 + $0xf8] sm:$0xf]
        %v582 = vld [vmem:[%s416 + $0xfc] sm:$0xff]
        %v583 = vld [vmem:[%s416 + $0x104] sm:$0xf]
        %v584 = vld [vmem:[%s416 + $0x108] sm:$0xff]
        %v585 = vld [vmem:[%s416 + $0x110] sm:$0xf]
        %v586 = vld [vmem:[%s416 + $0x114] sm:$0xff]
        %v587 = vld [vmem:[%s416 + $0x11c] sm:$0xf]
        %v588 = vld [vmem:[%s416 + $0x120] sm:$0xff]
        %v589 = vld [vmem:[%s416 + $0x128] sm:$0xf]
        %v590 = vld [vmem:[%s416 + $0x12c] sm:$0xff]
        %v591 = vld [vmem:[%s416 + $0x134] sm:$0xf]
        %v592 = vld [vmem:[%s416 + $0x138] sm:$0xff]
        %v593 = vld [vmem:[%s416 + $0x140] sm:$0xf]
        %v594 = vld [vmem:[%s416 + $0x144] sm:$0xff]
        %v595 = vld [vmem:[%s416 + $0x14c] sm:$0xf]
        %v596 = vld [vmem:[%s416 + $0x150] sm:$0xff]
        %v597 = vld [vmem:[%s416 + $0x158] sm:$0xf]
        %v598 = vld [vmem:[%s416 + $0x15c] sm:$0xff]
        %v599 = vld [vmem:[%s416 + $0x164] sm:$0xf]
        %v600 = vld [vmem:[%s416 + $0x168] sm:$0xff]
        %v601 = vld [vmem:[%s416 + $0x170] sm:$0xf]
        %v602 = vld [vmem:[%s416 + $0x174] sm:$0xff]
        %v603 = vld [vmem:[%s416 + $0x17c] sm:$0xf]
        %v604 = vld [vmem:[%s416 + $0x180] sm:$0xff]
        %v605 = vld [vmem:[%s416 + $0x188] sm:$0xf]
        %v606 = vld [vmem:[%s416 + $0x18c] sm:$0xff]
        %v607 = vld [vmem:[%s416 + $0x194] sm:$0xf]
        %v608 = vld [vmem:[%s416 + $0x198] sm:$0xff]
        %v609 = vld [vmem:[%s416 + $0x1a0] sm:$0xf]
        %v610 = vld [vmem:[%s416 + $0x1a4] sm:$0xff]
        %v611 = vld [vmem:[%s416 + $0x1ac] sm:$0xf]
        %v612 = vld [vmem:[%s416 + $0x1b0] sm:$0xff]
        %v613 = vld [vmem:[%s416 + $0x1b8] sm:$0xf]
        %v614 = vld [vmem:[%s416 + $0x1bc] sm:$0xff]
        %v615 = vld [vmem:[%s416 + $0x1c4] sm:$0xf]
        %v616 = vld [vmem:[%s416 + $0x1c8] sm:$0xff]
        %v617 = vld [vmem:[%s416 + $0x1d0] sm:$0xf]
        %v618 = vld [vmem:[%s416 + $0x1d4] sm:$0xff]
        %v619 = vld [vmem:[%s416 + $0x1dc] sm:$0xf]
        %v620 = vld [vmem:[%s416 + $0x1e0] sm:$0xff]
        %v621 = vld [vmem:[%s416 + $0x1e8] sm:$0xf]
        %v622 = vld [vmem:[%s416 + $0x1ec] sm:$0xff]
        %v623 = vld [vmem:[%s416 + $0x1f4] sm:$0xf]
        %v624 = vld [vmem:[%s416 + $0x1f8] sm:$0xff]
        %v625 = vld [vmem:[%s416 + $0x200] sm:$0xf]
        %v626 = vld [vmem:[%s416 + $0x204] sm:$0xff]
        %v627 = vld [vmem:[%s416 + $0x20c] sm:$0xf]
        %v628 = vld [vmem:[%s416 + $0x210] sm:$0xff]
        %v629 = vld [vmem:[%s416 + $0x218] sm:$0xf]
        %v630 = vld [vmem:[%s416 + $0x21c] sm:$0xff]
        %v631 = vld [vmem:[%s416 + $0x224] sm:$0xf]
        %v632 = vld [vmem:[%s416 + $0x228] sm:$0xff]
        %v633 = vld [vmem:[%s416 + $0x230] sm:$0xf]
        %v634 = vld [vmem:[%s416 + $0x234] sm:$0xff]
        %v635 = vld [vmem:[%s416 + $0x23c] sm:$0xf]
        %v636 = vld [vmem:[%s416 + $0x240] sm:$0xff]
        %v637 = vld [vmem:[%s416 + $0x248] sm:$0xf]
        %v638 = vld [vmem:[%s416 + $0x24c] sm:$0xff]
        %v639 = vld [vmem:[%s416 + $0x254] sm:$0xf]
        %v640 = vld [vmem:[%s416 + $0x258] sm:$0xff]
        %v641 = vld [vmem:[%s416 + $0x260] sm:$0xf]
        %v642 = vld [vmem:[%s416 + $0x264] sm:$0xff]
        %v643 = vld [vmem:[%s416 + $0x26c] sm:$0xf]
        %v644 = vld [vmem:[%s416 + $0x270] sm:$0xff]
        %v645 = vld [vmem:[%s416 + $0x278] sm:$0xf]
        %v646 = vld [vmem:[%s416 + $0x27c] sm:$0xff]
        %v647 = vld [vmem:[%s416 + $0x284] sm:$0xf]
        %v648 = vld [vmem:[%s416 + $0x288] sm:$0xff]
        %v649 = vld [vmem:[%s416 + $0x290] sm:$0xf]
        %v650 = vld [vmem:[%s416 + $0x294] sm:$0xff]
        %v651 = vld [vmem:[%s416 + $0x29c] sm:$0xf]
        %v652 = vld [vmem:[%s416 + $0x2a0] sm:$0xff]
        %v653 = vld [vmem:[%s416 + $0x2a8] sm:$0xf]
        %v654 = vld [vmem:[%s416 + $0x2ac] sm:$0xff]
        %v655 = vld [vmem:[%s416 + $0x2b4] sm:$0xf]
        %v656 = vld [vmem:[%s416 + $0x2b8] sm:$0xff]
        %v657 = vld [vmem:[%s416 + $0x2c0] sm:$0xf]
        %v658 = vld [vmem:[%s416 + $0x2c4] sm:$0xff]
        %v659 = vld [vmem:[%s416 + $0x2cc] sm:$0xf]
        %v660 = vld [vmem:[%s416 + $0x2d0] sm:$0xff]
        %v661 = vld [vmem:[%s416 + $0x2d8] sm:$0xf]
        %v662 = vld [vmem:[%s416 + $0x2dc] sm:$0xff]
        %v663 = vld [vmem:[%s416 + $0x2e4] sm:$0xf]
        %v664 = vld [vmem:[%s416 + $0x2e8] sm:$0xff]
        %v665 = vld [vmem:[%s416 + $0x2f0] sm:$0xf]
        %v666 = vld [vmem:[%s416 + $0x2f4] sm:$0xff]
        %v667 = vld [vmem:[%s416 + $0x2fc] sm:$0xf]
        %v668 = vld [vmem:[%s416 + $0x300] sm:$0xff]
        %v669 = vld [vmem:[%s416 + $0x308] sm:$0xf]
        %v670 = vld [vmem:[%s416 + $0x30c] sm:$0xff]
        %v671 = vld [vmem:[%s416 + $0x314] sm:$0xf]
        %v672 = vld [vmem:[%s416 + $0x318] sm:$0xff]
        %v673 = vld [vmem:[%s416 + $0x320] sm:$0xf]
        %v674 = vld [vmem:[%s416 + $0x324] sm:$0xff]
        %v675 = vld [vmem:[%s416 + $0x32c] sm:$0xf]
        %v676 = vld [vmem:[%s416 + $0x330] sm:$0xff]
        %v677 = vld [vmem:[%s416 + $0x338] sm:$0xf]
        %v678 = vld [vmem:[%s416 + $0x33c] sm:$0xff]
        %v679 = vld [vmem:[%s416 + $0x344] sm:$0xf]
        %v680 = vld [vmem:[%s416 + $0x348] sm:$0xff]
        %v681 = vld [vmem:[%s416 + $0x350] sm:$0xf]
        %v682 = vld [vmem:[%s416 + $0x354] sm:$0xff]
        %v683 = vld [vmem:[%s416 + $0x35c] sm:$0xf]
        %v684 = vld [vmem:[%s416 + $0x360] sm:$0xff]
        %v685 = vld [vmem:[%s416 + $0x368] sm:$0xf]
        %v686 = vld [vmem:[%s416 + $0x36c] sm:$0xff]
        %v687 = vld [vmem:[%s416 + $0x374] sm:$0xf]
        %v688 = vld [vmem:[%s416 + $0x378] sm:$0xff]
        %v689 = vld [vmem:[%s416 + $0x380] sm:$0xf]
        %v690 = vld [vmem:[%s416 + $0x384] sm:$0xff]
        %v691 = vld [vmem:[%s416 + $0x38c] sm:$0xf]
        %v692 = vld [vmem:[%s416 + $0x390] sm:$0xff]
        %v693 = vld [vmem:[%s416 + $0x398] sm:$0xf]
        %v694 = vld [vmem:[%s416 + $0x39c] sm:$0xff]
        %v695 = vld [vmem:[%s416 + $0x3a4] sm:$0xf]
        %v696 = vld [vmem:[%s416 + $0x3a8] sm:$0xff]
        %v697 = vld [vmem:[%s416 + $0x3b0] sm:$0xf]
        %v698 = vld [vmem:[%s416 + $0x3b4] sm:$0xff]
        %v699 = vld [vmem:[%s416 + $0x3bc] sm:$0xf]
        %v700 = vld [vmem:[%s416 + $0x3c0] sm:$0xff]
        %v701 = vld [vmem:[%s416 + $0x3c8] sm:$0xf]
        %v702 = vld [vmem:[%s416 + $0x3cc] sm:$0xff]
        %v703 = vld [vmem:[%s416 + $0x3d4] sm:$0xf]
        %v704 = vld [vmem:[%s416 + $0x3d8] sm:$0xff]
        %v705 = vld [vmem:[%s416 + $0x3e0] sm:$0xf]
        %v706 = vld [vmem:[%s416 + $0x3e4] sm:$0xff]
        %v707 = vld [vmem:[%s416 + $0x3ec] sm:$0xf]
        %v708 = vld [vmem:[%s416 + $0x3f0] sm:$0xff]
        %v709 = vld [vmem:[%s416 + $0x3f8] sm:$0xf]
        %v710 = vld [vmem:[%s416 + $0x3fc] sm:$0xff]
        %v711 = vld [vmem:[%s416 + $0x404] sm:$0xf]
        %v712 = vld [vmem:[%s416 + $0x408] sm:$0xff]
        %v713 = vld [vmem:[%s416 + $0x410] sm:$0xf]
        %v714 = vld [vmem:[%s416 + $0x414] sm:$0xff]
        %v715 = vld [vmem:[%s416 + $0x41c] sm:$0xf]
        %v716 = vld [vmem:[%s416 + $0x420] sm:$0xff]
        %v717 = vld [vmem:[%s416 + $0x428] sm:$0xf]
        %v718 = vld [vmem:[%s416 + $0x42c] sm:$0xff]
        %v719 = vld [vmem:[%s416 + $0x434] sm:$0xf]
        %v720 = vld [vmem:[%s416 + $0x438] sm:$0xff]
        %v721 = vld [vmem:[%s416 + $0x440] sm:$0xf]
        %v722 = vld [vmem:[%s416 + $0x444] sm:$0xff]
        %v723 = vld [vmem:[%s416 + $0x44c] sm:$0xf]
        %v724 = vld [vmem:[%s416 + $0x450] sm:$0xff]
        %v725 = vld [vmem:[%s416 + $0x458] sm:$0xf]
        %v726 = vld [vmem:[%s416 + $0x45c] sm:$0xff]
        %v727 = vld [vmem:[%s416 + $0x464] sm:$0xf]
        %v728 = vld [vmem:[%s416 + $0x468] sm:$0xff]
        %v729 = vld [vmem:[%s416 + $0x470] sm:$0xf]
        %v730 = vld [vmem:[%s416 + $0x474] sm:$0xff]
        %v731 = vld [vmem:[%s416 + $0x47c] sm:$0xf]
        %v732 = vld [vmem:[%s426] sm:$0x7]
        %v734 = vperm.slane %v732, 0
        %v735 = vperm.slane %v732, 1
        %v736 = vperm.slane %v732, 2
        %v752 = vunpack.c.l.b16 %v516
        %v753 = vunpack.c.h.b16 %v516
        %v754 = vunpack.c.l.b16 %v517
        %v755 = vunpack.c.h.b16 %v517
        %v756 = vunpack.c.l.b16 %v518
        %v757 = vunpack.c.h.b16 %v518
        %v758 = vunpack.c.l.b16 %v519
        %v759 = vunpack.c.h.b16 %v519
        %v760 = vunpack.c.l.b16 %v520
        %v761 = vunpack.c.h.b16 %v520
        %v762 = vunpack.c.l.b16 %v521
        %v763 = vunpack.c.h.b16 %v521
        %v764 = vunpack.c.l.b16 %v522
        %v765 = vunpack.c.h.b16 %v522
        %v766 = vunpack.c.l.b16 %v523
        %v767 = vunpack.c.h.b16 %v523
        %v768 = vunpack.c.l.b16 %v524
        %v769 = vunpack.c.h.b16 %v524
        %v770 = vunpack.c.l.b16 %v525
        %v771 = vunpack.c.h.b16 %v525
        %v772 = vunpack.c.l.b16 %v526
        %v773 = vunpack.c.h.b16 %v526
        %v774 = vunpack.c.l.b16 %v527
        %v775 = vunpack.c.h.b16 %v527
        %v776 = vpack.c.b16 %v758, %v752
        %v777 = vpack.c.b16 %v759, %v753
        %v778 = vpack.c.b16 %v760, %v754
        %v779 = vpack.c.b16 %v761, %v755
        %v780 = vpack.c.b16 %v762, %v756
        %v781 = vpack.c.b16 %v763, %v757
        %v782 = vpack.c.b16 %v770, %v764
        %v783 = vpack.c.b16 %v771, %v765
        %v784 = vpack.c.b16 %v772, %v766
        %v785 = vpack.c.b16 %v773, %v767
        %v786 = vpack.c.b16 %v774, %v768
        %v787 = vpack.c.b16 %v775, %v769
        %v992 = vunpack.c.l.b16 %v540
        %v993 = vunpack.c.h.b16 %v540
        %v994 = vunpack.c.l.b16 %v541
        %v995 = vunpack.c.l.b16 %v542
        %v996 = vunpack.c.h.b16 %v542
        %v997 = vunpack.c.l.b16 %v543
        %v998 = vunpack.c.l.b16 %v544
        %v999 = vunpack.c.h.b16 %v544
        %v1000 = vunpack.c.l.b16 %v545
        %v1001 = vunpack.c.l.b16 %v546
        %v1002 = vunpack.c.h.b16 %v546
        %v1003 = vunpack.c.l.b16 %v547
        %v1004 = vunpack.c.l.b16 %v548
        %v1005 = vunpack.c.h.b16 %v548
        %v1006 = vunpack.c.l.b16 %v549
        %v1007 = vunpack.c.l.b16 %v550
        %v1008 = vunpack.c.h.b16 %v550
        %v1009 = vunpack.c.l.b16 %v551
        %v1010 = vunpack.c.l.b16 %v552
        %v1011 = vunpack.c.h.b16 %v552
        %v1012 = vunpack.c.l.b16 %v553
        %v1013 = vunpack.c.l.b16 %v554
        %v1014 = vunpack.c.h.b16 %v554
        %v1015 = vunpack.c.l.b16 %v555
        %v1016 = vunpack.c.l.b16 %v556
        %v1017 = vunpack.c.h.b16 %v556
        %v1018 = vunpack.c.l.b16 %v557
        %v1019 = vunpack.c.l.b16 %v558
        %v1020 = vunpack.c.h.b16 %v558
        %v1021 = vunpack.c.l.b16 %v559
        %v1022 = vunpack.c.l.b16 %v560
        %v1023 = vunpack.c.h.b16 %v560
        %v1024 = vunpack.c.l.b16 %v561
        %v1025 = vunpack.c.l.b16 %v562
        %v1026 = vunpack.c.h.b16 %v562
        %v1027 = vunpack.c.l.b16 %v563
        %v1028 = vunpack.c.l.b16 %v564
        %v1029 = vunpack.c.h.b16 %v564
        %v1030 = vunpack.c.l.b16 %v565
        %v1031 = vunpack.c.l.b16 %v566
        %v1032 = vunpack.c.h.b16 %v566
        %v1033 = vunpack.c.l.b16 %v567
        %v1034 = vunpack.c.l.b16 %v568
        %v1035 = vunpack.c.h.b16 %v568
        %v1036 = vunpack.c.l.b16 %v569
        %v1037 = vunpack.c.l.b16 %v570
        %v1038 = vunpack.c.h.b16 %v570
        %v1039 = vunpack.c.l.b16 %v571
        %v1040 = vunpack.c.l.b16 %v572
        %v1041 = vunpack.c.h.b16 %v572
        %v1042 = vunpack.c.l.b16 %v573
        %v1043 = vunpack.c.l.b16 %v574
        %v1044 = vunpack.c.h.b16 %v574
        %v1045 = vunpack.c.l.b16 %v575
        %v1046 = vunpack.c.l.b16 %v576
        %v1047 = vunpack.c.h.b16 %v576
        %v1048 = vunpack.c.l.b16 %v577
        %v1049 = vunpack.c.l.b16 %v578
        %v1050 = vunpack.c.h.b16 %v578
        %v1051 = vunpack.c.l.b16 %v579
        %v1052 = vunpack.c.l.b16 %v580
        %v1053 = vunpack.c.h.b16 %v580
        %v1054 = vunpack.c.l.b16 %v581
        %v1055 = vunpack.c.l.b16 %v582
        %v1056 = vunpack.c.h.b16 %v582
        %v1057 = vunpack.c.l.b16 %v583
        %v1058 = vunpack.c.l.b16 %v584
        %v1059 = vunpack.c.h.b16 %v584
        %v1060 = vunpack.c.l.b16 %v585
        %v1061 = vunpack.c.l.b16 %v586
        %v1062 = vunpack.c.h.b16 %v586
        %v1063 = vunpack.c.l.b16 %v587
        %v1064 = vunpack.c.l.b16 %v588
        %v1065 = vunpack.c.h.b16 %v588
        %v1066 = vunpack.c.l.b16 %v589
        %v1067 = vunpack.c.l.b16 %v590
        %v1068 = vunpack.c.h.b16 %v590
        %v1069 = vunpack.c.l.b16 %v591
        %v1070 = vunpack.c.l.b16 %v592
        %v1071 = vunpack.c.h.b16 %v592
        %v1072 = vunpack.c.l.b16 %v593
        %v1073 = vunpack.c.l.b16 %v594
        %v1074 = vunpack.c.h.b16 %v594
        %v1075 = vunpack.c.l.b16 %v595
        %v1076 = vunpack.c.l.b16 %v596
        %v1077 = vunpack.c.h.b16 %v596
        %v1078 = vunpack.c.l.b16 %v597
        %v1079 = vunpack.c.l.b16 %v598
        %v1080 = vunpack.c.h.b16 %v598
        %v1081 = vunpack.c.l.b16 %v599
        %v1082 = vunpack.c.l.b16 %v600
        %v1083 = vunpack.c.h.b16 %v600
        %v1084 = vunpack.c.l.b16 %v601
        %v1085 = vunpack.c.l.b16 %v602
        %v1086 = vunpack.c.h.b16 %v602
        %v1087 = vunpack.c.l.b16 %v603
        %v1088 = vunpack.c.l.b16 %v604
        %v1089 = vunpack.c.h.b16 %v604
        %v1090 = vunpack.c.l.b16 %v605
        %v1091 = vunpack.c.l.b16 %v606
        %v1092 = vunpack.c.h.b16 %v606
        %v1093 = vunpack.c.l.b16 %v607
        %v1094 = vunpack.c.l.b16 %v608
        %v1095 = vunpack.c.h.b16 %v608
        %v1096 = vunpack.c.l.b16 %v609
        %v1097 = vunpack.c.l.b16 %v610
        %v1098 = vunpack.c.h.b16 %v610
        %v1099 = vunpack.c.l.b16 %v611
        %v1100 = vunpack.c.l.b16 %v612
        %v1101 = vunpack.c.h.b16 %v612
        %v1102 = vunpack.c.l.b16 %v613
        %v1103 = vunpack.c.l.b16 %v614
        %v1104 = vunpack.c.h.b16 %v614
        %v1105 = vunpack.c.l.b16 %v615
        %v1106 = vunpack.c.l.b16 %v616
        %v1107 = vunpack.c.h.b16 %v616
        %v1108 = vunpack.c.l.b16 %v617
        %v1109 = vunpack.c.l.b16 %v618
        %v1110 = vunpack.c.h.b16 %v618
        %v1111 = vunpack.c.l.b16 %v619
        %v1112 = vunpack.c.l.b16 %v620
        %v1113 = vunpack.c.h.b16 %v620
        %v1114 = vunpack.c.l.b16 %v621
        %v1115 = vunpack.c.l.b16 %v622
        %v1116 = vunpack.c.h.b16 %v622
        %v1117 = vunpack.c.l.b16 %v623
        %v1118 = vunpack.c.l.b16 %v624
        %v1119 = vunpack.c.h.b16 %v624
        %v1120 = vunpack.c.l.b16 %v625
        %v1121 = vunpack.c.l.b16 %v626
        %v1122 = vunpack.c.h.b16 %v626
        %v1123 = vunpack.c.l.b16 %v627
        %v1124 = vunpack.c.l.b16 %v628
        %v1125 = vunpack.c.h.b16 %v628
        %v1126 = vunpack.c.l.b16 %v629
        %v1127 = vunpack.c.l.b16 %v630
        %v1128 = vunpack.c.h.b16 %v630
        %v1129 = vunpack.c.l.b16 %v631
        %v1130 = vunpack.c.l.b16 %v632
        %v1131 = vunpack.c.h.b16 %v632
        %v1132 = vunpack.c.l.b16 %v633
        %v1133 = vunpack.c.l.b16 %v634
        %v1134 = vunpack.c.h.b16 %v634
        %v1135 = vunpack.c.l.b16 %v635
        %v1136 = vunpack.c.l.b16 %v636
        %v1137 = vunpack.c.h.b16 %v636
        %v1138 = vunpack.c.l.b16 %v637
        %v1139 = vunpack.c.l.b16 %v638
        %v1140 = vunpack.c.h.b16 %v638
        %v1141 = vunpack.c.l.b16 %v639
        %v1142 = vunpack.c.l.b16 %v640
        %v1143 = vunpack.c.h.b16 %v640
        %v1144 = vunpack.c.l.b16 %v641
        %v1145 = vunpack.c.l.b16 %v642
        %v1146 = vunpack.c.h.b16 %v642
        %v1147 = vunpack.c.l.b16 %v643
        %v1148 = vunpack.c.l.b16 %v644
        %v1149 = vunpack.c.h.b16 %v644
        %v1150 = vunpack.c.l.b16 %v645
        %v1151 = vunpack.c.l.b16 %v646
        %v1152 = vunpack.c.h.b16 %v646
        %v1153 = vunpack.c.l.b16 %v647
        %v1154 = vunpack.c.l.b16 %v648
        %v1155 = vunpack.c.h.b16 %v648
        %v1156 = vunpack.c.l.b16 %v649
        %v1157 = vunpack.c.l.b16 %v650
        %v1158 = vunpack.c.h.b16 %v650
        %v1159 = vunpack.c.l.b16 %v651
        %v1160 = vunpack.c.l.b16 %v652
        %v1161 = vunpack.c.h.b16 %v652
        %v1162 = vunpack.c.l.b16 %v653
        %v1163 = vunpack.c.l.b16 %v654
        %v1164 = vunpack.c.h.b16 %v654
        %v1165 = vunpack.c.l.b16 %v655
        %v1166 = vunpack.c.l.b16 %v656
        %v1167 = vunpack.c.h.b16 %v656
        %v1168 = vunpack.c.l.b16 %v657
        %v1169 = vunpack.c.l.b16 %v658
        %v1170 = vunpack.c.h.b16 %v658
        %v1171 = vunpack.c.l.b16 %v659
        %v1172 = vunpack.c.l.b16 %v660
        %v1173 = vunpack.c.h.b16 %v660
        %v1174 = vunpack.c.l.b16 %v661
        %v1175 = vunpack.c.l.b16 %v662
        %v1176 = vunpack.c.h.b16 %v662
        %v1177 = vunpack.c.l.b16 %v663
        %v1178 = vunpack.c.l.b16 %v664
        %v1179 = vunpack.c.h.b16 %v664
        %v1180 = vunpack.c.l.b16 %v665
        %v1181 = vunpack.c.l.b16 %v666
        %v1182 = vunpack.c.h.b16 %v666
        %v1183 = vunpack.c.l.b16 %v667
        %v1184 = vunpack.c.l.b16 %v668
        %v1185 = vunpack.c.h.b16 %v668
        %v1186 = vunpack.c.l.b16 %v669
        %v1187 = vunpack.c.l.b16 %v670
        %v1188 = vunpack.c.h.b16 %v670
        %v1189 = vunpack.c.l.b16 %v671
        %v1190 = vunpack.c.l.b16 %v672
        %v1191 = vunpack.c.h.b16 %v672
        %v1192 = vunpack.c.l.b16 %v673
        %v1193 = vunpack.c.l.b16 %v674
        %v1194 = vunpack.c.h.b16 %v674
        %v1195 = vunpack.c.l.b16 %v675
        %v1196 = vunpack.c.l.b16 %v676
        %v1197 = vunpack.c.h.b16 %v676
        %v1198 = vunpack.c.l.b16 %v677
        %v1199 = vunpack.c.l.b16 %v678
        %v1200 = vunpack.c.h.b16 %v678
        %v1201 = vunpack.c.l.b16 %v679
        %v1202 = vunpack.c.l.b16 %v680
        %v1203 = vunpack.c.h.b16 %v680
        %v1204 = vunpack.c.l.b16 %v681
        %v1205 = vunpack.c.l.b16 %v682
        %v1206 = vunpack.c.h.b16 %v682
        %v1207 = vunpack.c.l.b16 %v683
        %v1208 = vunpack.c.l.b16 %v684
        %v1209 = vunpack.c.h.b16 %v684
        %v1210 = vunpack.c.l.b16 %v685
        %v1211 = vunpack.c.l.b16 %v686
        %v1212 = vunpack.c.h.b16 %v686
        %v1213 = vunpack.c.l.b16 %v687
        %v1214 = vunpack.c.l.b16 %v688
        %v1215 = vunpack.c.h.b16 %v688
        %v1216 = vunpack.c.l.b16 %v689
        %v1217 = vunpack.c.l.b16 %v690
        %v1218 = vunpack.c.h.b16 %v690
        %v1219 = vunpack.c.l.b16 %v691
        %v1220 = vunpack.c.l.b16 %v692
        %v1221 = vunpack.c.h.b16 %v692
        %v1222 = vunpack.c.l.b16 %v693
        %v1223 = vunpack.c.l.b16 %v694
        %v1224 = vunpack.c.h.b16 %v694
        %v1225 = vunpack.c.l.b16 %v695
        %v1226 = vunpack.c.l.b16 %v696
        %v1227 = vunpack.c.h.b16 %v696
        %v1228 = vunpack.c.l.b16 %v697
        %v1229 = vunpack.c.l.b16 %v698
        %v1230 = vunpack.c.h.b16 %v698
        %v1231 = vunpack.c.l.b16 %v699
        %v1232 = vunpack.c.l.b16 %v700
        %v1233 = vunpack.c.h.b16 %v700
        %v1234 = vunpack.c.l.b16 %v701
        %v1235 = vunpack.c.l.b16 %v702
        %v1236 = vunpack.c.h.b16 %v702
        %v1237 = vunpack.c.l.b16 %v703
        %v1238 = vunpack.c.l.b16 %v704
        %v1239 = vunpack.c.h.b16 %v704
        %v1240 = vunpack.c.l.b16 %v705
        %v1241 = vunpack.c.l.b16 %v706
        %v1242 = vunpack.c.h.b16 %v706
        %v1243 = vunpack.c.l.b16 %v707
        %v1244 = vunpack.c.l.b16 %v708
        %v1245 = vunpack.c.h.b16 %v708
        %v1246 = vunpack.c.l.b16 %v709
        %v1247 = vunpack.c.l.b16 %v710
        %v1248 = vunpack.c.h.b16 %v710
        %v1249 = vunpack.c.l.b16 %v711
        %v1250 = vunpack.c.l.b16 %v712
        %v1251 = vunpack.c.h.b16 %v712
        %v1252 = vunpack.c.l.b16 %v713
        %v1253 = vunpack.c.l.b16 %v714
        %v1254 = vunpack.c.h.b16 %v714
        %v1255 = vunpack.c.l.b16 %v715
        %v1256 = vunpack.c.l.b16 %v716
        %v1257 = vunpack.c.h.b16 %v716
        %v1258 = vunpack.c.l.b16 %v717
        %v1259 = vunpack.c.l.b16 %v718
        %v1260 = vunpack.c.h.b16 %v718
        %v1261 = vunpack.c.l.b16 %v719
        %v1262 = vunpack.c.l.b16 %v720
        %v1263 = vunpack.c.h.b16 %v720
        %v1264 = vunpack.c.l.b16 %v721
        %v1265 = vunpack.c.l.b16 %v722
        %v1266 = vunpack.c.h.b16 %v722
        %v1267 = vunpack.c.l.b16 %v723
        %v1268 = vunpack.c.l.b16 %v724
        %v1269 = vunpack.c.h.b16 %v724
        %v1270 = vunpack.c.l.b16 %v725
        %v1271 = vunpack.c.l.b16 %v726
        %v1272 = vunpack.c.h.b16 %v726
        %v1273 = vunpack.c.l.b16 %v727
        %v1274 = vunpack.c.l.b16 %v728
        %v1275 = vunpack.c.h.b16 %v728
        %v1276 = vunpack.c.l.b16 %v729
        %v1277 = vunpack.c.l.b16 %v730
        %v1278 = vunpack.c.h.b16 %v730
        %v1279 = vunpack.c.l.b16 %v731
        %v1280 = vpack.c.b16 %v995, %v992
        %v1281 = vpack.c.b16 %v996, %v993
        %v1282 = vpack.c.b16 %v997, %v994
        %v1283 = vpack.c.b16 %v1001, %v998
        %v1284 = vpack.c.b16 %v1002, %v999
        %v1285 = vpack.c.b16 %v1003, %v1000
        %v1286 = vpack.c.b16 %v1007, %v1004
        %v1287 = vpack.c.b16 %v1008, %v1005
        %v1288 = vpack.c.b16 %v1009, %v1006
        %v1289 = vpack.c.b16 %v1013, %v1010
        %v1290 = vpack.c.b16 %v1014, %v1011
        %v1291 = vpack.c.b16 %v1015, %v1012
        %v1292 = vpack.c.b16 %v1019, %v1016
        %v1293 = vpack.c.b16 %v1020, %v1017
        %v1294 = vpack.c.b16 %v1021, %v1018
        %v1295 = vpack.c.b16 %v1025, %v1022
        %v1296 = vpack.c.b16 %v1026, %v1023
        %v1297 = vpack.c.b16 %v1027, %v1024
        %v1298 = vpack.c.b16 %v1031, %v1028
        %v1299 = vpack.c.b16 %v1032, %v1029
        %v1300 = vpack.c.b16 %v1033, %v1030
        %v1301 = vpack.c.b16 %v1037, %v1034
        %v1302 = vpack.c.b16 %v1038, %v1035
        %v1303 = vpack.c.b16 %v1039, %v1036
        %v1304 = vpack.c.b16 %v1043, %v1040
        %v1305 = vpack.c.b16 %v1044, %v1041
        %v1306 = vpack.c.b16 %v1045, %v1042
        %v1307 = vpack.c.b16 %v1049, %v1046
        %v1308 = vpack.c.b16 %v1050, %v1047
        %v1309 = vpack.c.b16 %v1051, %v1048
        %v1310 = vpack.c.b16 %v1055, %v1052
        %v1311 = vpack.c.b16 %v1056, %v1053
        %v1312 = vpack.c.b16 %v1057, %v1054
        %v1313 = vpack.c.b16 %v1061, %v1058
        %v1314 = vpack.c.b16 %v1062, %v1059
        %v1315 = vpack.c.b16 %v1063, %v1060
        %v1316 = vpack.c.b16 %v1067, %v1064
        %v1317 = vpack.c.b16 %v1068, %v1065
        %v1318 = vpack.c.b16 %v1069, %v1066
        %v1319 = vpack.c.b16 %v1073, %v1070
        %v1320 = vpack.c.b16 %v1074, %v1071
        %v1321 = vpack.c.b16 %v1075, %v1072
        %v1322 = vpack.c.b16 %v1079, %v1076
        %v1323 = vpack.c.b16 %v1080, %v1077
        %v1324 = vpack.c.b16 %v1081, %v1078
        %v1325 = vpack.c.b16 %v1085, %v1082
        %v1326 = vpack.c.b16 %v1086, %v1083
        %v1327 = vpack.c.b16 %v1087, %v1084
        %v1328 = vpack.c.b16 %v1091, %v1088
        %v1329 = vpack.c.b16 %v1092, %v1089
        %v1330 = vpack.c.b16 %v1093, %v1090
        %v1331 = vpack.c.b16 %v1097, %v1094
        %v1332 = vpack.c.b16 %v1098, %v1095
        %v1333 = vpack.c.b16 %v1099, %v1096
        %v1334 = vpack.c.b16 %v1103, %v1100
        %v1335 = vpack.c.b16 %v1104, %v1101
        %v1336 = vpack.c.b16 %v1105, %v1102
        %v1337 = vpack.c.b16 %v1109, %v1106
        %v1338 = vpack.c.b16 %v1110, %v1107
        %v1339 = vpack.c.b16 %v1111, %v1108
        %v1340 = vpack.c.b16 %v1115, %v1112
        %v1341 = vpack.c.b16 %v1116, %v1113
        %v1342 = vpack.c.b16 %v1117, %v1114
        %v1343 = vpack.c.b16 %v1121, %v1118
        %v1344 = vpack.c.b16 %v1122, %v1119
        %v1345 = vpack.c.b16 %v1123, %v1120
        %v1346 = vpack.c.b16 %v1127, %v1124
        %v1347 = vpack.c.b16 %v1128, %v1125
        %v1348 = vpack.c.b16 %v1129, %v1126
        %v1349 = vpack.c.b16 %v1133, %v1130
        %v1350 = vpack.c.b16 %v1134, %v1131
        %v1351 = vpack.c.b16 %v1135, %v1132
        %v1352 = vpack.c.b16 %v1139, %v1136
        %v1353 = vpack.c.b16 %v1140, %v1137
        %v1354 = vpack.c.b16 %v1141, %v1138
        %v1355 = vpack.c.b16 %v1145, %v1142
        %v1356 = vpack.c.b16 %v1146, %v1143
        %v1357 = vpack.c.b16 %v1147, %v1144
        %v1358 = vpack.c.b16 %v1151, %v1148
        %v1359 = vpack.c.b16 %v1152, %v1149
        %v1360 = vpack.c.b16 %v1153, %v1150
        %v1361 = vpack.c.b16 %v1157, %v1154
        %v1362 = vpack.c.b16 %v1158, %v1155
        %v1363 = vpack.c.b16 %v1159, %v1156
        %v1364 = vpack.c.b16 %v1163, %v1160
        %v1365 = vpack.c.b16 %v1164, %v1161
        %v1366 = vpack.c.b16 %v1165, %v1162
        %v1367 = vpack.c.b16 %v1169, %v1166
        %v1368 = vpack.c.b16 %v1170, %v1167
        %v1369 = vpack.c.b16 %v1171, %v1168
        %v1370 = vpack.c.b16 %v1175, %v1172
        %v1371 = vpack.c.b16 %v1176, %v1173
        %v1372 = vpack.c.b16 %v1177, %v1174
        %v1373 = vpack.c.b16 %v1181, %v1178
        %v1374 = vpack.c.b16 %v1182, %v1179
        %v1375 = vpack.c.b16 %v1183, %v1180
        %v1376 = vpack.c.b16 %v1187, %v1184
        %v1377 = vpack.c.b16 %v1188, %v1185
        %v1378 = vpack.c.b16 %v1189, %v1186
        %v1379 = vpack.c.b16 %v1193, %v1190
        %v1380 = vpack.c.b16 %v1194, %v1191
        %v1381 = vpack.c.b16 %v1195, %v1192
        %v1382 = vpack.c.b16 %v1199, %v1196
        %v1383 = vpack.c.b16 %v1200, %v1197
        %v1384 = vpack.c.b16 %v1201, %v1198
        %v1385 = vpack.c.b16 %v1205, %v1202
        %v1386 = vpack.c.b16 %v1206, %v1203
        %v1387 = vpack.c.b16 %v1207, %v1204
        %v1388 = vpack.c.b16 %v1211, %v1208
        %v1389 = vpack.c.b16 %v1212, %v1209
        %v1390 = vpack.c.b16 %v1213, %v1210
        %v1391 = vpack.c.b16 %v1217, %v1214
        %v1392 = vpack.c.b16 %v1218, %v1215
        %v1393 = vpack.c.b16 %v1219, %v1216
        %v1394 = vpack.c.b16 %v1223, %v1220
        %v1395 = vpack.c.b16 %v1224, %v1221
        %v1396 = vpack.c.b16 %v1225, %v1222
        %v1397 = vpack.c.b16 %v1229, %v1226
        %v1398 = vpack.c.b16 %v1230, %v1227
        %v1399 = vpack.c.b16 %v1231, %v1228
        %v1400 = vpack.c.b16 %v1235, %v1232
        %v1401 = vpack.c.b16 %v1236, %v1233
        %v1402 = vpack.c.b16 %v1237, %v1234
        %v1403 = vpack.c.b16 %v1241, %v1238
        %v1404 = vpack.c.b16 %v1242, %v1239
        %v1405 = vpack.c.b16 %v1243, %v1240
        %v1406 = vpack.c.b16 %v1247, %v1244
        %v1407 = vpack.c.b16 %v1248, %v1245
        %v1408 = vpack.c.b16 %v1249, %v1246
        %v1409 = vpack.c.b16 %v1253, %v1250
        %v1410 = vpack.c.b16 %v1254, %v1251
        %v1411 = vpack.c.b16 %v1255, %v1252
        %v1412 = vpack.c.b16 %v1259, %v1256
        %v1413 = vpack.c.b16 %v1260, %v1257
        %v1414 = vpack.c.b16 %v1261, %v1258
        %v1415 = vpack.c.b16 %v1265, %v1262
        %v1416 = vpack.c.b16 %v1266, %v1263
        %v1417 = vpack.c.b16 %v1267, %v1264
        %v1418 = vpack.c.b16 %v1271, %v1268
        %v1419 = vpack.c.b16 %v1272, %v1269
        %v1420 = vpack.c.b16 %v1273, %v1270
        %v1421 = vpack.c.b16 %v1277, %v1274
        %v1422 = vpack.c.b16 %v1278, %v1275
        %v1423 = vpack.c.b16 %v1279, %v1276
        %1568 = vmatpush.bf16.msra.mxu0 %v1301
        %1569 = vmatpush.bf16.msra.mxu0 %v1298
        %1570 = vmatpush.bf16.msra.mxu0 %v1295
        %1571 = vmatpush.bf16.msra.mxu0 %v1292
        %1572 = vmatpush.bf16.msra.mxu0 %v1289
        %1573 = vmatpush.bf16.msra.mxu0 %v1286
        %1574 = vmatpush.bf16.msra.mxu0 %v1283
        %1575 = vmatpush.bf16.msra.mxu0 %v1280
        %1576 = vmatmul.bf16.gmra.mxu0 %v776
        %v1577 = vpop.f32.mrf.mxu0
        %v1578 = vadd.f32 %v734, %v1577
        %v1579 = vpop.f32.mrf.mxu0
        %v1580 = vadd.f32 %v734, %v1579
        %1581 = vmatmul.bf16.gmra.mxu0 %v782
        %v1582 = vpop.f32.mrf.mxu0
        %v1583 = vadd.f32 %v734, %v1582
        %v1584 = vpop.f32.mrf.mxu0
        %v1585 = vadd.f32 %v734, %v1584
        %1586 = vdwg.mxu0
        %1587 = vmatpush.bf16.msra.mxu0 %v1325
        %1588 = vmatpush.bf16.msra.mxu0 %v1322
        %1589 = vmatpush.bf16.msra.mxu0 %v1319
        %1590 = vmatpush.bf16.msra.mxu0 %v1316
        %1591 = vmatpush.bf16.msra.mxu0 %v1313
        %1592 = vmatpush.bf16.msra.mxu0 %v1310
        %1593 = vmatpush.bf16.msra.mxu0 %v1307
        %1594 = vmatpush.bf16.msra.mxu0 %v1304
        %1595 = vmatmul.bf16.gmra.mxu0 %v777
        %v1596 = vpop.f32.mrf.mxu0
        %v1597 = vadd.f32 %v1578, %v1596
        %v1598 = vpop.f32.mrf.mxu0
        %v1599 = vadd.f32 %v1580, %v1598
        %1600 = vmatmul.bf16.gmra.mxu0 %v783
        %v1601 = vpop.f32.mrf.mxu0
        %v1602 = vadd.f32 %v1583, %v1601
        %v1603 = vpop.f32.mrf.mxu0
        %v1604 = vadd.f32 %v1585, %v1603
        %1605 = vdwg.mxu0
        %1606 = vmatpush.bf16.msra.mxu0 %v1349
        %1607 = vmatpush.bf16.msra.mxu0 %v1346
        %1608 = vmatpush.bf16.msra.mxu0 %v1343
        %1609 = vmatpush.bf16.msra.mxu0 %v1340
        %1610 = vmatpush.bf16.msra.mxu0 %v1337
        %1611 = vmatpush.bf16.msra.mxu0 %v1334
        %1612 = vmatpush.bf16.msra.mxu0 %v1331
        %1613 = vmatpush.bf16.msra.mxu0 %v1328
        %1614 = vmatmul.bf16.gmra.mxu0 %v778
        %v1615 = vpop.f32.mrf.mxu0
        %v1616 = vadd.f32 %v1597, %v1615
        %v1617 = vpop.f32.mrf.mxu0
        %v1618 = vadd.f32 %v1599, %v1617
        %1619 = vmatmul.bf16.gmra.mxu0 %v784
        %v1620 = vpop.f32.mrf.mxu0
        %v1621 = vadd.f32 %v1602, %v1620
        %v1622 = vpop.f32.mrf.mxu0
        %v1623 = vadd.f32 %v1604, %v1622
        %1624 = vdwg.mxu0
        %1625 = vmatpush.bf16.msra.mxu0 %v1373
        %1626 = vmatpush.bf16.msra.mxu0 %v1370
        %1627 = vmatpush.bf16.msra.mxu0 %v1367
        %1628 = vmatpush.bf16.msra.mxu0 %v1364
        %1629 = vmatpush.bf16.msra.mxu0 %v1361
        %1630 = vmatpush.bf16.msra.mxu0 %v1358
        %1631 = vmatpush.bf16.msra.mxu0 %v1355
        %1632 = vmatpush.bf16.msra.mxu0 %v1352
        %1633 = vmatmul.bf16.gmra.mxu0 %v779
        %v1634 = vpop.f32.mrf.mxu0
        %v1635 = vadd.f32 %v1616, %v1634
        %v1636 = vpop.f32.mrf.mxu0
        %v1637 = vadd.f32 %v1618, %v1636
        %1638 = vmatmul.bf16.gmra.mxu0 %v785
        %v1639 = vpop.f32.mrf.mxu0
        %v1640 = vadd.f32 %v1621, %v1639
        %v1641 = vpop.f32.mrf.mxu0
        %v1642 = vadd.f32 %v1623, %v1641
        %1643 = vdwg.mxu0
        %1644 = vmatpush.bf16.msra.mxu0 %v1397
        %1645 = vmatpush.bf16.msra.mxu0 %v1394
        %1646 = vmatpush.bf16.msra.mxu0 %v1391
        %1647 = vmatpush.bf16.msra.mxu0 %v1388
        %1648 = vmatpush.bf16.msra.mxu0 %v1385
        %1649 = vmatpush.bf16.msra.mxu0 %v1382
        %1650 = vmatpush.bf16.msra.mxu0 %v1379
        %1651 = vmatpush.bf16.msra.mxu0 %v1376
        %1652 = vmatmul.bf16.gmra.mxu0 %v780
        %v1653 = vpop.f32.mrf.mxu0
        %v1654 = vadd.f32 %v1635, %v1653
        %v1655 = vpop.f32.mrf.mxu0
        %v1656 = vadd.f32 %v1637, %v1655
        %1657 = vmatmul.bf16.gmra.mxu0 %v786
        %v1658 = vpop.f32.mrf.mxu0
        %v1659 = vadd.f32 %v1640, %v1658
        %v1660 = vpop.f32.mrf.mxu0
        %v1661 = vadd.f32 %v1642, %v1660
        %1662 = vdwg.mxu0
        %1663 = vmatpush.bf16.msra.mxu0 %v1421
        %1664 = vmatpush.bf16.msra.mxu0 %v1418
        %1665 = vmatpush.bf16.msra.mxu0 %v1415
        %1666 = vmatpush.bf16.msra.mxu0 %v1412
        %1667 = vmatpush.bf16.msra.mxu0 %v1409
        %1668 = vmatpush.bf16.msra.mxu0 %v1406
        %1669 = vmatpush.bf16.msra.mxu0 %v1403
        %1670 = vmatpush.bf16.msra.mxu0 %v1400
        %1671 = vmatmul.bf16.gmra.mxu0 %v781
        %v1672 = vpop.f32.mrf.mxu0
        %v1673 = vadd.f32 %v1654, %v1672
        %v1674 = vpop.f32.mrf.mxu0
        %v1675 = vadd.f32 %v1656, %v1674
        %1676 = vmatmul.bf16.gmra.mxu0 %v787
        %v1677 = vpop.f32.mrf.mxu0
        %v1678 = vadd.f32 %v1659, %v1677
        %v1679 = vpop.f32.mrf.mxu0
        %v1680 = vadd.f32 %v1661, %v1679
        %1681 = vdwg.mxu0
        %1682 = vmatpush.bf16.msra.mxu0 %v1302
        %1683 = vmatpush.bf16.msra.mxu0 %v1299
        %1684 = vmatpush.bf16.msra.mxu0 %v1296
        %1685 = vmatpush.bf16.msra.mxu0 %v1293
        %1686 = vmatpush.bf16.msra.mxu0 %v1290
        %1687 = vmatpush.bf16.msra.mxu0 %v1287
        %1688 = vmatpush.bf16.msra.mxu0 %v1284
        %1689 = vmatpush.bf16.msra.mxu0 %v1281
        %1690 = vmatmul.bf16.gmra.mxu0 %v776
        %v1691 = vpop.f32.mrf.mxu0
        %v1692 = vadd.f32 %v735, %v1691
        %v1693 = vpop.f32.mrf.mxu0
        %v1694 = vadd.f32 %v735, %v1693
        %1695 = vmatmul.bf16.gmra.mxu0 %v782
        %v1696 = vpop.f32.mrf.mxu0
        %v1697 = vadd.f32 %v735, %v1696
        %v1698 = vpop.f32.mrf.mxu0
        %v1699 = vadd.f32 %v735, %v1698
        %1700 = vdwg.mxu0
        %1701 = vmatpush.bf16.msra.mxu0 %v1326
        %1702 = vmatpush.bf16.msra.mxu0 %v1323
        %1703 = vmatpush.bf16.msra.mxu0 %v1320
        %1704 = vmatpush.bf16.msra.mxu0 %v1317
        %1705 = vmatpush.bf16.msra.mxu0 %v1314
        %1706 = vmatpush.bf16.msra.mxu0 %v1311
        %1707 = vmatpush.bf16.msra.mxu0 %v1308
        %1708 = vmatpush.bf16.msra.mxu0 %v1305
        %1709 = vmatmul.bf16.gmra.mxu0 %v777
        %v1710 = vpop.f32.mrf.mxu0
        %v1711 = vadd.f32 %v1692, %v1710
        %v1712 = vpop.f32.mrf.mxu0
        %v1713 = vadd.f32 %v1694, %v1712
        %1714 = vmatmul.bf16.gmra.mxu0 %v783
        %v1715 = vpop.f32.mrf.mxu0
        %v1716 = vadd.f32 %v1697, %v1715
        %v1717 = vpop.f32.mrf.mxu0
        %v1718 = vadd.f32 %v1699, %v1717
        %1719 = vdwg.mxu0
        %1720 = vmatpush.bf16.msra.mxu0 %v1350
        %1721 = vmatpush.bf16.msra.mxu0 %v1347
        %1722 = vmatpush.bf16.msra.mxu0 %v1344
        %1723 = vmatpush.bf16.msra.mxu0 %v1341
        %1724 = vmatpush.bf16.msra.mxu0 %v1338
        %1725 = vmatpush.bf16.msra.mxu0 %v1335
        %1726 = vmatpush.bf16.msra.mxu0 %v1332
        %1727 = vmatpush.bf16.msra.mxu0 %v1329
        %1728 = vmatmul.bf16.gmra.mxu0 %v778
        %v1729 = vpop.f32.mrf.mxu0
        %v1730 = vadd.f32 %v1711, %v1729
        %v1731 = vpop.f32.mrf.mxu0
        %v1732 = vadd.f32 %v1713, %v1731
        %1733 = vmatmul.bf16.gmra.mxu0 %v784
        %v1734 = vpop.f32.mrf.mxu0
        %v1735 = vadd.f32 %v1716, %v1734
        %v1736 = vpop.f32.mrf.mxu0
        %v1737 = vadd.f32 %v1718, %v1736
        %1738 = vdwg.mxu0
        %1739 = vmatpush.bf16.msra.mxu0 %v1374
        %1740 = vmatpush.bf16.msra.mxu0 %v1371
        %1741 = vmatpush.bf16.msra.mxu0 %v1368
        %1742 = vmatpush.bf16.msra.mxu0 %v1365
        %1743 = vmatpush.bf16.msra.mxu0 %v1362
        %1744 = vmatpush.bf16.msra.mxu0 %v1359
        %1745 = vmatpush.bf16.msra.mxu0 %v1356
        %1746 = vmatpush.bf16.msra.mxu0 %v1353
        %1747 = vmatmul.bf16.gmra.mxu0 %v779
        %v1748 = vpop.f32.mrf.mxu0
        %v1749 = vadd.f32 %v1730, %v1748
        %v1750 = vpop.f32.mrf.mxu0
        %v1751 = vadd.f32 %v1732, %v1750
        %1752 = vmatmul.bf16.gmra.mxu0 %v785
        %v1753 = vpop.f32.mrf.mxu0
        %v1754 = vadd.f32 %v1735, %v1753
        %v1755 = vpop.f32.mrf.mxu0
        %v1756 = vadd.f32 %v1737, %v1755
        %1757 = vdwg.mxu0
        %1758 = vmatpush.bf16.msra.mxu0 %v1398
        %1759 = vmatpush.bf16.msra.mxu0 %v1395
        %1760 = vmatpush.bf16.msra.mxu0 %v1392
        %1761 = vmatpush.bf16.msra.mxu0 %v1389
        %1762 = vmatpush.bf16.msra.mxu0 %v1386
        %1763 = vmatpush.bf16.msra.mxu0 %v1383
        %1764 = vmatpush.bf16.msra.mxu0 %v1380
        %1765 = vmatpush.bf16.msra.mxu0 %v1377
        %1766 = vmatmul.bf16.gmra.mxu0 %v780
        %v1767 = vpop.f32.mrf.mxu0
        %v1768 = vadd.f32 %v1749, %v1767
        %v1769 = vpop.f32.mrf.mxu0
        %v1770 = vadd.f32 %v1751, %v1769
        %1771 = vmatmul.bf16.gmra.mxu0 %v786
        %v1772 = vpop.f32.mrf.mxu0
        %v1773 = vadd.f32 %v1754, %v1772
        %v1774 = vpop.f32.mrf.mxu0
        %v1775 = vadd.f32 %v1756, %v1774
        %1776 = vdwg.mxu0
        %1777 = vmatpush.bf16.msra.mxu0 %v1422
        %1778 = vmatpush.bf16.msra.mxu0 %v1419
        %1779 = vmatpush.bf16.msra.mxu0 %v1416
        %1780 = vmatpush.bf16.msra.mxu0 %v1413
        %1781 = vmatpush.bf16.msra.mxu0 %v1410
        %1782 = vmatpush.bf16.msra.mxu0 %v1407
        %1783 = vmatpush.bf16.msra.mxu0 %v1404
        %1784 = vmatpush.bf16.msra.mxu0 %v1401
        %1785 = vmatmul.bf16.gmra.mxu0 %v781
        %v1786 = vpop.f32.mrf.mxu0
        %v1787 = vadd.f32 %v1768, %v1786
        %v1788 = vpop.f32.mrf.mxu0
        %v1789 = vadd.f32 %v1770, %v1788
        %1790 = vmatmul.bf16.gmra.mxu0 %v787
        %v1791 = vpop.f32.mrf.mxu0
        %v1792 = vadd.f32 %v1773, %v1791
        %v1793 = vpop.f32.mrf.mxu0
        %v1794 = vadd.f32 %v1775, %v1793
        %1795 = vdwg.mxu0
        %1796 = vmatpush.bf16.msra.mxu0 %v1303
        %1797 = vmatpush.bf16.msra.mxu0 %v1300
        %1798 = vmatpush.bf16.msra.mxu0 %v1297
        %1799 = vmatpush.bf16.msra.mxu0 %v1294
        %1800 = vmatpush.bf16.msra.mxu0 %v1291
        %1801 = vmatpush.bf16.msra.mxu0 %v1288
        %1802 = vmatpush.bf16.msra.mxu0 %v1285
        %1803 = vmatpush.bf16.msra.mxu0 %v1282
        %1804 = vmatmul.bf16.gmra.mxu0 %v776
        %v1805 = vpop.f32.mrf.mxu0
        %v1806 = vadd.f32 %v736, %v1805
        %v1807 = vpop.f32.mrf.mxu0
        %v1808 = vadd.f32 %v736, %v1807
        %1809 = vmatmul.bf16.gmra.mxu0 %v782
        %v1810 = vpop.f32.mrf.mxu0
        %v1811 = vadd.f32 %v736, %v1810
        %v1812 = vpop.f32.mrf.mxu0
        %v1813 = vadd.f32 %v736, %v1812
        %1814 = vdwg.mxu0
        %1815 = vmatpush.bf16.msra.mxu0 %v1327
        %1816 = vmatpush.bf16.msra.mxu0 %v1324
        %1817 = vmatpush.bf16.msra.mxu0 %v1321
        %1818 = vmatpush.bf16.msra.mxu0 %v1318
        %1819 = vmatpush.bf16.msra.mxu0 %v1315
        %1820 = vmatpush.bf16.msra.mxu0 %v1312
        %1821 = vmatpush.bf16.msra.mxu0 %v1309
        %1822 = vmatpush.bf16.msra.mxu0 %v1306
        %1823 = vmatmul.bf16.gmra.mxu0 %v777
        %v1824 = vpop.f32.mrf.mxu0
        %v1825 = vadd.f32 %v1806, %v1824
        %v1826 = vpop.f32.mrf.mxu0
        %v1827 = vadd.f32 %v1808, %v1826
        %1828 = vmatmul.bf16.gmra.mxu0 %v783
        %v1829 = vpop.f32.mrf.mxu0
        %v1830 = vadd.f32 %v1811, %v1829
        %v1831 = vpop.f32.mrf.mxu0
        %v1832 = vadd.f32 %v1813, %v1831
        %1833 = vdwg.mxu0
        %1834 = vmatpush.bf16.msra.mxu0 %v1351
        %1835 = vmatpush.bf16.msra.mxu0 %v1348
        %1836 = vmatpush.bf16.msra.mxu0 %v1345
        %1837 = vmatpush.bf16.msra.mxu0 %v1342
        %1838 = vmatpush.bf16.msra.mxu0 %v1339
        %1839 = vmatpush.bf16.msra.mxu0 %v1336
        %1840 = vmatpush.bf16.msra.mxu0 %v1333
        %1841 = vmatpush.bf16.msra.mxu0 %v1330
        %1842 = vmatmul.bf16.gmra.mxu0 %v778
        %v1843 = vpop.f32.mrf.mxu0
        %v1844 = vadd.f32 %v1825, %v1843
        %v1845 = vpop.f32.mrf.mxu0
        %v1846 = vadd.f32 %v1827, %v1845
        %1847 = vmatmul.bf16.gmra.mxu0 %v784
        %v1848 = vpop.f32.mrf.mxu0
        %v1849 = vadd.f32 %v1830, %v1848
        %v1850 = vpop.f32.mrf.mxu0
        %v1851 = vadd.f32 %v1832, %v1850
        %1852 = vdwg.mxu0
        %1853 = vmatpush.bf16.msra.mxu0 %v1375
        %1854 = vmatpush.bf16.msra.mxu0 %v1372
        %1855 = vmatpush.bf16.msra.mxu0 %v1369
        %1856 = vmatpush.bf16.msra.mxu0 %v1366
        %1857 = vmatpush.bf16.msra.mxu0 %v1363
        %1858 = vmatpush.bf16.msra.mxu0 %v1360
        %1859 = vmatpush.bf16.msra.mxu0 %v1357
        %1860 = vmatpush.bf16.msra.mxu0 %v1354
        %1861 = vmatmul.bf16.gmra.mxu0 %v779
        %v1862 = vpop.f32.mrf.mxu0
        %v1863 = vadd.f32 %v1844, %v1862
        %v1864 = vpop.f32.mrf.mxu0
        %v1865 = vadd.f32 %v1846, %v1864
        %1866 = vmatmul.bf16.gmra.mxu0 %v785
        %v1867 = vpop.f32.mrf.mxu0
        %v1868 = vadd.f32 %v1849, %v1867
        %v1869 = vpop.f32.mrf.mxu0
        %v1870 = vadd.f32 %v1851, %v1869
        %1871 = vdwg.mxu0
        %1872 = vmatpush.bf16.msra.mxu0 %v1399
        %1873 = vmatpush.bf16.msra.mxu0 %v1396
        %1874 = vmatpush.bf16.msra.mxu0 %v1393
        %1875 = vmatpush.bf16.msra.mxu0 %v1390
        %1876 = vmatpush.bf16.msra.mxu0 %v1387
        %1877 = vmatpush.bf16.msra.mxu0 %v1384
        %1878 = vmatpush.bf16.msra.mxu0 %v1381
        %1879 = vmatpush.bf16.msra.mxu0 %v1378
        %1880 = vmatmul.bf16.gmra.mxu0 %v780
        %v1881 = vpop.f32.mrf.mxu0
        %v1882 = vadd.f32 %v1863, %v1881
        %v1883 = vpop.f32.mrf.mxu0
        %v1884 = vadd.f32 %v1865, %v1883
        %1885 = vmatmul.bf16.gmra.mxu0 %v786
        %v1886 = vpop.f32.mrf.mxu0
        %v1887 = vadd.f32 %v1868, %v1886
        %v1888 = vpop.f32.mrf.mxu0
        %v1889 = vadd.f32 %v1870, %v1888
        %1890 = vdwg.mxu0
        %1891 = vmatpush.bf16.msra.mxu0 %v1423
        %1892 = vmatpush.bf16.msra.mxu0 %v1420
        %1893 = vmatpush.bf16.msra.mxu0 %v1417
        %1894 = vmatpush.bf16.msra.mxu0 %v1414
        %1895 = vmatpush.bf16.msra.mxu0 %v1411
        %1896 = vmatpush.bf16.msra.mxu0 %v1408
        %1897 = vmatpush.bf16.msra.mxu0 %v1405
        %1898 = vmatpush.bf16.msra.mxu0 %v1402
        %1899 = vmatmul.bf16.gmra.mxu0 %v781
        %v1900 = vpop.f32.mrf.mxu0
        %v1901 = vadd.f32 %v1882, %v1900
        %v1902 = vpop.f32.mrf.mxu0
        %v1903 = vadd.f32 %v1884, %v1902
        %1904 = vmatmul.bf16.gmra.mxu0 %v787
        %v1905 = vpop.f32.mrf.mxu0
        %v1906 = vadd.f32 %v1887, %v1905
        %v1907 = vpop.f32.mrf.mxu0
        %v1908 = vadd.f32 %v1889, %v1907
        %1909 = vdwg.mxu0
        %v1910 = vpack.c.bf16 %v1787, %v1673
        %v1911 = vpack.c.bf16 %v1901, %v1901
        %v1912 = vpack.c.bf16 %v1789, %v1675
        %v1913 = vpack.c.bf16 %v1903, %v1903
        %v1914 = vpack.c.bf16 %v1792, %v1678
        %v1915 = vpack.c.bf16 %v1906, %v1906
        %v1916 = vpack.c.bf16 %v1794, %v1680
        %v1917 = vpack.c.bf16 %v1908, %v1908
        %v1918 = vld [vmem:[%s436] sm:$0xff]
        %v1919 = vld [vmem:[%s436 + $0x8] sm:$0xff]
        %v1920 = vld [vmem:[%s436 + $0x10] sm:$0xff]
        %v1921 = vld [vmem:[%s436 + $0x18] sm:$0xff]
        %v1922 = vld [vmem:[%s436 + $0x20] sm:$0xff]
        %v1923 = vld [vmem:[%s436 + $0x28] sm:$0xff]
        %v1924 = vld [vmem:[%s436 + $0x30] sm:$0xff]
        %v1925 = vld [vmem:[%s436 + $0x38] sm:$0xff]
        %v1926 = vld [vmem:[%s436 + $0x40] sm:$0xff]
        %v1927 = vld [vmem:[%s436 + $0x48] sm:$0xff]
        %v1928 = vld [vmem:[%s436 + $0x50] sm:$0xff]
        %v1929 = vld [vmem:[%s436 + $0x58] sm:$0xff]
        %v1930 = vld [vmem:[%s436 + $0x60] sm:$0xff]
        %v1931 = vld [vmem:[%s436 + $0x68] sm:$0xff]
        %v1932 = vld [vmem:[%s436 + $0x70] sm:$0xff]
        %v1933 = vld [vmem:[%s436 + $0x78] sm:$0xff]
        %v1934 = vld [vmem:[%s436 + $0x80] sm:$0xff]
        %v1935 = vld [vmem:[%s436 + $0x88] sm:$0xff]
        %v1936 = vld [vmem:[%s436 + $0x90] sm:$0xff]
        %v1937 = vld [vmem:[%s436 + $0x98] sm:$0xff]
        %v1938 = vld [vmem:[%s436 + $0xa0] sm:$0xff]
        %v1939 = vld [vmem:[%s436 + $0xa8] sm:$0xff]
        %v1940 = vld [vmem:[%s436 + $0xb0] sm:$0xff]
        %v1941 = vld [vmem:[%s436 + $0xb8] sm:$0xff]
        %v1942 = vld [vmem:[%s436 + $0xc0] sm:$0xff]
        %v1943 = vld [vmem:[%s436 + $0xc8] sm:$0xff]
        %v1944 = vld [vmem:[%s436 + $0xd0] sm:$0xff]
        %v1945 = vld [vmem:[%s436 + $0xd8] sm:$0xff]
        %v1946 = vld [vmem:[%s436 + $0xe0] sm:$0xff]
        %v1947 = vld [vmem:[%s436 + $0xe8] sm:$0xff]
        %v1948 = vld [vmem:[%s436 + $0xf0] sm:$0xff]
        %v1949 = vld [vmem:[%s436 + $0xf8] sm:$0xff]
        %v1950 = vld [vmem:[%s436 + $0x100] sm:$0xff]
        %v1951 = vld [vmem:[%s436 + $0x108] sm:$0xff]
        %v1952 = vld [vmem:[%s436 + $0x110] sm:$0xff]
        %v1953 = vld [vmem:[%s436 + $0x118] sm:$0xff]
        %v1954 = vld [vmem:[%s436 + $0x120] sm:$0xff]
        %v1955 = vld [vmem:[%s436 + $0x128] sm:$0xff]
        %v1956 = vld [vmem:[%s436 + $0x130] sm:$0xff]
        %v1957 = vld [vmem:[%s436 + $0x138] sm:$0xff]
        %v1958 = vld [vmem:[%s436 + $0x140] sm:$0xff]
        %v1959 = vld [vmem:[%s436 + $0x148] sm:$0xff]
        %v1960 = vld [vmem:[%s436 + $0x150] sm:$0xff]
        %v1961 = vld [vmem:[%s436 + $0x158] sm:$0xff]
        %v1962 = vld [vmem:[%s436 + $0x160] sm:$0xff]
        %v1963 = vld [vmem:[%s436 + $0x168] sm:$0xff]
        %v1964 = vld [vmem:[%s436 + $0x170] sm:$0xff]
        %v1965 = vld [vmem:[%s436 + $0x178] sm:$0xff]
        %v1966 = vld [vmem:[%s436 + $0x180] sm:$0xff]
        %v1967 = vld [vmem:[%s436 + $0x188] sm:$0xff]
        %v1968 = vld [vmem:[%s436 + $0x190] sm:$0xff]
        %v1969 = vld [vmem:[%s436 + $0x198] sm:$0xff]
        %v1970 = vld [vmem:[%s436 + $0x1a0] sm:$0xff]
        %v1971 = vld [vmem:[%s436 + $0x1a8] sm:$0xff]
        %v1972 = vld [vmem:[%s436 + $0x1b0] sm:$0xff]
        %v1973 = vld [vmem:[%s436 + $0x1b8] sm:$0xff]
        %v1974 = vld [vmem:[%s436 + $0x1c0] sm:$0xff]
        %v1975 = vld [vmem:[%s436 + $0x1c8] sm:$0xff]
        %v1976 = vld [vmem:[%s436 + $0x1d0] sm:$0xff]
        %v1977 = vld [vmem:[%s436 + $0x1d8] sm:$0xff]
        %v1978 = vld [vmem:[%s436 + $0x1e0] sm:$0xff]
        %v1979 = vld [vmem:[%s436 + $0x1e8] sm:$0xff]
        %v1980 = vld [vmem:[%s436 + $0x1f0] sm:$0xff]
        %v1981 = vld [vmem:[%s436 + $0x1f8] sm:$0xff]
        %v1982 = vld [vmem:[%s436 + $0x200] sm:$0xff]
        %v1983 = vld [vmem:[%s436 + $0x208] sm:$0xff]
        %v1984 = vld [vmem:[%s436 + $0x210] sm:$0xff]
        %v1985 = vld [vmem:[%s436 + $0x218] sm:$0xff]
        %v1986 = vld [vmem:[%s436 + $0x220] sm:$0xff]
        %v1987 = vld [vmem:[%s436 + $0x228] sm:$0xff]
        %v1988 = vld [vmem:[%s436 + $0x230] sm:$0xff]
        %v1989 = vld [vmem:[%s436 + $0x238] sm:$0xff]
        %v1990 = vld [vmem:[%s436 + $0x240] sm:$0xff]
        %v1991 = vld [vmem:[%s436 + $0x248] sm:$0xff]
        %v1992 = vld [vmem:[%s436 + $0x250] sm:$0xff]
        %v1993 = vld [vmem:[%s436 + $0x258] sm:$0xff]
        %v1994 = vld [vmem:[%s436 + $0x260] sm:$0xff]
        %v1995 = vld [vmem:[%s436 + $0x268] sm:$0xff]
        %v1996 = vld [vmem:[%s436 + $0x270] sm:$0xff]
        %v1997 = vld [vmem:[%s436 + $0x278] sm:$0xff]
        %v1998 = vld [vmem:[%s436 + $0x280] sm:$0xff]
        %v1999 = vld [vmem:[%s436 + $0x288] sm:$0xff]
        %v2000 = vld [vmem:[%s436 + $0x290] sm:$0xff]
        %v2001 = vld [vmem:[%s436 + $0x298] sm:$0xff]
        %v2002 = vld [vmem:[%s436 + $0x2a0] sm:$0xff]
        %v2003 = vld [vmem:[%s436 + $0x2a8] sm:$0xff]
        %v2004 = vld [vmem:[%s436 + $0x2b0] sm:$0xff]
        %v2005 = vld [vmem:[%s436 + $0x2b8] sm:$0xff]
        %v2006 = vld [vmem:[%s436 + $0x2c0] sm:$0xff]
        %v2007 = vld [vmem:[%s436 + $0x2c8] sm:$0xff]
        %v2008 = vld [vmem:[%s436 + $0x2d0] sm:$0xff]
        %v2009 = vld [vmem:[%s436 + $0x2d8] sm:$0xff]
        %v2010 = vld [vmem:[%s436 + $0x2e0] sm:$0xff]
        %v2011 = vld [vmem:[%s436 + $0x2e8] sm:$0xff]
        %v2012 = vld [vmem:[%s436 + $0x2f0] sm:$0xff]
        %v2013 = vld [vmem:[%s436 + $0x2f8] sm:$0xff]
        %v2014 = vld [vmem:[%s436 + $0x300] sm:$0xff]
        %v2015 = vld [vmem:[%s436 + $0x308] sm:$0xff]
        %v2016 = vld [vmem:[%s436 + $0x310] sm:$0xff]
        %v2017 = vld [vmem:[%s436 + $0x318] sm:$0xff]
        %v2018 = vld [vmem:[%s436 + $0x320] sm:$0xff]
        %v2019 = vld [vmem:[%s436 + $0x328] sm:$0xff]
        %v2020 = vld [vmem:[%s436 + $0x330] sm:$0xff]
        %v2021 = vld [vmem:[%s436 + $0x338] sm:$0xff]
        %v2022 = vld [vmem:[%s436 + $0x340] sm:$0xff]
        %v2023 = vld [vmem:[%s436 + $0x348] sm:$0xff]
        %v2024 = vld [vmem:[%s436 + $0x350] sm:$0xff]
        %v2025 = vld [vmem:[%s436 + $0x358] sm:$0xff]
        %v2026 = vld [vmem:[%s436 + $0x360] sm:$0xff]
        %v2027 = vld [vmem:[%s436 + $0x368] sm:$0xff]
        %v2028 = vld [vmem:[%s436 + $0x370] sm:$0xff]
        %v2029 = vld [vmem:[%s436 + $0x378] sm:$0xff]
        %v2030 = vld [vmem:[%s436 + $0x380] sm:$0xff]
        %v2031 = vld [vmem:[%s436 + $0x388] sm:$0xff]
        %v2032 = vld [vmem:[%s436 + $0x390] sm:$0xff]
        %v2033 = vld [vmem:[%s436 + $0x398] sm:$0xff]
        %v2034 = vld [vmem:[%s436 + $0x3a0] sm:$0xff]
        %v2035 = vld [vmem:[%s436 + $0x3a8] sm:$0xff]
        %v2036 = vld [vmem:[%s436 + $0x3b0] sm:$0xff]
        %v2037 = vld [vmem:[%s436 + $0x3b8] sm:$0xff]
        %v2038 = vld [vmem:[%s436 + $0x3c0] sm:$0xff]
        %v2039 = vld [vmem:[%s436 + $0x3c8] sm:$0xff]
        %v2040 = vld [vmem:[%s436 + $0x3d0] sm:$0xff]
        %v2041 = vld [vmem:[%s436 + $0x3d8] sm:$0xff]
        %v2042 = vld [vmem:[%s436 + $0x3e0] sm:$0xff]
        %v2043 = vld [vmem:[%s436 + $0x3e8] sm:$0xff]
        %v2044 = vld [vmem:[%s436 + $0x3f0] sm:$0xff]
        %v2045 = vld [vmem:[%s436 + $0x3f8] sm:$0xff]
        %v2046 = vld [vmem:[%s436 + $0x400] sm:$0xff]
        %v2047 = vld [vmem:[%s436 + $0x408] sm:$0xff]
        %v2048 = vld [vmem:[%s436 + $0x410] sm:$0xff]
        %v2049 = vld [vmem:[%s436 + $0x418] sm:$0xff]
        %v2050 = vld [vmem:[%s436 + $0x420] sm:$0xff]
        %v2051 = vld [vmem:[%s436 + $0x428] sm:$0xff]
        %v2052 = vld [vmem:[%s436 + $0x430] sm:$0xff]
        %v2053 = vld [vmem:[%s436 + $0x438] sm:$0xff]
        %v2054 = vld [vmem:[%s436 + $0x440] sm:$0xff]
        %v2055 = vld [vmem:[%s436 + $0x448] sm:$0xff]
        %v2056 = vld [vmem:[%s436 + $0x450] sm:$0xff]
        %v2057 = vld [vmem:[%s436 + $0x458] sm:$0xff]
        %v2058 = vld [vmem:[%s436 + $0x460] sm:$0xff]
        %v2059 = vld [vmem:[%s436 + $0x468] sm:$0xff]
        %v2060 = vld [vmem:[%s436 + $0x470] sm:$0xff]
        %v2061 = vld [vmem:[%s436 + $0x478] sm:$0xff]
        %v2062 = vld [vmem:[%s436 + $0x480] sm:$0xff]
        %v2063 = vld [vmem:[%s436 + $0x488] sm:$0xff]
        %v2064 = vld [vmem:[%s436 + $0x490] sm:$0xff]
        %v2065 = vld [vmem:[%s436 + $0x498] sm:$0xff]
        %v2066 = vld [vmem:[%s436 + $0x4a0] sm:$0xff]
        %v2067 = vld [vmem:[%s436 + $0x4a8] sm:$0xff]
        %v2068 = vld [vmem:[%s436 + $0x4b0] sm:$0xff]
        %v2069 = vld [vmem:[%s436 + $0x4b8] sm:$0xff]
        %v2070 = vld [vmem:[%s436 + $0x4c0] sm:$0xff]
        %v2071 = vld [vmem:[%s436 + $0x4c8] sm:$0xff]
        %v2072 = vld [vmem:[%s436 + $0x4d0] sm:$0xff]
        %v2073 = vld [vmem:[%s436 + $0x4d8] sm:$0xff]
        %v2074 = vld [vmem:[%s436 + $0x4e0] sm:$0xff]
        %v2075 = vld [vmem:[%s436 + $0x4e8] sm:$0xff]
        %v2076 = vld [vmem:[%s436 + $0x4f0] sm:$0xff]
        %v2077 = vld [vmem:[%s436 + $0x4f8] sm:$0xff]
        %v2078 = vld [vmem:[%s436 + $0x500] sm:$0xff]
        %v2079 = vld [vmem:[%s436 + $0x508] sm:$0xff]
        %v2080 = vld [vmem:[%s436 + $0x510] sm:$0xff]
        %v2081 = vld [vmem:[%s436 + $0x518] sm:$0xff]
        %v2082 = vld [vmem:[%s436 + $0x520] sm:$0xff]
        %v2083 = vld [vmem:[%s436 + $0x528] sm:$0xff]
        %v2084 = vld [vmem:[%s436 + $0x530] sm:$0xff]
        %v2085 = vld [vmem:[%s436 + $0x538] sm:$0xff]
        %v2086 = vld [vmem:[%s436 + $0x540] sm:$0xff]
        %v2087 = vld [vmem:[%s436 + $0x548] sm:$0xff]
        %v2088 = vld [vmem:[%s436 + $0x550] sm:$0xff]
        %v2089 = vld [vmem:[%s436 + $0x558] sm:$0xff]
        %v2090 = vld [vmem:[%s436 + $0x560] sm:$0xff]
        %v2091 = vld [vmem:[%s436 + $0x568] sm:$0xff]
        %v2092 = vld [vmem:[%s436 + $0x570] sm:$0xff]
        %v2093 = vld [vmem:[%s436 + $0x578] sm:$0xff]
        %v2094 = vld [vmem:[%s436 + $0x580] sm:$0xff]
        %v2095 = vld [vmem:[%s436 + $0x588] sm:$0xff]
        %v2096 = vld [vmem:[%s436 + $0x590] sm:$0xff]
        %v2097 = vld [vmem:[%s436 + $0x598] sm:$0xff]
        %v2098 = vld [vmem:[%s436 + $0x5a0] sm:$0xff]
        %v2099 = vld [vmem:[%s436 + $0x5a8] sm:$0xff]
        %v2100 = vld [vmem:[%s436 + $0x5b0] sm:$0xff]
        %v2101 = vld [vmem:[%s436 + $0x5b8] sm:$0xff]
        %v2102 = vld [vmem:[%s436 + $0x5c0] sm:$0xff]
        %v2103 = vld [vmem:[%s436 + $0x5c8] sm:$0xff]
        %v2104 = vld [vmem:[%s436 + $0x5d0] sm:$0xff]
        %v2105 = vld [vmem:[%s436 + $0x5d8] sm:$0xff]
        %v2106 = vld [vmem:[%s436 + $0x5e0] sm:$0xff]
        %v2107 = vld [vmem:[%s436 + $0x5e8] sm:$0xff]
        %v2108 = vld [vmem:[%s436 + $0x5f0] sm:$0xff]
        %v2109 = vld [vmem:[%s436 + $0x5f8] sm:$0xff]
        %v2110 = vld [vmem:[%s436 + $0x600] sm:$0xff]
        %v2111 = vld [vmem:[%s436 + $0x608] sm:$0xff]
        %v2112 = vld [vmem:[%s436 + $0x610] sm:$0xff]
        %v2113 = vld [vmem:[%s436 + $0x618] sm:$0xff]
        %v2114 = vld [vmem:[%s436 + $0x620] sm:$0xff]
        %v2115 = vld [vmem:[%s436 + $0x628] sm:$0xff]
        %v2116 = vld [vmem:[%s436 + $0x630] sm:$0xff]
        %v2117 = vld [vmem:[%s436 + $0x638] sm:$0xff]
        %v2118 = vld [vmem:[%s436 + $0x640] sm:$0xff]
        %v2119 = vld [vmem:[%s436 + $0x648] sm:$0xff]
        %v2120 = vld [vmem:[%s436 + $0x650] sm:$0xff]
        %v2121 = vld [vmem:[%s436 + $0x658] sm:$0xff]
        %v2122 = vld [vmem:[%s436 + $0x660] sm:$0xff]
        %v2123 = vld [vmem:[%s436 + $0x668] sm:$0xff]
        %v2124 = vld [vmem:[%s436 + $0x670] sm:$0xff]
        %v2125 = vld [vmem:[%s436 + $0x678] sm:$0xff]
        %v2126 = vld [vmem:[%s436 + $0x680] sm:$0xff]
        %v2127 = vld [vmem:[%s436 + $0x688] sm:$0xff]
        %v2128 = vld [vmem:[%s436 + $0x690] sm:$0xff]
        %v2129 = vld [vmem:[%s436 + $0x698] sm:$0xff]
        %v2130 = vld [vmem:[%s436 + $0x6a0] sm:$0xff]
        %v2131 = vld [vmem:[%s436 + $0x6a8] sm:$0xff]
        %v2132 = vld [vmem:[%s436 + $0x6b0] sm:$0xff]
        %v2133 = vld [vmem:[%s436 + $0x6b8] sm:$0xff]
        %v2134 = vld [vmem:[%s436 + $0x6c0] sm:$0xff]
        %v2135 = vld [vmem:[%s436 + $0x6c8] sm:$0xff]
        %v2136 = vld [vmem:[%s436 + $0x6d0] sm:$0xff]
        %v2137 = vld [vmem:[%s436 + $0x6d8] sm:$0xff]
        %v2138 = vld [vmem:[%s436 + $0x6e0] sm:$0xff]
        %v2139 = vld [vmem:[%s436 + $0x6e8] sm:$0xff]
        %v2140 = vld [vmem:[%s436 + $0x6f0] sm:$0xff]
        %v2141 = vld [vmem:[%s436 + $0x6f8] sm:$0xff]
        %v2142 = vld [vmem:[%s436 + $0x700] sm:$0xff]
        %v2143 = vld [vmem:[%s436 + $0x708] sm:$0xff]
        %v2144 = vld [vmem:[%s436 + $0x710] sm:$0xff]
        %v2145 = vld [vmem:[%s436 + $0x718] sm:$0xff]
        %v2146 = vld [vmem:[%s436 + $0x720] sm:$0xff]
        %v2147 = vld [vmem:[%s436 + $0x728] sm:$0xff]
        %v2148 = vld [vmem:[%s436 + $0x730] sm:$0xff]
        %v2149 = vld [vmem:[%s436 + $0x738] sm:$0xff]
        %v2150 = vld [vmem:[%s436 + $0x740] sm:$0xff]
        %v2151 = vld [vmem:[%s436 + $0x748] sm:$0xff]
        %v2152 = vld [vmem:[%s436 + $0x750] sm:$0xff]
        %v2153 = vld [vmem:[%s436 + $0x758] sm:$0xff]
        %v2154 = vld [vmem:[%s436 + $0x760] sm:$0xff]
        %v2155 = vld [vmem:[%s436 + $0x768] sm:$0xff]
        %v2156 = vld [vmem:[%s436 + $0x770] sm:$0xff]
        %v2157 = vld [vmem:[%s436 + $0x778] sm:$0xff]
        %v2158 = vld [vmem:[%s436 + $0x780] sm:$0xff]
        %v2159 = vld [vmem:[%s436 + $0x788] sm:$0xff]
        %v2160 = vld [vmem:[%s436 + $0x790] sm:$0xff]
        %v2161 = vld [vmem:[%s436 + $0x798] sm:$0xff]
        %v2162 = vld [vmem:[%s436 + $0x7a0] sm:$0xff]
        %v2163 = vld [vmem:[%s436 + $0x7a8] sm:$0xff]
        %v2164 = vld [vmem:[%s436 + $0x7b0] sm:$0xff]
        %v2165 = vld [vmem:[%s436 + $0x7b8] sm:$0xff]
        %v2166 = vld [vmem:[%s436 + $0x7c0] sm:$0xff]
        %v2167 = vld [vmem:[%s436 + $0x7c8] sm:$0xff]
        %v2168 = vld [vmem:[%s436 + $0x7d0] sm:$0xff]
        %v2169 = vld [vmem:[%s436 + $0x7d8] sm:$0xff]
        %v2170 = vld [vmem:[%s436 + $0x7e0] sm:$0xff]
        %v2171 = vld [vmem:[%s436 + $0x7e8] sm:$0xff]
        %v2172 = vld [vmem:[%s436 + $0x7f0] sm:$0xff]
        %v2173 = vld [vmem:[%s436 + $0x7f8] sm:$0xff]
        %v2174 = vld [vmem:[%s436 + $0x800] sm:$0xff]
        %v2175 = vld [vmem:[%s436 + $0x808] sm:$0xff]
        %v2176 = vld [vmem:[%s436 + $0x810] sm:$0xff]
        %v2177 = vld [vmem:[%s436 + $0x818] sm:$0xff]
        %v2178 = vld [vmem:[%s436 + $0x820] sm:$0xff]
        %v2179 = vld [vmem:[%s436 + $0x828] sm:$0xff]
        %v2180 = vld [vmem:[%s436 + $0x830] sm:$0xff]
        %v2181 = vld [vmem:[%s436 + $0x838] sm:$0xff]
        %v2182 = vld [vmem:[%s436 + $0x840] sm:$0xff]
        %v2183 = vld [vmem:[%s436 + $0x848] sm:$0xff]
        %v2184 = vld [vmem:[%s436 + $0x850] sm:$0xff]
        %v2185 = vld [vmem:[%s436 + $0x858] sm:$0xff]
        %v2186 = vld [vmem:[%s436 + $0x860] sm:$0xff]
        %v2187 = vld [vmem:[%s436 + $0x868] sm:$0xff]
        %v2188 = vld [vmem:[%s436 + $0x870] sm:$0xff]
        %v2189 = vld [vmem:[%s436 + $0x878] sm:$0xff]
        %v2190 = vld [vmem:[%s436 + $0x880] sm:$0xff]
        %v2191 = vld [vmem:[%s436 + $0x888] sm:$0xff]
        %v2192 = vld [vmem:[%s436 + $0x890] sm:$0xff]
        %v2193 = vld [vmem:[%s436 + $0x898] sm:$0xff]
        %v2194 = vld [vmem:[%s436 + $0x8a0] sm:$0xff]
        %v2195 = vld [vmem:[%s436 + $0x8a8] sm:$0xff]
        %v2196 = vld [vmem:[%s436 + $0x8b0] sm:$0xff]
        %v2197 = vld [vmem:[%s436 + $0x8b8] sm:$0xff]
        %v2198 = vld [vmem:[%s436 + $0x8c0] sm:$0xff]
        %v2199 = vld [vmem:[%s436 + $0x8c8] sm:$0xff]
        %v2200 = vld [vmem:[%s436 + $0x8d0] sm:$0xff]
        %v2201 = vld [vmem:[%s436 + $0x8d8] sm:$0xff]
        %v2202 = vld [vmem:[%s436 + $0x8e0] sm:$0xff]
        %v2203 = vld [vmem:[%s436 + $0x8e8] sm:$0xff]
        %v2204 = vld [vmem:[%s436 + $0x8f0] sm:$0xff]
        %v2205 = vld [vmem:[%s436 + $0x8f8] sm:$0xff]
        %v2206 = vld [vmem:[%s446] sm:$0x3f]
        %v2208 = vperm.slane %v2206, 0
        %v2209 = vperm.slane %v2206, 1
        %v2210 = vperm.slane %v2206, 2
        %v2211 = vperm.slane %v2206, 3
        %v2212 = vperm.slane %v2206, 4
        %v2213 = vperm.slane %v2206, 5
        %v2232 = vunpack.c.l.b16 %v528
        %v2233 = vunpack.c.h.b16 %v528
        %v2234 = vunpack.c.l.b16 %v529
        %v2235 = vunpack.c.h.b16 %v529
        %v2236 = vunpack.c.l.b16 %v530
        %v2237 = vunpack.c.h.b16 %v530
        %v2238 = vunpack.c.l.b16 %v531
        %v2239 = vunpack.c.h.b16 %v531
        %v2240 = vunpack.c.l.b16 %v532
        %v2241 = vunpack.c.h.b16 %v532
        %v2242 = vunpack.c.l.b16 %v533
        %v2243 = vunpack.c.h.b16 %v533
        %v2244 = vunpack.c.l.b16 %v534
        %v2245 = vunpack.c.h.b16 %v534
        %v2246 = vunpack.c.l.b16 %v535
        %v2247 = vunpack.c.h.b16 %v535
        %v2248 = vunpack.c.l.b16 %v536
        %v2249 = vunpack.c.h.b16 %v536
        %v2250 = vunpack.c.l.b16 %v537
        %v2251 = vunpack.c.h.b16 %v537
        %v2252 = vunpack.c.l.b16 %v538
        %v2253 = vunpack.c.h.b16 %v538
        %v2254 = vunpack.c.l.b16 %v539
        %v2255 = vunpack.c.h.b16 %v539
        %v2256 = vpack.c.b16 %v2238, %v2232
        %v2257 = vpack.c.b16 %v2239, %v2233
        %v2258 = vpack.c.b16 %v2240, %v2234
        %v2259 = vpack.c.b16 %v2241, %v2235
        %v2260 = vpack.c.b16 %v2242, %v2236
        %v2261 = vpack.c.b16 %v2243, %v2237
        %v2262 = vpack.c.b16 %v2250, %v2244
        %v2263 = vpack.c.b16 %v2251, %v2245
        %v2264 = vpack.c.b16 %v2252, %v2246
        %v2265 = vpack.c.b16 %v2253, %v2247
        %v2266 = vpack.c.b16 %v2254, %v2248
        %v2267 = vpack.c.b16 %v2255, %v2249
        %v2568 = vunpack.c.l.b16 %v1918
        %v2569 = vunpack.c.h.b16 %v1918
        %v2570 = vunpack.c.l.b16 %v1919
        %v2571 = vunpack.c.h.b16 %v1919
        %v2572 = vunpack.c.l.b16 %v1920
        %v2573 = vunpack.c.h.b16 %v1920
        %v2574 = vunpack.c.l.b16 %v1921
        %v2575 = vunpack.c.h.b16 %v1921
        %v2576 = vunpack.c.l.b16 %v1922
        %v2577 = vunpack.c.h.b16 %v1922
        %v2578 = vunpack.c.l.b16 %v1923
        %v2579 = vunpack.c.h.b16 %v1923
        %v2580 = vunpack.c.l.b16 %v1924
        %v2581 = vunpack.c.h.b16 %v1924
        %v2582 = vunpack.c.l.b16 %v1925
        %v2583 = vunpack.c.h.b16 %v1925
        %v2584 = vunpack.c.l.b16 %v1926
        %v2585 = vunpack.c.h.b16 %v1926
        %v2586 = vunpack.c.l.b16 %v1927
        %v2587 = vunpack.c.h.b16 %v1927
        %v2588 = vunpack.c.l.b16 %v1928
        %v2589 = vunpack.c.h.b16 %v1928
        %v2590 = vunpack.c.l.b16 %v1929
        %v2591 = vunpack.c.h.b16 %v1929
        %v2592 = vunpack.c.l.b16 %v1930
        %v2593 = vunpack.c.h.b16 %v1930
        %v2594 = vunpack.c.l.b16 %v1931
        %v2595 = vunpack.c.h.b16 %v1931
        %v2596 = vunpack.c.l.b16 %v1932
        %v2597 = vunpack.c.h.b16 %v1932
        %v2598 = vunpack.c.l.b16 %v1933
        %v2599 = vunpack.c.h.b16 %v1933
        %v2600 = vunpack.c.l.b16 %v1934
        %v2601 = vunpack.c.h.b16 %v1934
        %v2602 = vunpack.c.l.b16 %v1935
        %v2603 = vunpack.c.h.b16 %v1935
        %v2604 = vunpack.c.l.b16 %v1936
        %v2605 = vunpack.c.h.b16 %v1936
        %v2606 = vunpack.c.l.b16 %v1937
        %v2607 = vunpack.c.h.b16 %v1937
        %v2608 = vunpack.c.l.b16 %v1938
        %v2609 = vunpack.c.h.b16 %v1938
        %v2610 = vunpack.c.l.b16 %v1939
        %v2611 = vunpack.c.h.b16 %v1939
        %v2612 = vunpack.c.l.b16 %v1940
        %v2613 = vunpack.c.h.b16 %v1940
        %v2614 = vunpack.c.l.b16 %v1941
        %v2615 = vunpack.c.h.b16 %v1941
        %v2616 = vunpack.c.l.b16 %v1942
        %v2617 = vunpack.c.h.b16 %v1942
        %v2618 = vunpack.c.l.b16 %v1943
        %v2619 = vunpack.c.h.b16 %v1943
        %v2620 = vunpack.c.l.b16 %v1944
        %v2621 = vunpack.c.h.b16 %v1944
        %v2622 = vunpack.c.l.b16 %v1945
        %v2623 = vunpack.c.h.b16 %v1945
        %v2624 = vunpack.c.l.b16 %v1946
        %v2625 = vunpack.c.h.b16 %v1946
        %v2626 = vunpack.c.l.b16 %v1947
        %v2627 = vunpack.c.h.b16 %v1947
        %v2628 = vunpack.c.l.b16 %v1948
        %v2629 = vunpack.c.h.b16 %v1948
        %v2630 = vunpack.c.l.b16 %v1949
        %v2631 = vunpack.c.h.b16 %v1949
        %v2632 = vunpack.c.l.b16 %v1950
        %v2633 = vunpack.c.h.b16 %v1950
        %v2634 = vunpack.c.l.b16 %v1951
        %v2635 = vunpack.c.h.b16 %v1951
        %v2636 = vunpack.c.l.b16 %v1952
        %v2637 = vunpack.c.h.b16 %v1952
        %v2638 = vunpack.c.l.b16 %v1953
        %v2639 = vunpack.c.h.b16 %v1953
        %v2640 = vunpack.c.l.b16 %v1954
        %v2641 = vunpack.c.h.b16 %v1954
        %v2642 = vunpack.c.l.b16 %v1955
        %v2643 = vunpack.c.h.b16 %v1955
        %v2644 = vunpack.c.l.b16 %v1956
        %v2645 = vunpack.c.h.b16 %v1956
        %v2646 = vunpack.c.l.b16 %v1957
        %v2647 = vunpack.c.h.b16 %v1957
        %v2648 = vunpack.c.l.b16 %v1958
        %v2649 = vunpack.c.h.b16 %v1958
        %v2650 = vunpack.c.l.b16 %v1959
        %v2651 = vunpack.c.h.b16 %v1959
        %v2652 = vunpack.c.l.b16 %v1960
        %v2653 = vunpack.c.h.b16 %v1960
        %v2654 = vunpack.c.l.b16 %v1961
        %v2655 = vunpack.c.h.b16 %v1961
        %v2656 = vunpack.c.l.b16 %v1962
        %v2657 = vunpack.c.h.b16 %v1962
        %v2658 = vunpack.c.l.b16 %v1963
        %v2659 = vunpack.c.h.b16 %v1963
        %v2660 = vunpack.c.l.b16 %v1964
        %v2661 = vunpack.c.h.b16 %v1964
        %v2662 = vunpack.c.l.b16 %v1965
        %v2663 = vunpack.c.h.b16 %v1965
        %v2664 = vunpack.c.l.b16 %v1966
        %v2665 = vunpack.c.h.b16 %v1966
        %v2666 = vunpack.c.l.b16 %v1967
        %v2667 = vunpack.c.h.b16 %v1967
        %v2668 = vunpack.c.l.b16 %v1968
        %v2669 = vunpack.c.h.b16 %v1968
        %v2670 = vunpack.c.l.b16 %v1969
        %v2671 = vunpack.c.h.b16 %v1969
        %v2672 = vunpack.c.l.b16 %v1970
        %v2673 = vunpack.c.h.b16 %v1970
        %v2674 = vunpack.c.l.b16 %v1971
        %v2675 = vunpack.c.h.b16 %v1971
        %v2676 = vunpack.c.l.b16 %v1972
        %v2677 = vunpack.c.h.b16 %v1972
        %v2678 = vunpack.c.l.b16 %v1973
        %v2679 = vunpack.c.h.b16 %v1973
        %v2680 = vunpack.c.l.b16 %v1974
        %v2681 = vunpack.c.h.b16 %v1974
        %v2682 = vunpack.c.l.b16 %v1975
        %v2683 = vunpack.c.h.b16 %v1975
        %v2684 = vunpack.c.l.b16 %v1976
        %v2685 = vunpack.c.h.b16 %v1976
        %v2686 = vunpack.c.l.b16 %v1977
        %v2687 = vunpack.c.h.b16 %v1977
        %v2688 = vunpack.c.l.b16 %v1978
        %v2689 = vunpack.c.h.b16 %v1978
        %v2690 = vunpack.c.l.b16 %v1979
        %v2691 = vunpack.c.h.b16 %v1979
        %v2692 = vunpack.c.l.b16 %v1980
        %v2693 = vunpack.c.h.b16 %v1980
        %v2694 = vunpack.c.l.b16 %v1981
        %v2695 = vunpack.c.h.b16 %v1981
        %v2696 = vunpack.c.l.b16 %v1982
        %v2697 = vunpack.c.h.b16 %v1982
        %v2698 = vunpack.c.l.b16 %v1983
        %v2699 = vunpack.c.h.b16 %v1983
        %v2700 = vunpack.c.l.b16 %v1984
        %v2701 = vunpack.c.h.b16 %v1984
        %v2702 = vunpack.c.l.b16 %v1985
        %v2703 = vunpack.c.h.b16 %v1985
        %v2704 = vunpack.c.l.b16 %v1986
        %v2705 = vunpack.c.h.b16 %v1986
        %v2706 = vunpack.c.l.b16 %v1987
        %v2707 = vunpack.c.h.b16 %v1987
        %v2708 = vunpack.c.l.b16 %v1988
        %v2709 = vunpack.c.h.b16 %v1988
        %v2710 = vunpack.c.l.b16 %v1989
        %v2711 = vunpack.c.h.b16 %v1989
        %v2712 = vunpack.c.l.b16 %v1990
        %v2713 = vunpack.c.h.b16 %v1990
        %v2714 = vunpack.c.l.b16 %v1991
        %v2715 = vunpack.c.h.b16 %v1991
        %v2716 = vunpack.c.l.b16 %v1992
        %v2717 = vunpack.c.h.b16 %v1992
        %v2718 = vunpack.c.l.b16 %v1993
        %v2719 = vunpack.c.h.b16 %v1993
        %v2720 = vunpack.c.l.b16 %v1994
        %v2721 = vunpack.c.h.b16 %v1994
        %v2722 = vunpack.c.l.b16 %v1995
        %v2723 = vunpack.c.h.b16 %v1995
        %v2724 = vunpack.c.l.b16 %v1996
        %v2725 = vunpack.c.h.b16 %v1996
        %v2726 = vunpack.c.l.b16 %v1997
        %v2727 = vunpack.c.h.b16 %v1997
        %v2728 = vunpack.c.l.b16 %v1998
        %v2729 = vunpack.c.h.b16 %v1998
        %v2730 = vunpack.c.l.b16 %v1999
        %v2731 = vunpack.c.h.b16 %v1999
        %v2732 = vunpack.c.l.b16 %v2000
        %v2733 = vunpack.c.h.b16 %v2000
        %v2734 = vunpack.c.l.b16 %v2001
        %v2735 = vunpack.c.h.b16 %v2001
        %v2736 = vunpack.c.l.b16 %v2002
        %v2737 = vunpack.c.h.b16 %v2002
        %v2738 = vunpack.c.l.b16 %v2003
        %v2739 = vunpack.c.h.b16 %v2003
        %v2740 = vunpack.c.l.b16 %v2004
        %v2741 = vunpack.c.h.b16 %v2004
        %v2742 = vunpack.c.l.b16 %v2005
        %v2743 = vunpack.c.h.b16 %v2005
        %v2744 = vunpack.c.l.b16 %v2006
        %v2745 = vunpack.c.h.b16 %v2006
        %v2746 = vunpack.c.l.b16 %v2007
        %v2747 = vunpack.c.h.b16 %v2007
        %v2748 = vunpack.c.l.b16 %v2008
        %v2749 = vunpack.c.h.b16 %v2008
        %v2750 = vunpack.c.l.b16 %v2009
        %v2751 = vunpack.c.h.b16 %v2009
        %v2752 = vunpack.c.l.b16 %v2010
        %v2753 = vunpack.c.h.b16 %v2010
        %v2754 = vunpack.c.l.b16 %v2011
        %v2755 = vunpack.c.h.b16 %v2011
        %v2756 = vunpack.c.l.b16 %v2012
        %v2757 = vunpack.c.h.b16 %v2012
        %v2758 = vunpack.c.l.b16 %v2013
        %v2759 = vunpack.c.h.b16 %v2013
        %v2760 = vunpack.c.l.b16 %v2014
        %v2761 = vunpack.c.h.b16 %v2014
        %v2762 = vunpack.c.l.b16 %v2015
        %v2763 = vunpack.c.h.b16 %v2015
        %v2764 = vunpack.c.l.b16 %v2016
        %v2765 = vunpack.c.h.b16 %v2016
        %v2766 = vunpack.c.l.b16 %v2017
        %v2767 = vunpack.c.h.b16 %v2017
        %v2768 = vunpack.c.l.b16 %v2018
        %v2769 = vunpack.c.h.b16 %v2018
        %v2770 = vunpack.c.l.b16 %v2019
        %v2771 = vunpack.c.h.b16 %v2019
        %v2772 = vunpack.c.l.b16 %v2020
        %v2773 = vunpack.c.h.b16 %v2020
        %v2774 = vunpack.c.l.b16 %v2021
        %v2775 = vunpack.c.h.b16 %v2021
        %v2776 = vunpack.c.l.b16 %v2022
        %v2777 = vunpack.c.h.b16 %v2022
        %v2778 = vunpack.c.l.b16 %v2023
        %v2779 = vunpack.c.h.b16 %v2023
        %v2780 = vunpack.c.l.b16 %v2024
        %v2781 = vunpack.c.h.b16 %v2024
        %v2782 = vunpack.c.l.b16 %v2025
        %v2783 = vunpack.c.h.b16 %v2025
        %v2784 = vunpack.c.l.b16 %v2026
        %v2785 = vunpack.c.h.b16 %v2026
        %v2786 = vunpack.c.l.b16 %v2027
        %v2787 = vunpack.c.h.b16 %v2027
        %v2788 = vunpack.c.l.b16 %v2028
        %v2789 = vunpack.c.h.b16 %v2028
        %v2790 = vunpack.c.l.b16 %v2029
        %v2791 = vunpack.c.h.b16 %v2029
        %v2792 = vunpack.c.l.b16 %v2030
        %v2793 = vunpack.c.h.b16 %v2030
        %v2794 = vunpack.c.l.b16 %v2031
        %v2795 = vunpack.c.h.b16 %v2031
        %v2796 = vunpack.c.l.b16 %v2032
        %v2797 = vunpack.c.h.b16 %v2032
        %v2798 = vunpack.c.l.b16 %v2033
        %v2799 = vunpack.c.h.b16 %v2033
        %v2800 = vunpack.c.l.b16 %v2034
        %v2801 = vunpack.c.h.b16 %v2034
        %v2802 = vunpack.c.l.b16 %v2035
        %v2803 = vunpack.c.h.b16 %v2035
        %v2804 = vunpack.c.l.b16 %v2036
        %v2805 = vunpack.c.h.b16 %v2036
        %v2806 = vunpack.c.l.b16 %v2037
        %v2807 = vunpack.c.h.b16 %v2037
        %v2808 = vunpack.c.l.b16 %v2038
        %v2809 = vunpack.c.h.b16 %v2038
        %v2810 = vunpack.c.l.b16 %v2039
        %v2811 = vunpack.c.h.b16 %v2039
        %v2812 = vunpack.c.l.b16 %v2040
        %v2813 = vunpack.c.h.b16 %v2040
        %v2814 = vunpack.c.l.b16 %v2041
        %v2815 = vunpack.c.h.b16 %v2041
        %v2816 = vunpack.c.l.b16 %v2042
        %v2817 = vunpack.c.h.b16 %v2042
        %v2818 = vunpack.c.l.b16 %v2043
        %v2819 = vunpack.c.h.b16 %v2043
        %v2820 = vunpack.c.l.b16 %v2044
        %v2821 = vunpack.c.h.b16 %v2044
        %v2822 = vunpack.c.l.b16 %v2045
        %v2823 = vunpack.c.h.b16 %v2045
        %v2824 = vunpack.c.l.b16 %v2046
        %v2825 = vunpack.c.h.b16 %v2046
        %v2826 = vunpack.c.l.b16 %v2047
        %v2827 = vunpack.c.h.b16 %v2047
        %v2828 = vunpack.c.l.b16 %v2048
        %v2829 = vunpack.c.h.b16 %v2048
        %v2830 = vunpack.c.l.b16 %v2049
        %v2831 = vunpack.c.h.b16 %v2049
        %v2832 = vunpack.c.l.b16 %v2050
        %v2833 = vunpack.c.h.b16 %v2050
        %v2834 = vunpack.c.l.b16 %v2051
        %v2835 = vunpack.c.h.b16 %v2051
        %v2836 = vunpack.c.l.b16 %v2052
        %v2837 = vunpack.c.h.b16 %v2052
        %v2838 = vunpack.c.l.b16 %v2053
        %v2839 = vunpack.c.h.b16 %v2053
        %v2840 = vunpack.c.l.b16 %v2054
        %v2841 = vunpack.c.h.b16 %v2054
        %v2842 = vunpack.c.l.b16 %v2055
        %v2843 = vunpack.c.h.b16 %v2055
        %v2844 = vunpack.c.l.b16 %v2056
        %v2845 = vunpack.c.h.b16 %v2056
        %v2846 = vunpack.c.l.b16 %v2057
        %v2847 = vunpack.c.h.b16 %v2057
        %v2848 = vunpack.c.l.b16 %v2058
        %v2849 = vunpack.c.h.b16 %v2058
        %v2850 = vunpack.c.l.b16 %v2059
        %v2851 = vunpack.c.h.b16 %v2059
        %v2852 = vunpack.c.l.b16 %v2060
        %v2853 = vunpack.c.h.b16 %v2060
        %v2854 = vunpack.c.l.b16 %v2061
        %v2855 = vunpack.c.h.b16 %v2061
        %v2856 = vunpack.c.l.b16 %v2062
        %v2857 = vunpack.c.h.b16 %v2062
        %v2858 = vunpack.c.l.b16 %v2063
        %v2859 = vunpack.c.h.b16 %v2063
        %v2860 = vunpack.c.l.b16 %v2064
        %v2861 = vunpack.c.h.b16 %v2064
        %v2862 = vunpack.c.l.b16 %v2065
        %v2863 = vunpack.c.h.b16 %v2065
        %v2864 = vunpack.c.l.b16 %v2066
        %v2865 = vunpack.c.h.b16 %v2066
        %v2866 = vunpack.c.l.b16 %v2067
        %v2867 = vunpack.c.h.b16 %v2067
        %v2868 = vunpack.c.l.b16 %v2068
        %v2869 = vunpack.c.h.b16 %v2068
        %v2870 = vunpack.c.l.b16 %v2069
        %v2871 = vunpack.c.h.b16 %v2069
        %v2872 = vunpack.c.l.b16 %v2070
        %v2873 = vunpack.c.h.b16 %v2070
        %v2874 = vunpack.c.l.b16 %v2071
        %v2875 = vunpack.c.h.b16 %v2071
        %v2876 = vunpack.c.l.b16 %v2072
        %v2877 = vunpack.c.h.b16 %v2072
        %v2878 = vunpack.c.l.b16 %v2073
        %v2879 = vunpack.c.h.b16 %v2073
        %v2880 = vunpack.c.l.b16 %v2074
        %v2881 = vunpack.c.h.b16 %v2074
        %v2882 = vunpack.c.l.b16 %v2075
        %v2883 = vunpack.c.h.b16 %v2075
        %v2884 = vunpack.c.l.b16 %v2076
        %v2885 = vunpack.c.h.b16 %v2076
        %v2886 = vunpack.c.l.b16 %v2077
        %v2887 = vunpack.c.h.b16 %v2077
        %v2888 = vunpack.c.l.b16 %v2078
        %v2889 = vunpack.c.h.b16 %v2078
        %v2890 = vunpack.c.l.b16 %v2079
        %v2891 = vunpack.c.h.b16 %v2079
        %v2892 = vunpack.c.l.b16 %v2080
        %v2893 = vunpack.c.h.b16 %v2080
        %v2894 = vunpack.c.l.b16 %v2081
        %v2895 = vunpack.c.h.b16 %v2081
        %v2896 = vunpack.c.l.b16 %v2082
        %v2897 = vunpack.c.h.b16 %v2082
        %v2898 = vunpack.c.l.b16 %v2083
        %v2899 = vunpack.c.h.b16 %v2083
        %v2900 = vunpack.c.l.b16 %v2084
        %v2901 = vunpack.c.h.b16 %v2084
        %v2902 = vunpack.c.l.b16 %v2085
        %v2903 = vunpack.c.h.b16 %v2085
        %v2904 = vunpack.c.l.b16 %v2086
        %v2905 = vunpack.c.h.b16 %v2086
        %v2906 = vunpack.c.l.b16 %v2087
        %v2907 = vunpack.c.h.b16 %v2087
        %v2908 = vunpack.c.l.b16 %v2088
        %v2909 = vunpack.c.h.b16 %v2088
        %v2910 = vunpack.c.l.b16 %v2089
        %v2911 = vunpack.c.h.b16 %v2089
        %v2912 = vunpack.c.l.b16 %v2090
        %v2913 = vunpack.c.h.b16 %v2090
        %v2914 = vunpack.c.l.b16 %v2091
        %v2915 = vunpack.c.h.b16 %v2091
        %v2916 = vunpack.c.l.b16 %v2092
        %v2917 = vunpack.c.h.b16 %v2092
        %v2918 = vunpack.c.l.b16 %v2093
        %v2919 = vunpack.c.h.b16 %v2093
        %v2920 = vunpack.c.l.b16 %v2094
        %v2921 = vunpack.c.h.b16 %v2094
        %v2922 = vunpack.c.l.b16 %v2095
        %v2923 = vunpack.c.h.b16 %v2095
        %v2924 = vunpack.c.l.b16 %v2096
        %v2925 = vunpack.c.h.b16 %v2096
        %v2926 = vunpack.c.l.b16 %v2097
        %v2927 = vunpack.c.h.b16 %v2097
        %v2928 = vunpack.c.l.b16 %v2098
        %v2929 = vunpack.c.h.b16 %v2098
        %v2930 = vunpack.c.l.b16 %v2099
        %v2931 = vunpack.c.h.b16 %v2099
        %v2932 = vunpack.c.l.b16 %v2100
        %v2933 = vunpack.c.h.b16 %v2100
        %v2934 = vunpack.c.l.b16 %v2101
        %v2935 = vunpack.c.h.b16 %v2101
        %v2936 = vunpack.c.l.b16 %v2102
        %v2937 = vunpack.c.h.b16 %v2102
        %v2938 = vunpack.c.l.b16 %v2103
        %v2939 = vunpack.c.h.b16 %v2103
        %v2940 = vunpack.c.l.b16 %v2104
        %v2941 = vunpack.c.h.b16 %v2104
        %v2942 = vunpack.c.l.b16 %v2105
        %v2943 = vunpack.c.h.b16 %v2105
        %v2944 = vunpack.c.l.b16 %v2106
        %v2945 = vunpack.c.h.b16 %v2106
        %v2946 = vunpack.c.l.b16 %v2107
        %v2947 = vunpack.c.h.b16 %v2107
        %v2948 = vunpack.c.l.b16 %v2108
        %v2949 = vunpack.c.h.b16 %v2108
        %v2950 = vunpack.c.l.b16 %v2109
        %v2951 = vunpack.c.h.b16 %v2109
        %v2952 = vunpack.c.l.b16 %v2110
        %v2953 = vunpack.c.h.b16 %v2110
        %v2954 = vunpack.c.l.b16 %v2111
        %v2955 = vunpack.c.h.b16 %v2111
        %v2956 = vunpack.c.l.b16 %v2112
        %v2957 = vunpack.c.h.b16 %v2112
        %v2958 = vunpack.c.l.b16 %v2113
        %v2959 = vunpack.c.h.b16 %v2113
        %v2960 = vunpack.c.l.b16 %v2114
        %v2961 = vunpack.c.h.b16 %v2114
        %v2962 = vunpack.c.l.b16 %v2115
        %v2963 = vunpack.c.h.b16 %v2115
        %v2964 = vunpack.c.l.b16 %v2116
        %v2965 = vunpack.c.h.b16 %v2116
        %v2966 = vunpack.c.l.b16 %v2117
        %v2967 = vunpack.c.h.b16 %v2117
        %v2968 = vunpack.c.l.b16 %v2118
        %v2969 = vunpack.c.h.b16 %v2118
        %v2970 = vunpack.c.l.b16 %v2119
        %v2971 = vunpack.c.h.b16 %v2119
        %v2972 = vunpack.c.l.b16 %v2120
        %v2973 = vunpack.c.h.b16 %v2120
        %v2974 = vunpack.c.l.b16 %v2121
        %v2975 = vunpack.c.h.b16 %v2121
        %v2976 = vunpack.c.l.b16 %v2122
        %v2977 = vunpack.c.h.b16 %v2122
        %v2978 = vunpack.c.l.b16 %v2123
        %v2979 = vunpack.c.h.b16 %v2123
        %v2980 = vunpack.c.l.b16 %v2124
        %v2981 = vunpack.c.h.b16 %v2124
        %v2982 = vunpack.c.l.b16 %v2125
        %v2983 = vunpack.c.h.b16 %v2125
        %v2984 = vunpack.c.l.b16 %v2126
        %v2985 = vunpack.c.h.b16 %v2126
        %v2986 = vunpack.c.l.b16 %v2127
        %v2987 = vunpack.c.h.b16 %v2127
        %v2988 = vunpack.c.l.b16 %v2128
        %v2989 = vunpack.c.h.b16 %v2128
        %v2990 = vunpack.c.l.b16 %v2129
        %v2991 = vunpack.c.h.b16 %v2129
        %v2992 = vunpack.c.l.b16 %v2130
        %v2993 = vunpack.c.h.b16 %v2130
        %v2994 = vunpack.c.l.b16 %v2131
        %v2995 = vunpack.c.h.b16 %v2131
        %v2996 = vunpack.c.l.b16 %v2132
        %v2997 = vunpack.c.h.b16 %v2132
        %v2998 = vunpack.c.l.b16 %v2133
        %v2999 = vunpack.c.h.b16 %v2133
        %v3000 = vunpack.c.l.b16 %v2134
        %v3001 = vunpack.c.h.b16 %v2134
        %v3002 = vunpack.c.l.b16 %v2135
        %v3003 = vunpack.c.h.b16 %v2135
        %v3004 = vunpack.c.l.b16 %v2136
        %v3005 = vunpack.c.h.b16 %v2136
        %v3006 = vunpack.c.l.b16 %v2137
        %v3007 = vunpack.c.h.b16 %v2137
        %v3008 = vunpack.c.l.b16 %v2138
        %v3009 = vunpack.c.h.b16 %v2138
        %v3010 = vunpack.c.l.b16 %v2139
        %v3011 = vunpack.c.h.b16 %v2139
        %v3012 = vunpack.c.l.b16 %v2140
        %v3013 = vunpack.c.h.b16 %v2140
        %v3014 = vunpack.c.l.b16 %v2141
        %v3015 = vunpack.c.h.b16 %v2141
        %v3016 = vunpack.c.l.b16 %v2142
        %v3017 = vunpack.c.h.b16 %v2142
        %v3018 = vunpack.c.l.b16 %v2143
        %v3019 = vunpack.c.h.b16 %v2143
        %v3020 = vunpack.c.l.b16 %v2144
        %v3021 = vunpack.c.h.b16 %v2144
        %v3022 = vunpack.c.l.b16 %v2145
        %v3023 = vunpack.c.h.b16 %v2145
        %v3024 = vunpack.c.l.b16 %v2146
        %v3025 = vunpack.c.h.b16 %v2146
        %v3026 = vunpack.c.l.b16 %v2147
        %v3027 = vunpack.c.h.b16 %v2147
        %v3028 = vunpack.c.l.b16 %v2148
        %v3029 = vunpack.c.h.b16 %v2148
        %v3030 = vunpack.c.l.b16 %v2149
        %v3031 = vunpack.c.h.b16 %v2149
        %v3032 = vunpack.c.l.b16 %v2150
        %v3033 = vunpack.c.h.b16 %v2150
        %v3034 = vunpack.c.l.b16 %v2151
        %v3035 = vunpack.c.h.b16 %v2151
        %v3036 = vunpack.c.l.b16 %v2152
        %v3037 = vunpack.c.h.b16 %v2152
        %v3038 = vunpack.c.l.b16 %v2153
        %v3039 = vunpack.c.h.b16 %v2153
        %v3040 = vunpack.c.l.b16 %v2154
        %v3041 = vunpack.c.h.b16 %v2154
        %v3042 = vunpack.c.l.b16 %v2155
        %v3043 = vunpack.c.h.b16 %v2155
        %v3044 = vunpack.c.l.b16 %v2156
        %v3045 = vunpack.c.h.b16 %v2156
        %v3046 = vunpack.c.l.b16 %v2157
        %v3047 = vunpack.c.h.b16 %v2157
        %v3048 = vunpack.c.l.b16 %v2158
        %v3049 = vunpack.c.h.b16 %v2158
        %v3050 = vunpack.c.l.b16 %v2159
        %v3051 = vunpack.c.h.b16 %v2159
        %v3052 = vunpack.c.l.b16 %v2160
        %v3053 = vunpack.c.h.b16 %v2160
        %v3054 = vunpack.c.l.b16 %v2161
        %v3055 = vunpack.c.h.b16 %v2161
        %v3056 = vunpack.c.l.b16 %v2162
        %v3057 = vunpack.c.h.b16 %v2162
        %v3058 = vunpack.c.l.b16 %v2163
        %v3059 = vunpack.c.h.b16 %v2163
        %v3060 = vunpack.c.l.b16 %v2164
        %v3061 = vunpack.c.h.b16 %v2164
        %v3062 = vunpack.c.l.b16 %v2165
        %v3063 = vunpack.c.h.b16 %v2165
        %v3064 = vunpack.c.l.b16 %v2166
        %v3065 = vunpack.c.h.b16 %v2166
        %v3066 = vunpack.c.l.b16 %v2167
        %v3067 = vunpack.c.h.b16 %v2167
        %v3068 = vunpack.c.l.b16 %v2168
        %v3069 = vunpack.c.h.b16 %v2168
        %v3070 = vunpack.c.l.b16 %v2169
        %v3071 = vunpack.c.h.b16 %v2169
        %v3072 = vunpack.c.l.b16 %v2170
        %v3073 = vunpack.c.h.b16 %v2170
        %v3074 = vunpack.c.l.b16 %v2171
        %v3075 = vunpack.c.h.b16 %v2171
        %v3076 = vunpack.c.l.b16 %v2172
        %v3077 = vunpack.c.h.b16 %v2172
        %v3078 = vunpack.c.l.b16 %v2173
        %v3079 = vunpack.c.h.b16 %v2173
        %v3080 = vunpack.c.l.b16 %v2174
        %v3081 = vunpack.c.h.b16 %v2174
        %v3082 = vunpack.c.l.b16 %v2175
        %v3083 = vunpack.c.h.b16 %v2175
        %v3084 = vunpack.c.l.b16 %v2176
        %v3085 = vunpack.c.h.b16 %v2176
        %v3086 = vunpack.c.l.b16 %v2177
        %v3087 = vunpack.c.h.b16 %v2177
        %v3088 = vunpack.c.l.b16 %v2178
        %v3089 = vunpack.c.h.b16 %v2178
        %v3090 = vunpack.c.l.b16 %v2179
        %v3091 = vunpack.c.h.b16 %v2179
        %v3092 = vunpack.c.l.b16 %v2180
        %v3093 = vunpack.c.h.b16 %v2180
        %v3094 = vunpack.c.l.b16 %v2181
        %v3095 = vunpack.c.h.b16 %v2181
        %v3096 = vunpack.c.l.b16 %v2182
        %v3097 = vunpack.c.h.b16 %v2182
        %v3098 = vunpack.c.l.b16 %v2183
        %v3099 = vunpack.c.h.b16 %v2183
        %v3100 = vunpack.c.l.b16 %v2184
        %v3101 = vunpack.c.h.b16 %v2184
        %v3102 = vunpack.c.l.b16 %v2185
        %v3103 = vunpack.c.h.b16 %v2185
        %v3104 = vunpack.c.l.b16 %v2186
        %v3105 = vunpack.c.h.b16 %v2186
        %v3106 = vunpack.c.l.b16 %v2187
        %v3107 = vunpack.c.h.b16 %v2187
        %v3108 = vunpack.c.l.b16 %v2188
        %v3109 = vunpack.c.h.b16 %v2188
        %v3110 = vunpack.c.l.b16 %v2189
        %v3111 = vunpack.c.h.b16 %v2189
        %v3112 = vunpack.c.l.b16 %v2190
        %v3113 = vunpack.c.h.b16 %v2190
        %v3114 = vunpack.c.l.b16 %v2191
        %v3115 = vunpack.c.h.b16 %v2191
        %v3116 = vunpack.c.l.b16 %v2192
        %v3117 = vunpack.c.h.b16 %v2192
        %v3118 = vunpack.c.l.b16 %v2193
        %v3119 = vunpack.c.h.b16 %v2193
        %v3120 = vunpack.c.l.b16 %v2194
        %v3121 = vunpack.c.h.b16 %v2194
        %v3122 = vunpack.c.l.b16 %v2195
        %v3123 = vunpack.c.h.b16 %v2195
        %v3124 = vunpack.c.l.b16 %v2196
        %v3125 = vunpack.c.h.b16 %v2196
        %v3126 = vunpack.c.l.b16 %v2197
        %v3127 = vunpack.c.h.b16 %v2197
        %v3128 = vunpack.c.l.b16 %v2198
        %v3129 = vunpack.c.h.b16 %v2198
        %v3130 = vunpack.c.l.b16 %v2199
        %v3131 = vunpack.c.h.b16 %v2199
        %v3132 = vunpack.c.l.b16 %v2200
        %v3133 = vunpack.c.h.b16 %v2200
        %v3134 = vunpack.c.l.b16 %v2201
        %v3135 = vunpack.c.h.b16 %v2201
        %v3136 = vunpack.c.l.b16 %v2202
        %v3137 = vunpack.c.h.b16 %v2202
        %v3138 = vunpack.c.l.b16 %v2203
        %v3139 = vunpack.c.h.b16 %v2203
        %v3140 = vunpack.c.l.b16 %v2204
        %v3141 = vunpack.c.h.b16 %v2204
        %v3142 = vunpack.c.l.b16 %v2205
        %v3143 = vunpack.c.h.b16 %v2205
        %v3144 = vpack.c.b16 %v2574, %v2568
        %v3145 = vpack.c.b16 %v2575, %v2569
        %v3146 = vpack.c.b16 %v2576, %v2570
        %v3147 = vpack.c.b16 %v2577, %v2571
        %v3148 = vpack.c.b16 %v2578, %v2572
        %v3149 = vpack.c.b16 %v2579, %v2573
        %v3150 = vpack.c.b16 %v2586, %v2580
        %v3151 = vpack.c.b16 %v2587, %v2581
        %v3152 = vpack.c.b16 %v2588, %v2582
        %v3153 = vpack.c.b16 %v2589, %v2583
        %v3154 = vpack.c.b16 %v2590, %v2584
        %v3155 = vpack.c.b16 %v2591, %v2585
        %v3156 = vpack.c.b16 %v2598, %v2592
        %v3157 = vpack.c.b16 %v2599, %v2593
        %v3158 = vpack.c.b16 %v2600, %v2594
        %v3159 = vpack.c.b16 %v2601, %v2595
        %v3160 = vpack.c.b16 %v2602, %v2596
        %v3161 = vpack.c.b16 %v2603, %v2597
        %v3162 = vpack.c.b16 %v2610, %v2604
        %v3163 = vpack.c.b16 %v2611, %v2605
        %v3164 = vpack.c.b16 %v2612, %v2606
        %v3165 = vpack.c.b16 %v2613, %v2607
        %v3166 = vpack.c.b16 %v2614, %v2608
        %v3167 = vpack.c.b16 %v2615, %v2609
        %v3168 = vpack.c.b16 %v2622, %v2616
        %v3169 = vpack.c.b16 %v2623, %v2617
        %v3170 = vpack.c.b16 %v2624, %v2618
        %v3171 = vpack.c.b16 %v2625, %v2619
        %v3172 = vpack.c.b16 %v2626, %v2620
        %v3173 = vpack.c.b16 %v2627, %v2621
        %v3174 = vpack.c.b16 %v2634, %v2628
        %v3175 = vpack.c.b16 %v2635, %v2629
        %v3176 = vpack.c.b16 %v2636, %v2630
        %v3177 = vpack.c.b16 %v2637, %v2631
        %v3178 = vpack.c.b16 %v2638, %v2632
        %v3179 = vpack.c.b16 %v2639, %v2633
        %v3180 = vpack.c.b16 %v2646, %v2640
        %v3181 = vpack.c.b16 %v2647, %v2641
        %v3182 = vpack.c.b16 %v2648, %v2642
        %v3183 = vpack.c.b16 %v2649, %v2643
        %v3184 = vpack.c.b16 %v2650, %v2644
        %v3185 = vpack.c.b16 %v2651, %v2645
        %v3186 = vpack.c.b16 %v2658, %v2652
        %v3187 = vpack.c.b16 %v2659, %v2653
        %v3188 = vpack.c.b16 %v2660, %v2654
        %v3189 = vpack.c.b16 %v2661, %v2655
        %v3190 = vpack.c.b16 %v2662, %v2656
        %v3191 = vpack.c.b16 %v2663, %v2657
        %v3192 = vpack.c.b16 %v2670, %v2664
        %v3193 = vpack.c.b16 %v2671, %v2665
        %v3194 = vpack.c.b16 %v2672, %v2666
        %v3195 = vpack.c.b16 %v2673, %v2667
        %v3196 = vpack.c.b16 %v2674, %v2668
        %v3197 = vpack.c.b16 %v2675, %v2669
        %v3198 = vpack.c.b16 %v2682, %v2676
        %v3199 = vpack.c.b16 %v2683, %v2677
        %v3200 = vpack.c.b16 %v2684, %v2678
        %v3201 = vpack.c.b16 %v2685, %v2679
        %v3202 = vpack.c.b16 %v2686, %v2680
        %v3203 = vpack.c.b16 %v2687, %v2681
        %v3204 = vpack.c.b16 %v2694, %v2688
        %v3205 = vpack.c.b16 %v2695, %v2689
        %v3206 = vpack.c.b16 %v2696, %v2690
        %v3207 = vpack.c.b16 %v2697, %v2691
        %v3208 = vpack.c.b16 %v2698, %v2692
        %v3209 = vpack.c.b16 %v2699, %v2693
        %v3210 = vpack.c.b16 %v2706, %v2700
        %v3211 = vpack.c.b16 %v2707, %v2701
        %v3212 = vpack.c.b16 %v2708, %v2702
        %v3213 = vpack.c.b16 %v2709, %v2703
        %v3214 = vpack.c.b16 %v2710, %v2704
        %v3215 = vpack.c.b16 %v2711, %v2705
        %v3216 = vpack.c.b16 %v2718, %v2712
        %v3217 = vpack.c.b16 %v2719, %v2713
        %v3218 = vpack.c.b16 %v2720, %v2714
        %v3219 = vpack.c.b16 %v2721, %v2715
        %v3220 = vpack.c.b16 %v2722, %v2716
        %v3221 = vpack.c.b16 %v2723, %v2717
        %v3222 = vpack.c.b16 %v2730, %v2724
        %v3223 = vpack.c.b16 %v2731, %v2725
        %v3224 = vpack.c.b16 %v2732, %v2726
        %v3225 = vpack.c.b16 %v2733, %v2727
        %v3226 = vpack.c.b16 %v2734, %v2728
        %v3227 = vpack.c.b16 %v2735, %v2729
        %v3228 = vpack.c.b16 %v2742, %v2736
        %v3229 = vpack.c.b16 %v2743, %v2737
        %v3230 = vpack.c.b16 %v2744, %v2738
        %v3231 = vpack.c.b16 %v2745, %v2739
        %v3232 = vpack.c.b16 %v2746, %v2740
        %v3233 = vpack.c.b16 %v2747, %v2741
        %v3234 = vpack.c.b16 %v2754, %v2748
        %v3235 = vpack.c.b16 %v2755, %v2749
        %v3236 = vpack.c.b16 %v2756, %v2750
        %v3237 = vpack.c.b16 %v2757, %v2751
        %v3238 = vpack.c.b16 %v2758, %v2752
        %v3239 = vpack.c.b16 %v2759, %v2753
        %v3240 = vpack.c.b16 %v2766, %v2760
        %v3241 = vpack.c.b16 %v2767, %v2761
        %v3242 = vpack.c.b16 %v2768, %v2762
        %v3243 = vpack.c.b16 %v2769, %v2763
        %v3244 = vpack.c.b16 %v2770, %v2764
        %v3245 = vpack.c.b16 %v2771, %v2765
        %v3246 = vpack.c.b16 %v2778, %v2772
        %v3247 = vpack.c.b16 %v2779, %v2773
        %v3248 = vpack.c.b16 %v2780, %v2774
        %v3249 = vpack.c.b16 %v2781, %v2775
        %v3250 = vpack.c.b16 %v2782, %v2776
        %v3251 = vpack.c.b16 %v2783, %v2777
        %v3252 = vpack.c.b16 %v2790, %v2784
        %v3253 = vpack.c.b16 %v2791, %v2785
        %v3254 = vpack.c.b16 %v2792, %v2786
        %v3255 = vpack.c.b16 %v2793, %v2787
        %v3256 = vpack.c.b16 %v2794, %v2788
        %v3257 = vpack.c.b16 %v2795, %v2789
        %v3258 = vpack.c.b16 %v2802, %v2796
        %v3259 = vpack.c.b16 %v2803, %v2797
        %v3260 = vpack.c.b16 %v2804, %v2798
        %v3261 = vpack.c.b16 %v2805, %v2799
        %v3262 = vpack.c.b16 %v2806, %v2800
        %v3263 = vpack.c.b16 %v2807, %v2801
        %v3264 = vpack.c.b16 %v2814, %v2808
        %v3265 = vpack.c.b16 %v2815, %v2809
        %v3266 = vpack.c.b16 %v2816, %v2810
        %v3267 = vpack.c.b16 %v2817, %v2811
        %v3268 = vpack.c.b16 %v2818, %v2812
        %v3269 = vpack.c.b16 %v2819, %v2813
        %v3270 = vpack.c.b16 %v2826, %v2820
        %v3271 = vpack.c.b16 %v2827, %v2821
        %v3272 = vpack.c.b16 %v2828, %v2822
        %v3273 = vpack.c.b16 %v2829, %v2823
        %v3274 = vpack.c.b16 %v2830, %v2824
        %v3275 = vpack.c.b16 %v2831, %v2825
        %v3276 = vpack.c.b16 %v2838, %v2832
        %v3277 = vpack.c.b16 %v2839, %v2833
        %v3278 = vpack.c.b16 %v2840, %v2834
        %v3279 = vpack.c.b16 %v2841, %v2835
        %v3280 = vpack.c.b16 %v2842, %v2836
        %v3281 = vpack.c.b16 %v2843, %v2837
        %v3282 = vpack.c.b16 %v2850, %v2844
        %v3283 = vpack.c.b16 %v2851, %v2845
        %v3284 = vpack.c.b16 %v2852, %v2846
        %v3285 = vpack.c.b16 %v2853, %v2847
        %v3286 = vpack.c.b16 %v2854, %v2848
        %v3287 = vpack.c.b16 %v2855, %v2849
        %v3288 = vpack.c.b16 %v2862, %v2856
        %v3289 = vpack.c.b16 %v2863, %v2857
        %v3290 = vpack.c.b16 %v2864, %v2858
        %v3291 = vpack.c.b16 %v2865, %v2859
        %v3292 = vpack.c.b16 %v2866, %v2860
        %v3293 = vpack.c.b16 %v2867, %v2861
        %v3294 = vpack.c.b16 %v2874, %v2868
        %v3295 = vpack.c.b16 %v2875, %v2869
        %v3296 = vpack.c.b16 %v2876, %v2870
        %v3297 = vpack.c.b16 %v2877, %v2871
        %v3298 = vpack.c.b16 %v2878, %v2872
        %v3299 = vpack.c.b16 %v2879, %v2873
        %v3300 = vpack.c.b16 %v2886, %v2880
        %v3301 = vpack.c.b16 %v2887, %v2881
        %v3302 = vpack.c.b16 %v2888, %v2882
        %v3303 = vpack.c.b16 %v2889, %v2883
        %v3304 = vpack.c.b16 %v2890, %v2884
        %v3305 = vpack.c.b16 %v2891, %v2885
        %v3306 = vpack.c.b16 %v2898, %v2892
        %v3307 = vpack.c.b16 %v2899, %v2893
        %v3308 = vpack.c.b16 %v2900, %v2894
        %v3309 = vpack.c.b16 %v2901, %v2895
        %v3310 = vpack.c.b16 %v2902, %v2896
        %v3311 = vpack.c.b16 %v2903, %v2897
        %v3312 = vpack.c.b16 %v2910, %v2904
        %v3313 = vpack.c.b16 %v2911, %v2905
        %v3314 = vpack.c.b16 %v2912, %v2906
        %v3315 = vpack.c.b16 %v2913, %v2907
        %v3316 = vpack.c.b16 %v2914, %v2908
        %v3317 = vpack.c.b16 %v2915, %v2909
        %v3318 = vpack.c.b16 %v2922, %v2916
        %v3319 = vpack.c.b16 %v2923, %v2917
        %v3320 = vpack.c.b16 %v2924, %v2918
        %v3321 = vpack.c.b16 %v2925, %v2919
        %v3322 = vpack.c.b16 %v2926, %v2920
        %v3323 = vpack.c.b16 %v2927, %v2921
        %v3324 = vpack.c.b16 %v2934, %v2928
        %v3325 = vpack.c.b16 %v2935, %v2929
        %v3326 = vpack.c.b16 %v2936, %v2930
        %v3327 = vpack.c.b16 %v2937, %v2931
        %v3328 = vpack.c.b16 %v2938, %v2932
        %v3329 = vpack.c.b16 %v2939, %v2933
        %v3330 = vpack.c.b16 %v2946, %v2940
        %v3331 = vpack.c.b16 %v2947, %v2941
        %v3332 = vpack.c.b16 %v2948, %v2942
        %v3333 = vpack.c.b16 %v2949, %v2943
        %v3334 = vpack.c.b16 %v2950, %v2944
        %v3335 = vpack.c.b16 %v2951, %v2945
        %v3336 = vpack.c.b16 %v2958, %v2952
        %v3337 = vpack.c.b16 %v2959, %v2953
        %v3338 = vpack.c.b16 %v2960, %v2954
        %v3339 = vpack.c.b16 %v2961, %v2955
        %v3340 = vpack.c.b16 %v2962, %v2956
        %v3341 = vpack.c.b16 %v2963, %v2957
        %v3342 = vpack.c.b16 %v2970, %v2964
        %v3343 = vpack.c.b16 %v2971, %v2965
        %v3344 = vpack.c.b16 %v2972, %v2966
        %v3345 = vpack.c.b16 %v2973, %v2967
        %v3346 = vpack.c.b16 %v2974, %v2968
        %v3347 = vpack.c.b16 %v2975, %v2969
        %v3348 = vpack.c.b16 %v2982, %v2976
        %v3349 = vpack.c.b16 %v2983, %v2977
        %v3350 = vpack.c.b16 %v2984, %v2978
        %v3351 = vpack.c.b16 %v2985, %v2979
        %v3352 = vpack.c.b16 %v2986, %v2980
        %v3353 = vpack.c.b16 %v2987, %v2981
        %v3354 = vpack.c.b16 %v2994, %v2988
        %v3355 = vpack.c.b16 %v2995, %v2989
        %v3356 = vpack.c.b16 %v2996, %v2990
        %v3357 = vpack.c.b16 %v2997, %v2991
        %v3358 = vpack.c.b16 %v2998, %v2992
        %v3359 = vpack.c.b16 %v2999, %v2993
        %v3360 = vpack.c.b16 %v3006, %v3000
        %v3361 = vpack.c.b16 %v3007, %v3001
        %v3362 = vpack.c.b16 %v3008, %v3002
        %v3363 = vpack.c.b16 %v3009, %v3003
        %v3364 = vpack.c.b16 %v3010, %v3004
        %v3365 = vpack.c.b16 %v3011, %v3005
        %v3366 = vpack.c.b16 %v3018, %v3012
        %v3367 = vpack.c.b16 %v3019, %v3013
        %v3368 = vpack.c.b16 %v3020, %v3014
        %v3369 = vpack.c.b16 %v3021, %v3015
        %v3370 = vpack.c.b16 %v3022, %v3016
        %v3371 = vpack.c.b16 %v3023, %v3017
        %v3372 = vpack.c.b16 %v3030, %v3024
        %v3373 = vpack.c.b16 %v3031, %v3025
        %v3374 = vpack.c.b16 %v3032, %v3026
        %v3375 = vpack.c.b16 %v3033, %v3027
        %v3376 = vpack.c.b16 %v3034, %v3028
        %v3377 = vpack.c.b16 %v3035, %v3029
        %v3378 = vpack.c.b16 %v3042, %v3036
        %v3379 = vpack.c.b16 %v3043, %v3037
        %v3380 = vpack.c.b16 %v3044, %v3038
        %v3381 = vpack.c.b16 %v3045, %v3039
        %v3382 = vpack.c.b16 %v3046, %v3040
        %v3383 = vpack.c.b16 %v3047, %v3041
        %v3384 = vpack.c.b16 %v3054, %v3048
        %v3385 = vpack.c.b16 %v3055, %v3049
        %v3386 = vpack.c.b16 %v3056, %v3050
        %v3387 = vpack.c.b16 %v3057, %v3051
        %v3388 = vpack.c.b16 %v3058, %v3052
        %v3389 = vpack.c.b16 %v3059, %v3053
        %v3390 = vpack.c.b16 %v3066, %v3060
        %v3391 = vpack.c.b16 %v3067, %v3061
        %v3392 = vpack.c.b16 %v3068, %v3062
        %v3393 = vpack.c.b16 %v3069, %v3063
        %v3394 = vpack.c.b16 %v3070, %v3064
        %v3395 = vpack.c.b16 %v3071, %v3065
        %v3396 = vpack.c.b16 %v3078, %v3072
        %v3397 = vpack.c.b16 %v3079, %v3073
        %v3398 = vpack.c.b16 %v3080, %v3074
        %v3399 = vpack.c.b16 %v3081, %v3075
        %v3400 = vpack.c.b16 %v3082, %v3076
        %v3401 = vpack.c.b16 %v3083, %v3077
        %v3402 = vpack.c.b16 %v3090, %v3084
        %v3403 = vpack.c.b16 %v3091, %v3085
        %v3404 = vpack.c.b16 %v3092, %v3086
        %v3405 = vpack.c.b16 %v3093, %v3087
        %v3406 = vpack.c.b16 %v3094, %v3088
        %v3407 = vpack.c.b16 %v3095, %v3089
        %v3408 = vpack.c.b16 %v3102, %v3096
        %v3409 = vpack.c.b16 %v3103, %v3097
        %v3410 = vpack.c.b16 %v3104, %v3098
        %v3411 = vpack.c.b16 %v3105, %v3099
        %v3412 = vpack.c.b16 %v3106, %v3100
        %v3413 = vpack.c.b16 %v3107, %v3101
        %v3414 = vpack.c.b16 %v3114, %v3108
        %v3415 = vpack.c.b16 %v3115, %v3109
        %v3416 = vpack.c.b16 %v3116, %v3110
        %v3417 = vpack.c.b16 %v3117, %v3111
        %v3418 = vpack.c.b16 %v3118, %v3112
        %v3419 = vpack.c.b16 %v3119, %v3113
        %v3420 = vpack.c.b16 %v3126, %v3120
        %v3421 = vpack.c.b16 %v3127, %v3121
        %v3422 = vpack.c.b16 %v3128, %v3122
        %v3423 = vpack.c.b16 %v3129, %v3123
        %v3424 = vpack.c.b16 %v3130, %v3124
        %v3425 = vpack.c.b16 %v3131, %v3125
        %v3426 = vpack.c.b16 %v3138, %v3132
        %v3427 = vpack.c.b16 %v3139, %v3133
        %v3428 = vpack.c.b16 %v3140, %v3134
        %v3429 = vpack.c.b16 %v3141, %v3135
        %v3430 = vpack.c.b16 %v3142, %v3136
        %v3431 = vpack.c.b16 %v3143, %v3137
        %3720 = vmatpush.bf16.msra.mxu0 %v3186
        %3721 = vmatpush.bf16.msra.mxu0 %v3180
        %3722 = vmatpush.bf16.msra.mxu0 %v3174
        %3723 = vmatpush.bf16.msra.mxu0 %v3168
        %3724 = vmatpush.bf16.msra.mxu0 %v3162
        %3725 = vmatpush.bf16.msra.mxu0 %v3156
        %3726 = vmatpush.bf16.msra.mxu0 %v3150
        %3727 = vmatpush.bf16.msra.mxu0 %v3144
        %3728 = vmatmul.bf16.gmra.mxu0 %v2256
        %v3729 = vpop.f32.mrf.mxu0
        %v3730 = vadd.f32 %v2208, %v3729
        %v3731 = vpop.f32.mrf.mxu0
        %v3732 = vadd.f32 %v2208, %v3731
        %3733 = vmatmul.bf16.gmra.mxu0 %v2262
        %v3734 = vpop.f32.mrf.mxu0
        %v3735 = vadd.f32 %v2208, %v3734
        %v3736 = vpop.f32.mrf.mxu0
        %v3737 = vadd.f32 %v2208, %v3736
        %3738 = vdwg.mxu0
        %3739 = vmatpush.bf16.msra.mxu0 %v3234
        %3740 = vmatpush.bf16.msra.mxu0 %v3228
        %3741 = vmatpush.bf16.msra.mxu0 %v3222
        %3742 = vmatpush.bf16.msra.mxu0 %v3216
        %3743 = vmatpush.bf16.msra.mxu0 %v3210
        %3744 = vmatpush.bf16.msra.mxu0 %v3204
        %3745 = vmatpush.bf16.msra.mxu0 %v3198
        %3746 = vmatpush.bf16.msra.mxu0 %v3192
        %3747 = vmatmul.bf16.gmra.mxu0 %v2257
        %v3748 = vpop.f32.mrf.mxu0
        %v3749 = vadd.f32 %v3730, %v3748
        %v3750 = vpop.f32.mrf.mxu0
        %v3751 = vadd.f32 %v3732, %v3750
        %3752 = vmatmul.bf16.gmra.mxu0 %v2263
        %v3753 = vpop.f32.mrf.mxu0
        %v3754 = vadd.f32 %v3735, %v3753
        %v3755 = vpop.f32.mrf.mxu0
        %v3756 = vadd.f32 %v3737, %v3755
        %3757 = vdwg.mxu0
        %3758 = vmatpush.bf16.msra.mxu0 %v3282
        %3759 = vmatpush.bf16.msra.mxu0 %v3276
        %3760 = vmatpush.bf16.msra.mxu0 %v3270
        %3761 = vmatpush.bf16.msra.mxu0 %v3264
        %3762 = vmatpush.bf16.msra.mxu0 %v3258
        %3763 = vmatpush.bf16.msra.mxu0 %v3252
        %3764 = vmatpush.bf16.msra.mxu0 %v3246
        %3765 = vmatpush.bf16.msra.mxu0 %v3240
        %3766 = vmatmul.bf16.gmra.mxu0 %v2258
        %v3767 = vpop.f32.mrf.mxu0
        %v3768 = vadd.f32 %v3749, %v3767
        %v3769 = vpop.f32.mrf.mxu0
        %v3770 = vadd.f32 %v3751, %v3769
        %3771 = vmatmul.bf16.gmra.mxu0 %v2264
        %v3772 = vpop.f32.mrf.mxu0
        %v3773 = vadd.f32 %v3754, %v3772
        %v3774 = vpop.f32.mrf.mxu0
        %v3775 = vadd.f32 %v3756, %v3774
        %3776 = vdwg.mxu0
        %3777 = vmatpush.bf16.msra.mxu0 %v3330
        %3778 = vmatpush.bf16.msra.mxu0 %v3324
        %3779 = vmatpush.bf16.msra.mxu0 %v3318
        %3780 = vmatpush.bf16.msra.mxu0 %v3312
        %3781 = vmatpush.bf16.msra.mxu0 %v3306
        %3782 = vmatpush.bf16.msra.mxu0 %v3300
        %3783 = vmatpush.bf16.msra.mxu0 %v3294
        %3784 = vmatpush.bf16.msra.mxu0 %v3288
        %3785 = vmatmul.bf16.gmra.mxu0 %v2259
        %v3786 = vpop.f32.mrf.mxu0
        %v3787 = vadd.f32 %v3768, %v3786
        %v3788 = vpop.f32.mrf.mxu0
        %v3789 = vadd.f32 %v3770, %v3788
        %3790 = vmatmul.bf16.gmra.mxu0 %v2265
        %v3791 = vpop.f32.mrf.mxu0
        %v3792 = vadd.f32 %v3773, %v3791
        %v3793 = vpop.f32.mrf.mxu0
        %v3794 = vadd.f32 %v3775, %v3793
        %3795 = vdwg.mxu0
        %3796 = vmatpush.bf16.msra.mxu0 %v3378
        %3797 = vmatpush.bf16.msra.mxu0 %v3372
        %3798 = vmatpush.bf16.msra.mxu0 %v3366
        %3799 = vmatpush.bf16.msra.mxu0 %v3360
        %3800 = vmatpush.bf16.msra.mxu0 %v3354
        %3801 = vmatpush.bf16.msra.mxu0 %v3348
        %3802 = vmatpush.bf16.msra.mxu0 %v3342
        %3803 = vmatpush.bf16.msra.mxu0 %v3336
        %3804 = vmatmul.bf16.gmra.mxu0 %v2260
        %v3805 = vpop.f32.mrf.mxu0
        %v3806 = vadd.f32 %v3787, %v3805
        %v3807 = vpop.f32.mrf.mxu0
        %v3808 = vadd.f32 %v3789, %v3807
        %3809 = vmatmul.bf16.gmra.mxu0 %v2266
        %v3810 = vpop.f32.mrf.mxu0
        %v3811 = vadd.f32 %v3792, %v3810
        %v3812 = vpop.f32.mrf.mxu0
        %v3813 = vadd.f32 %v3794, %v3812
        %3814 = vdwg.mxu0
        %3815 = vmatpush.bf16.msra.mxu0 %v3426
        %3816 = vmatpush.bf16.msra.mxu0 %v3420
        %3817 = vmatpush.bf16.msra.mxu0 %v3414
        %3818 = vmatpush.bf16.msra.mxu0 %v3408
        %3819 = vmatpush.bf16.msra.mxu0 %v3402
        %3820 = vmatpush.bf16.msra.mxu0 %v3396
        %3821 = vmatpush.bf16.msra.mxu0 %v3390
        %3822 = vmatpush.bf16.msra.mxu0 %v3384
        %3823 = vmatmul.bf16.gmra.mxu0 %v2261
        %v3824 = vpop.f32.mrf.mxu0
        %v3825 = vadd.f32 %v3806, %v3824
        %v3826 = vpop.f32.mrf.mxu0
        %v3827 = vadd.f32 %v3808, %v3826
        %3828 = vmatmul.bf16.gmra.mxu0 %v2267
        %v3829 = vpop.f32.mrf.mxu0
        %v3830 = vadd.f32 %v3811, %v3829
        %v3831 = vpop.f32.mrf.mxu0
        %v3832 = vadd.f32 %v3813, %v3831
        %3833 = vdwg.mxu0
        %3834 = vmatpush.bf16.msra.mxu0 %v3187
        %3835 = vmatpush.bf16.msra.mxu0 %v3181
        %3836 = vmatpush.bf16.msra.mxu0 %v3175
        %3837 = vmatpush.bf16.msra.mxu0 %v3169
        %3838 = vmatpush.bf16.msra.mxu0 %v3163
        %3839 = vmatpush.bf16.msra.mxu0 %v3157
        %3840 = vmatpush.bf16.msra.mxu0 %v3151
        %3841 = vmatpush.bf16.msra.mxu0 %v3145
        %3842 = vmatmul.bf16.gmra.mxu0 %v2256
        %v3843 = vpop.f32.mrf.mxu0
        %v3844 = vadd.f32 %v2209, %v3843
        %v3845 = vpop.f32.mrf.mxu0
        %v3846 = vadd.f32 %v2209, %v3845
        %3847 = vmatmul.bf16.gmra.mxu0 %v2262
        %v3848 = vpop.f32.mrf.mxu0
        %v3849 = vadd.f32 %v2209, %v3848
        %v3850 = vpop.f32.mrf.mxu0
        %v3851 = vadd.f32 %v2209, %v3850
        %3852 = vdwg.mxu0
        %3853 = vmatpush.bf16.msra.mxu0 %v3235
        %3854 = vmatpush.bf16.msra.mxu0 %v3229
        %3855 = vmatpush.bf16.msra.mxu0 %v3223
        %3856 = vmatpush.bf16.msra.mxu0 %v3217
        %3857 = vmatpush.bf16.msra.mxu0 %v3211
        %3858 = vmatpush.bf16.msra.mxu0 %v3205
        %3859 = vmatpush.bf16.msra.mxu0 %v3199
        %3860 = vmatpush.bf16.msra.mxu0 %v3193
        %3861 = vmatmul.bf16.gmra.mxu0 %v2257
        %v3862 = vpop.f32.mrf.mxu0
        %v3863 = vadd.f32 %v3844, %v3862
        %v3864 = vpop.f32.mrf.mxu0
        %v3865 = vadd.f32 %v3846, %v3864
        %3866 = vmatmul.bf16.gmra.mxu0 %v2263
        %v3867 = vpop.f32.mrf.mxu0
        %v3868 = vadd.f32 %v3849, %v3867
        %v3869 = vpop.f32.mrf.mxu0
        %v3870 = vadd.f32 %v3851, %v3869
        %3871 = vdwg.mxu0
        %3872 = vmatpush.bf16.msra.mxu0 %v3283
        %3873 = vmatpush.bf16.msra.mxu0 %v3277
        %3874 = vmatpush.bf16.msra.mxu0 %v3271
        %3875 = vmatpush.bf16.msra.mxu0 %v3265
        %3876 = vmatpush.bf16.msra.mxu0 %v3259
        %3877 = vmatpush.bf16.msra.mxu0 %v3253
        %3878 = vmatpush.bf16.msra.mxu0 %v3247
        %3879 = vmatpush.bf16.msra.mxu0 %v3241
        %3880 = vmatmul.bf16.gmra.mxu0 %v2258
        %v3881 = vpop.f32.mrf.mxu0
        %v3882 = vadd.f32 %v3863, %v3881
        %v3883 = vpop.f32.mrf.mxu0
        %v3884 = vadd.f32 %v3865, %v3883
        %3885 = vmatmul.bf16.gmra.mxu0 %v2264
        %v3886 = vpop.f32.mrf.mxu0
        %v3887 = vadd.f32 %v3868, %v3886
        %v3888 = vpop.f32.mrf.mxu0
        %v3889 = vadd.f32 %v3870, %v3888
        %3890 = vdwg.mxu0
        %3891 = vmatpush.bf16.msra.mxu0 %v3331
        %3892 = vmatpush.bf16.msra.mxu0 %v3325
        %3893 = vmatpush.bf16.msra.mxu0 %v3319
        %3894 = vmatpush.bf16.msra.mxu0 %v3313
        %3895 = vmatpush.bf16.msra.mxu0 %v3307
        %3896 = vmatpush.bf16.msra.mxu0 %v3301
        %3897 = vmatpush.bf16.msra.mxu0 %v3295
        %3898 = vmatpush.bf16.msra.mxu0 %v3289
        %3899 = vmatmul.bf16.gmra.mxu0 %v2259
        %v3900 = vpop.f32.mrf.mxu0
        %v3901 = vadd.f32 %v3882, %v3900
        %v3902 = vpop.f32.mrf.mxu0
        %v3903 = vadd.f32 %v3884, %v3902
        %3904 = vmatmul.bf16.gmra.mxu0 %v2265
        %v3905 = vpop.f32.mrf.mxu0
        %v3906 = vadd.f32 %v3887, %v3905
        %v3907 = vpop.f32.mrf.mxu0
        %v3908 = vadd.f32 %v3889, %v3907
        %3909 = vdwg.mxu0
        %3910 = vmatpush.bf16.msra.mxu0 %v3379
        %3911 = vmatpush.bf16.msra.mxu0 %v3373
        %3912 = vmatpush.bf16.msra.mxu0 %v3367
        %3913 = vmatpush.bf16.msra.mxu0 %v3361
        %3914 = vmatpush.bf16.msra.mxu0 %v3355
        %3915 = vmatpush.bf16.msra.mxu0 %v3349
        %3916 = vmatpush.bf16.msra.mxu0 %v3343
        %3917 = vmatpush.bf16.msra.mxu0 %v3337
        %3918 = vmatmul.bf16.gmra.mxu0 %v2260
        %v3919 = vpop.f32.mrf.mxu0
        %v3920 = vadd.f32 %v3901, %v3919
        %v3921 = vpop.f32.mrf.mxu0
        %v3922 = vadd.f32 %v3903, %v3921
        %3923 = vmatmul.bf16.gmra.mxu0 %v2266
        %v3924 = vpop.f32.mrf.mxu0
        %v3925 = vadd.f32 %v3906, %v3924
        %v3926 = vpop.f32.mrf.mxu0
        %v3927 = vadd.f32 %v3908, %v3926
        %3928 = vdwg.mxu0
        %3929 = vmatpush.bf16.msra.mxu0 %v3427
        %3930 = vmatpush.bf16.msra.mxu0 %v3421
        %3931 = vmatpush.bf16.msra.mxu0 %v3415
        %3932 = vmatpush.bf16.msra.mxu0 %v3409
        %3933 = vmatpush.bf16.msra.mxu0 %v3403
        %3934 = vmatpush.bf16.msra.mxu0 %v3397
        %3935 = vmatpush.bf16.msra.mxu0 %v3391
        %3936 = vmatpush.bf16.msra.mxu0 %v3385
        %3937 = vmatmul.bf16.gmra.mxu0 %v2261
        %v3938 = vpop.f32.mrf.mxu0
        %v3939 = vadd.f32 %v3920, %v3938
        %v3940 = vpop.f32.mrf.mxu0
        %v3941 = vadd.f32 %v3922, %v3940
        %3942 = vmatmul.bf16.gmra.mxu0 %v2267
        %v3943 = vpop.f32.mrf.mxu0
        %v3944 = vadd.f32 %v3925, %v3943
        %v3945 = vpop.f32.mrf.mxu0
        %v3946 = vadd.f32 %v3927, %v3945
        %3947 = vdwg.mxu0
        %3948 = vmatpush.bf16.msra.mxu0 %v3188
        %3949 = vmatpush.bf16.msra.mxu0 %v3182
        %3950 = vmatpush.bf16.msra.mxu0 %v3176
        %3951 = vmatpush.bf16.msra.mxu0 %v3170
        %3952 = vmatpush.bf16.msra.mxu0 %v3164
        %3953 = vmatpush.bf16.msra.mxu0 %v3158
        %3954 = vmatpush.bf16.msra.mxu0 %v3152
        %3955 = vmatpush.bf16.msra.mxu0 %v3146
        %3956 = vmatmul.bf16.gmra.mxu0 %v2256
        %v3957 = vpop.f32.mrf.mxu0
        %v3958 = vadd.f32 %v2210, %v3957
        %v3959 = vpop.f32.mrf.mxu0
        %v3960 = vadd.f32 %v2210, %v3959
        %3961 = vmatmul.bf16.gmra.mxu0 %v2262
        %v3962 = vpop.f32.mrf.mxu0
        %v3963 = vadd.f32 %v2210, %v3962
        %v3964 = vpop.f32.mrf.mxu0
        %v3965 = vadd.f32 %v2210, %v3964
        %3966 = vdwg.mxu0
        %3967 = vmatpush.bf16.msra.mxu0 %v3236
        %3968 = vmatpush.bf16.msra.mxu0 %v3230
        %3969 = vmatpush.bf16.msra.mxu0 %v3224
        %3970 = vmatpush.bf16.msra.mxu0 %v3218
        %3971 = vmatpush.bf16.msra.mxu0 %v3212
        %3972 = vmatpush.bf16.msra.mxu0 %v3206
        %3973 = vmatpush.bf16.msra.mxu0 %v3200
        %3974 = vmatpush.bf16.msra.mxu0 %v3194
        %3975 = vmatmul.bf16.gmra.mxu0 %v2257
        %v3976 = vpop.f32.mrf.mxu0
        %v3977 = vadd.f32 %v3958, %v3976
        %v3978 = vpop.f32.mrf.mxu0
        %v3979 = vadd.f32 %v3960, %v3978
        %3980 = vmatmul.bf16.gmra.mxu0 %v2263
        %v3981 = vpop.f32.mrf.mxu0
        %v3982 = vadd.f32 %v3963, %v3981
        %v3983 = vpop.f32.mrf.mxu0
        %v3984 = vadd.f32 %v3965, %v3983
        %3985 = vdwg.mxu0
        %3986 = vmatpush.bf16.msra.mxu0 %v3284
        %3987 = vmatpush.bf16.msra.mxu0 %v3278
        %3988 = vmatpush.bf16.msra.mxu0 %v3272
        %3989 = vmatpush.bf16.msra.mxu0 %v3266
        %3990 = vmatpush.bf16.msra.mxu0 %v3260
        %3991 = vmatpush.bf16.msra.mxu0 %v3254
        %3992 = vmatpush.bf16.msra.mxu0 %v3248
        %3993 = vmatpush.bf16.msra.mxu0 %v3242
        %3994 = vmatmul.bf16.gmra.mxu0 %v2258
        %v3995 = vpop.f32.mrf.mxu0
        %v3996 = vadd.f32 %v3977, %v3995
        %v3997 = vpop.f32.mrf.mxu0
        %v3998 = vadd.f32 %v3979, %v3997
        %3999 = vmatmul.bf16.gmra.mxu0 %v2264
        %v4000 = vpop.f32.mrf.mxu0
        %v4001 = vadd.f32 %v3982, %v4000
        %v4002 = vpop.f32.mrf.mxu0
        %v4003 = vadd.f32 %v3984, %v4002
        %4004 = vdwg.mxu0
        %4005 = vmatpush.bf16.msra.mxu0 %v3332
        %4006 = vmatpush.bf16.msra.mxu0 %v3326
        %4007 = vmatpush.bf16.msra.mxu0 %v3320
        %4008 = vmatpush.bf16.msra.mxu0 %v3314
        %4009 = vmatpush.bf16.msra.mxu0 %v3308
        %4010 = vmatpush.bf16.msra.mxu0 %v3302
        %4011 = vmatpush.bf16.msra.mxu0 %v3296
        %4012 = vmatpush.bf16.msra.mxu0 %v3290
        %4013 = vmatmul.bf16.gmra.mxu0 %v2259
        %v4014 = vpop.f32.mrf.mxu0
        %v4015 = vadd.f32 %v3996, %v4014
        %v4016 = vpop.f32.mrf.mxu0
        %v4017 = vadd.f32 %v3998, %v4016
        %4018 = vmatmul.bf16.gmra.mxu0 %v2265
        %v4019 = vpop.f32.mrf.mxu0
        %v4020 = vadd.f32 %v4001, %v4019
        %v4021 = vpop.f32.mrf.mxu0
        %v4022 = vadd.f32 %v4003, %v4021
        %4023 = vdwg.mxu0
        %4024 = vmatpush.bf16.msra.mxu0 %v3380
        %4025 = vmatpush.bf16.msra.mxu0 %v3374
        %4026 = vmatpush.bf16.msra.mxu0 %v3368
        %4027 = vmatpush.bf16.msra.mxu0 %v3362
        %4028 = vmatpush.bf16.msra.mxu0 %v3356
        %4029 = vmatpush.bf16.msra.mxu0 %v3350
        %4030 = vmatpush.bf16.msra.mxu0 %v3344
        %4031 = vmatpush.bf16.msra.mxu0 %v3338
        %4032 = vmatmul.bf16.gmra.mxu0 %v2260
        %v4033 = vpop.f32.mrf.mxu0
        %v4034 = vadd.f32 %v4015, %v4033
        %v4035 = vpop.f32.mrf.mxu0
        %v4036 = vadd.f32 %v4017, %v4035
        %4037 = vmatmul.bf16.gmra.mxu0 %v2266
        %v4038 = vpop.f32.mrf.mxu0
        %v4039 = vadd.f32 %v4020, %v4038
        %v4040 = vpop.f32.mrf.mxu0
        %v4041 = vadd.f32 %v4022, %v4040
        %4042 = vdwg.mxu0
        %4043 = vmatpush.bf16.msra.mxu0 %v3428
        %4044 = vmatpush.bf16.msra.mxu0 %v3422
        %4045 = vmatpush.bf16.msra.mxu0 %v3416
        %4046 = vmatpush.bf16.msra.mxu0 %v3410
        %4047 = vmatpush.bf16.msra.mxu0 %v3404
        %4048 = vmatpush.bf16.msra.mxu0 %v3398
        %4049 = vmatpush.bf16.msra.mxu0 %v3392
        %4050 = vmatpush.bf16.msra.mxu0 %v3386
        %4051 = vmatmul.bf16.gmra.mxu0 %v2261
        %v4052 = vpop.f32.mrf.mxu0
        %v4053 = vadd.f32 %v4034, %v4052
        %v4054 = vpop.f32.mrf.mxu0
        %v4055 = vadd.f32 %v4036, %v4054
        %4056 = vmatmul.bf16.gmra.mxu0 %v2267
        %v4057 = vpop.f32.mrf.mxu0
        %v4058 = vadd.f32 %v4039, %v4057
        %v4059 = vpop.f32.mrf.mxu0
        %v4060 = vadd.f32 %v4041, %v4059
        %4061 = vdwg.mxu0
        %4062 = vmatpush.bf16.msra.mxu0 %v3189
        %4063 = vmatpush.bf16.msra.mxu0 %v3183
        %4064 = vmatpush.bf16.msra.mxu0 %v3177
        %4065 = vmatpush.bf16.msra.mxu0 %v3171
        %4066 = vmatpush.bf16.msra.mxu0 %v3165
        %4067 = vmatpush.bf16.msra.mxu0 %v3159
        %4068 = vmatpush.bf16.msra.mxu0 %v3153
        %4069 = vmatpush.bf16.msra.mxu0 %v3147
        %4070 = vmatmul.bf16.gmra.mxu0 %v2256
        %v4071 = vpop.f32.mrf.mxu0
        %v4072 = vadd.f32 %v2211, %v4071
        %v4073 = vpop.f32.mrf.mxu0
        %v4074 = vadd.f32 %v2211, %v4073
        %4075 = vmatmul.bf16.gmra.mxu0 %v2262
        %v4076 = vpop.f32.mrf.mxu0
        %v4077 = vadd.f32 %v2211, %v4076
        %v4078 = vpop.f32.mrf.mxu0
        %v4079 = vadd.f32 %v2211, %v4078
        %4080 = vdwg.mxu0
        %4081 = vmatpush.bf16.msra.mxu0 %v3237
        %4082 = vmatpush.bf16.msra.mxu0 %v3231
        %4083 = vmatpush.bf16.msra.mxu0 %v3225
        %4084 = vmatpush.bf16.msra.mxu0 %v3219
        %4085 = vmatpush.bf16.msra.mxu0 %v3213
        %4086 = vmatpush.bf16.msra.mxu0 %v3207
        %4087 = vmatpush.bf16.msra.mxu0 %v3201
        %4088 = vmatpush.bf16.msra.mxu0 %v3195
        %4089 = vmatmul.bf16.gmra.mxu0 %v2257
        %v4090 = vpop.f32.mrf.mxu0
        %v4091 = vadd.f32 %v4072, %v4090
        %v4092 = vpop.f32.mrf.mxu0
        %v4093 = vadd.f32 %v4074, %v4092
        %4094 = vmatmul.bf16.gmra.mxu0 %v2263
        %v4095 = vpop.f32.mrf.mxu0
        %v4096 = vadd.f32 %v4077, %v4095
        %v4097 = vpop.f32.mrf.mxu0
        %v4098 = vadd.f32 %v4079, %v4097
        %4099 = vdwg.mxu0
        %4100 = vmatpush.bf16.msra.mxu0 %v3285
        %4101 = vmatpush.bf16.msra.mxu0 %v3279
        %4102 = vmatpush.bf16.msra.mxu0 %v3273
        %4103 = vmatpush.bf16.msra.mxu0 %v3267
        %4104 = vmatpush.bf16.msra.mxu0 %v3261
        %4105 = vmatpush.bf16.msra.mxu0 %v3255
        %4106 = vmatpush.bf16.msra.mxu0 %v3249
        %4107 = vmatpush.bf16.msra.mxu0 %v3243
        %4108 = vmatmul.bf16.gmra.mxu0 %v2258
        %v4109 = vpop.f32.mrf.mxu0
        %v4110 = vadd.f32 %v4091, %v4109
        %v4111 = vpop.f32.mrf.mxu0
        %v4112 = vadd.f32 %v4093, %v4111
        %4113 = vmatmul.bf16.gmra.mxu0 %v2264
        %v4114 = vpop.f32.mrf.mxu0
        %v4115 = vadd.f32 %v4096, %v4114
        %v4116 = vpop.f32.mrf.mxu0
        %v4117 = vadd.f32 %v4098, %v4116
        %4118 = vdwg.mxu0
        %4119 = vmatpush.bf16.msra.mxu0 %v3333
        %4120 = vmatpush.bf16.msra.mxu0 %v3327
        %4121 = vmatpush.bf16.msra.mxu0 %v3321
        %4122 = vmatpush.bf16.msra.mxu0 %v3315
        %4123 = vmatpush.bf16.msra.mxu0 %v3309
        %4124 = vmatpush.bf16.msra.mxu0 %v3303
        %4125 = vmatpush.bf16.msra.mxu0 %v3297
        %4126 = vmatpush.bf16.msra.mxu0 %v3291
        %4127 = vmatmul.bf16.gmra.mxu0 %v2259
        %v4128 = vpop.f32.mrf.mxu0
        %v4129 = vadd.f32 %v4110, %v4128
        %v4130 = vpop.f32.mrf.mxu0
        %v4131 = vadd.f32 %v4112, %v4130
        %4132 = vmatmul.bf16.gmra.mxu0 %v2265
        %v4133 = vpop.f32.mrf.mxu0
        %v4134 = vadd.f32 %v4115, %v4133
        %v4135 = vpop.f32.mrf.mxu0
        %v4136 = vadd.f32 %v4117, %v4135
        %4137 = vdwg.mxu0
        %4138 = vmatpush.bf16.msra.mxu0 %v3381
        %4139 = vmatpush.bf16.msra.mxu0 %v3375
        %4140 = vmatpush.bf16.msra.mxu0 %v3369
        %4141 = vmatpush.bf16.msra.mxu0 %v3363
        %4142 = vmatpush.bf16.msra.mxu0 %v3357
        %4143 = vmatpush.bf16.msra.mxu0 %v3351
        %4144 = vmatpush.bf16.msra.mxu0 %v3345
        %4145 = vmatpush.bf16.msra.mxu0 %v3339
        %4146 = vmatmul.bf16.gmra.mxu0 %v2260
        %v4147 = vpop.f32.mrf.mxu0
        %v4148 = vadd.f32 %v4129, %v4147
        %v4149 = vpop.f32.mrf.mxu0
        %v4150 = vadd.f32 %v4131, %v4149
        %4151 = vmatmul.bf16.gmra.mxu0 %v2266
        %v4152 = vpop.f32.mrf.mxu0
        %v4153 = vadd.f32 %v4134, %v4152
        %v4154 = vpop.f32.mrf.mxu0
        %v4155 = vadd.f32 %v4136, %v4154
        %4156 = vdwg.mxu0
        %4157 = vmatpush.bf16.msra.mxu0 %v3429
        %4158 = vmatpush.bf16.msra.mxu0 %v3423
        %4159 = vmatpush.bf16.msra.mxu0 %v3417
        %4160 = vmatpush.bf16.msra.mxu0 %v3411
        %4161 = vmatpush.bf16.msra.mxu0 %v3405
        %4162 = vmatpush.bf16.msra.mxu0 %v3399
        %4163 = vmatpush.bf16.msra.mxu0 %v3393
        %4164 = vmatpush.bf16.msra.mxu0 %v3387
        %4165 = vmatmul.bf16.gmra.mxu0 %v2261
        %v4166 = vpop.f32.mrf.mxu0
        %v4167 = vadd.f32 %v4148, %v4166
        %v4168 = vpop.f32.mrf.mxu0
        %v4169 = vadd.f32 %v4150, %v4168
        %4170 = vmatmul.bf16.gmra.mxu0 %v2267
        %v4171 = vpop.f32.mrf.mxu0
        %v4172 = vadd.f32 %v4153, %v4171
        %v4173 = vpop.f32.mrf.mxu0
        %v4174 = vadd.f32 %v4155, %v4173
        %4175 = vdwg.mxu0
        %4176 = vmatpush.bf16.msra.mxu0 %v3190
        %4177 = vmatpush.bf16.msra.mxu0 %v3184
        %4178 = vmatpush.bf16.msra.mxu0 %v3178
        %4179 = vmatpush.bf16.msra.mxu0 %v3172
        %4180 = vmatpush.bf16.msra.mxu0 %v3166
        %4181 = vmatpush.bf16.msra.mxu0 %v3160
        %4182 = vmatpush.bf16.msra.mxu0 %v3154
        %4183 = vmatpush.bf16.msra.mxu0 %v3148
        %4184 = vmatmul.bf16.gmra.mxu0 %v2256
        %v4185 = vpop.f32.mrf.mxu0
        %v4186 = vadd.f32 %v2212, %v4185
        %v4187 = vpop.f32.mrf.mxu0
        %v4188 = vadd.f32 %v2212, %v4187
        %4189 = vmatmul.bf16.gmra.mxu0 %v2262
        %v4190 = vpop.f32.mrf.mxu0
        %v4191 = vadd.f32 %v2212, %v4190
        %v4192 = vpop.f32.mrf.mxu0
        %v4193 = vadd.f32 %v2212, %v4192
        %4194 = vdwg.mxu0
        %4195 = vmatpush.bf16.msra.mxu0 %v3238
        %4196 = vmatpush.bf16.msra.mxu0 %v3232
        %4197 = vmatpush.bf16.msra.mxu0 %v3226
        %4198 = vmatpush.bf16.msra.mxu0 %v3220
        %4199 = vmatpush.bf16.msra.mxu0 %v3214
        %4200 = vmatpush.bf16.msra.mxu0 %v3208
        %4201 = vmatpush.bf16.msra.mxu0 %v3202
        %4202 = vmatpush.bf16.msra.mxu0 %v3196
        %4203 = vmatmul.bf16.gmra.mxu0 %v2257
        %v4204 = vpop.f32.mrf.mxu0
        %v4205 = vadd.f32 %v4186, %v4204
        %v4206 = vpop.f32.mrf.mxu0
        %v4207 = vadd.f32 %v4188, %v4206
        %4208 = vmatmul.bf16.gmra.mxu0 %v2263
        %v4209 = vpop.f32.mrf.mxu0
        %v4210 = vadd.f32 %v4191, %v4209
        %v4211 = vpop.f32.mrf.mxu0
        %v4212 = vadd.f32 %v4193, %v4211
        %4213 = vdwg.mxu0
        %4214 = vmatpush.bf16.msra.mxu0 %v3286
        %4215 = vmatpush.bf16.msra.mxu0 %v3280
        %4216 = vmatpush.bf16.msra.mxu0 %v3274
        %4217 = vmatpush.bf16.msra.mxu0 %v3268
        %4218 = vmatpush.bf16.msra.mxu0 %v3262
        %4219 = vmatpush.bf16.msra.mxu0 %v3256
        %4220 = vmatpush.bf16.msra.mxu0 %v3250
        %4221 = vmatpush.bf16.msra.mxu0 %v3244
        %4222 = vmatmul.bf16.gmra.mxu0 %v2258
        %v4223 = vpop.f32.mrf.mxu0
        %v4224 = vadd.f32 %v4205, %v4223
        %v4225 = vpop.f32.mrf.mxu0
        %v4226 = vadd.f32 %v4207, %v4225
        %4227 = vmatmul.bf16.gmra.mxu0 %v2264
        %v4228 = vpop.f32.mrf.mxu0
        %v4229 = vadd.f32 %v4210, %v4228
        %v4230 = vpop.f32.mrf.mxu0
        %v4231 = vadd.f32 %v4212, %v4230
        %4232 = vdwg.mxu0
        %4233 = vmatpush.bf16.msra.mxu0 %v3334
        %4234 = vmatpush.bf16.msra.mxu0 %v3328
        %4235 = vmatpush.bf16.msra.mxu0 %v3322
        %4236 = vmatpush.bf16.msra.mxu0 %v3316
        %4237 = vmatpush.bf16.msra.mxu0 %v3310
        %4238 = vmatpush.bf16.msra.mxu0 %v3304
        %4239 = vmatpush.bf16.msra.mxu0 %v3298
        %4240 = vmatpush.bf16.msra.mxu0 %v3292
        %4241 = vmatmul.bf16.gmra.mxu0 %v2259
        %v4242 = vpop.f32.mrf.mxu0
        %v4243 = vadd.f32 %v4224, %v4242
        %v4244 = vpop.f32.mrf.mxu0
        %v4245 = vadd.f32 %v4226, %v4244
        %4246 = vmatmul.bf16.gmra.mxu0 %v2265
        %v4247 = vpop.f32.mrf.mxu0
        %v4248 = vadd.f32 %v4229, %v4247
        %v4249 = vpop.f32.mrf.mxu0
        %v4250 = vadd.f32 %v4231, %v4249
        %4251 = vdwg.mxu0
        %4252 = vmatpush.bf16.msra.mxu0 %v3382
        %4253 = vmatpush.bf16.msra.mxu0 %v3376
        %4254 = vmatpush.bf16.msra.mxu0 %v3370
        %4255 = vmatpush.bf16.msra.mxu0 %v3364
        %4256 = vmatpush.bf16.msra.mxu0 %v3358
        %4257 = vmatpush.bf16.msra.mxu0 %v3352
        %4258 = vmatpush.bf16.msra.mxu0 %v3346
        %4259 = vmatpush.bf16.msra.mxu0 %v3340
        %4260 = vmatmul.bf16.gmra.mxu0 %v2260
        %v4261 = vpop.f32.mrf.mxu0
        %v4262 = vadd.f32 %v4243, %v4261
        %v4263 = vpop.f32.mrf.mxu0
        %v4264 = vadd.f32 %v4245, %v4263
        %4265 = vmatmul.bf16.gmra.mxu0 %v2266
        %v4266 = vpop.f32.mrf.mxu0
        %v4267 = vadd.f32 %v4248, %v4266
        %v4268 = vpop.f32.mrf.mxu0
        %v4269 = vadd.f32 %v4250, %v4268
        %4270 = vdwg.mxu0
        %4271 = vmatpush.bf16.msra.mxu0 %v3430
        %4272 = vmatpush.bf16.msra.mxu0 %v3424
        %4273 = vmatpush.bf16.msra.mxu0 %v3418
        %4274 = vmatpush.bf16.msra.mxu0 %v3412
        %4275 = vmatpush.bf16.msra.mxu0 %v3406
        %4276 = vmatpush.bf16.msra.mxu0 %v3400
        %4277 = vmatpush.bf16.msra.mxu0 %v3394
        %4278 = vmatpush.bf16.msra.mxu0 %v3388
        %4279 = vmatmul.bf16.gmra.mxu0 %v2261
        %v4280 = vpop.f32.mrf.mxu0
        %v4281 = vadd.f32 %v4262, %v4280
        %v4282 = vpop.f32.mrf.mxu0
        %v4283 = vadd.f32 %v4264, %v4282
        %4284 = vmatmul.bf16.gmra.mxu0 %v2267
        %v4285 = vpop.f32.mrf.mxu0
        %v4286 = vadd.f32 %v4267, %v4285
        %v4287 = vpop.f32.mrf.mxu0
        %v4288 = vadd.f32 %v4269, %v4287
        %4289 = vdwg.mxu0
        %4290 = vmatpush.bf16.msra.mxu0 %v3191
        %4291 = vmatpush.bf16.msra.mxu0 %v3185
        %4292 = vmatpush.bf16.msra.mxu0 %v3179
        %4293 = vmatpush.bf16.msra.mxu0 %v3173
        %4294 = vmatpush.bf16.msra.mxu0 %v3167
        %4295 = vmatpush.bf16.msra.mxu0 %v3161
        %4296 = vmatpush.bf16.msra.mxu0 %v3155
        %4297 = vmatpush.bf16.msra.mxu0 %v3149
        %4298 = vmatmul.bf16.gmra.mxu0 %v2256
        %v4299 = vpop.f32.mrf.mxu0
        %v4300 = vadd.f32 %v2213, %v4299
        %v4301 = vpop.f32.mrf.mxu0
        %v4302 = vadd.f32 %v2213, %v4301
        %4303 = vmatmul.bf16.gmra.mxu0 %v2262
        %v4304 = vpop.f32.mrf.mxu0
        %v4305 = vadd.f32 %v2213, %v4304
        %v4306 = vpop.f32.mrf.mxu0
        %v4307 = vadd.f32 %v2213, %v4306
        %4308 = vdwg.mxu0
        %4309 = vmatpush.bf16.msra.mxu0 %v3239
        %4310 = vmatpush.bf16.msra.mxu0 %v3233
        %4311 = vmatpush.bf16.msra.mxu0 %v3227
        %4312 = vmatpush.bf16.msra.mxu0 %v3221
        %4313 = vmatpush.bf16.msra.mxu0 %v3215
        %4314 = vmatpush.bf16.msra.mxu0 %v3209
        %4315 = vmatpush.bf16.msra.mxu0 %v3203
        %4316 = vmatpush.bf16.msra.mxu0 %v3197
        %4317 = vmatmul.bf16.gmra.mxu0 %v2257
        %v4318 = vpop.f32.mrf.mxu0
        %v4319 = vadd.f32 %v4300, %v4318
        %v4320 = vpop.f32.mrf.mxu0
        %v4321 = vadd.f32 %v4302, %v4320
        %4322 = vmatmul.bf16.gmra.mxu0 %v2263
        %v4323 = vpop.f32.mrf.mxu0
        %v4324 = vadd.f32 %v4305, %v4323
        %v4325 = vpop.f32.mrf.mxu0
        %v4326 = vadd.f32 %v4307, %v4325
        %4327 = vdwg.mxu0
        %4328 = vmatpush.bf16.msra.mxu0 %v3287
        %4329 = vmatpush.bf16.msra.mxu0 %v3281
        %4330 = vmatpush.bf16.msra.mxu0 %v3275
        %4331 = vmatpush.bf16.msra.mxu0 %v3269
        %4332 = vmatpush.bf16.msra.mxu0 %v3263
        %4333 = vmatpush.bf16.msra.mxu0 %v3257
        %4334 = vmatpush.bf16.msra.mxu0 %v3251
        %4335 = vmatpush.bf16.msra.mxu0 %v3245
        %4336 = vmatmul.bf16.gmra.mxu0 %v2258
        %v4337 = vpop.f32.mrf.mxu0
        %v4338 = vadd.f32 %v4319, %v4337
        %v4339 = vpop.f32.mrf.mxu0
        %v4340 = vadd.f32 %v4321, %v4339
        %4341 = vmatmul.bf16.gmra.mxu0 %v2264
        %v4342 = vpop.f32.mrf.mxu0
        %v4343 = vadd.f32 %v4324, %v4342
        %v4344 = vpop.f32.mrf.mxu0
        %v4345 = vadd.f32 %v4326, %v4344
        %4346 = vdwg.mxu0
        %4347 = vmatpush.bf16.msra.mxu0 %v3335
        %4348 = vmatpush.bf16.msra.mxu0 %v3329
        %4349 = vmatpush.bf16.msra.mxu0 %v3323
        %4350 = vmatpush.bf16.msra.mxu0 %v3317
        %4351 = vmatpush.bf16.msra.mxu0 %v3311
        %4352 = vmatpush.bf16.msra.mxu0 %v3305
        %4353 = vmatpush.bf16.msra.mxu0 %v3299
        %4354 = vmatpush.bf16.msra.mxu0 %v3293
        %4355 = vmatmul.bf16.gmra.mxu0 %v2259
        %v4356 = vpop.f32.mrf.mxu0
        %v4357 = vadd.f32 %v4338, %v4356
        %v4358 = vpop.f32.mrf.mxu0
        %v4359 = vadd.f32 %v4340, %v4358
        %4360 = vmatmul.bf16.gmra.mxu0 %v2265
        %v4361 = vpop.f32.mrf.mxu0
        %v4362 = vadd.f32 %v4343, %v4361
        %v4363 = vpop.f32.mrf.mxu0
        %v4364 = vadd.f32 %v4345, %v4363
        %4365 = vdwg.mxu0
        %4366 = vmatpush.bf16.msra.mxu0 %v3383
        %4367 = vmatpush.bf16.msra.mxu0 %v3377
        %4368 = vmatpush.bf16.msra.mxu0 %v3371
        %4369 = vmatpush.bf16.msra.mxu0 %v3365
        %4370 = vmatpush.bf16.msra.mxu0 %v3359
        %4371 = vmatpush.bf16.msra.mxu0 %v3353
        %4372 = vmatpush.bf16.msra.mxu0 %v3347
        %4373 = vmatpush.bf16.msra.mxu0 %v3341
        %4374 = vmatmul.bf16.gmra.mxu0 %v2260
        %v4375 = vpop.f32.mrf.mxu0
        %v4376 = vadd.f32 %v4357, %v4375
        %v4377 = vpop.f32.mrf.mxu0
        %v4378 = vadd.f32 %v4359, %v4377
        %4379 = vmatmul.bf16.gmra.mxu0 %v2266
        %v4380 = vpop.f32.mrf.mxu0
        %v4381 = vadd.f32 %v4362, %v4380
        %v4382 = vpop.f32.mrf.mxu0
        %v4383 = vadd.f32 %v4364, %v4382
        %4384 = vdwg.mxu0
        %4385 = vmatpush.bf16.msra.mxu0 %v3431
        %4386 = vmatpush.bf16.msra.mxu0 %v3425
        %4387 = vmatpush.bf16.msra.mxu0 %v3419
        %4388 = vmatpush.bf16.msra.mxu0 %v3413
        %4389 = vmatpush.bf16.msra.mxu0 %v3407
        %4390 = vmatpush.bf16.msra.mxu0 %v3401
        %4391 = vmatpush.bf16.msra.mxu0 %v3395
        %4392 = vmatpush.bf16.msra.mxu0 %v3389
        %4393 = vmatmul.bf16.gmra.mxu0 %v2261
        %v4394 = vpop.f32.mrf.mxu0
        %v4395 = vadd.f32 %v4376, %v4394
        %v4396 = vpop.f32.mrf.mxu0
        %v4397 = vadd.f32 %v4378, %v4396
        %4398 = vmatmul.bf16.gmra.mxu0 %v2267
        %v4399 = vpop.f32.mrf.mxu0
        %v4400 = vadd.f32 %v4381, %v4399
        %v4401 = vpop.f32.mrf.mxu0
        %v4402 = vadd.f32 %v4383, %v4401
        %4403 = vdwg.mxu0
        %v4404 = vpack.c.bf16 %v3939, %v3825
        %v4405 = vpack.c.bf16 %v4167, %v4053
        %v4406 = vpack.c.bf16 %v4395, %v4281
        %v4407 = vpack.c.bf16 %v3941, %v3827
        %v4408 = vpack.c.bf16 %v4169, %v4055
        %v4409 = vpack.c.bf16 %v4397, %v4283
        %v4410 = vpack.c.bf16 %v3944, %v3830
        %v4411 = vpack.c.bf16 %v4172, %v4058
        %v4412 = vpack.c.bf16 %v4400, %v4286
        %v4413 = vpack.c.bf16 %v3946, %v3832
        %v4414 = vpack.c.bf16 %v4174, %v4060
        %v4415 = vpack.c.bf16 %v4402, %v4288
        %v4418 = vunpack.c.l.b16 %v1910
        %v4419 = vunpack.c.l.b16 %v1912
        %v4420 = vpack.c.b16 %v4419, %v4418
        %v4423 = vunpack.c.l.b16 %v4404
        %v4424 = vunpack.c.l.b16 %v4407
        %v4425 = vpack.c.b16 %v4424, %v4423
        %vm4426 = vcmask 785408
        %v4428 = vsel %vm4426, %v4420, 0
        %v4431 = vsel %vm4426, %v4425, 0
        %4433 = vmatpush.bf16.xpose.msra.mxu0 0
        %4434 = vmatpush.bf16.xpose.msra.mxu0 0
        %4435 = vmatpush.bf16.xpose.msra.mxu0 0
        %4436 = vmatpush.bf16.xpose.msra.mxu0 0
        %4437 = vmatpush.bf16.xpose.msra.mxu0 0
        %4438 = vmatpush.bf16.xpose.msra.mxu0 0
        %4439 = vmatpush.bf16.xpose.msra.mxu0 0
        %4440 = vmatpush.bf16.xpose.msra.mxu0 %v4431
        %4441 = vmatmul.bf16.gmra.mxu0 %v4428
        %v4442 = vpop.f32.mrf.mxu0
        %v4443 = vadd.f32 0.0, %v4442
        %v4444 = vpop.f32.mrf.mxu0
        %v4445 = vadd.f32 0.0, %v4444
        %4446 = vdwg.mxu0
        %v4447 = vmul.f32 %v4443, 0.10206208
        %v4448 = vmul.f32 %v4445, 0.10206208
        %vm4449 = vcmask 130048
        %v4450 = vsel %vm4449, %v4447, -inf
        %4451 = vmax.xlane.f32.xlu0 %v4450
        %v4452 = vpop.xlane.xlu0 %4451
        %v4453 = vsel %vm4449, %v4448, -inf
        %4454 = vmax.xlane.f32.xlu0 %v4453
        %v4455 = vpop.xlane.xlu0 %4454
        %v4456 = vsub.f32 %v4447, %v4452
        %v4457 = vsub.f32 %v4448, %v4455
        %v4458 = vmul.f32 %v4456, 1.442695
        %v4459 = vpow.pop %v4458
        %v4460 = vmul.f32 %v4457, 1.442695
        %v4461 = vpow.pop %v4460
        %v4462 = vsel %vm4449, %v4459, 0.0
        %4463 = vadd.xlane.f32.xlu0 %v4462
        %v4464 = vpop.xlane.xlu0 %4463
        %v4465 = vsel %vm4449, %v4461, 0.0
        %4466 = vadd.xlane.f32.xlu0 %v4465
        %v4467 = vpop.xlane.xlu0 %4466
        %v4468 = vrcp.pop %v4464
        %v4469 = vmul.f32 %v4464, %v4468
        %v4470 = vsub.f32 1.0, %v4469
        %v4471 = vmul.f32 %v4468, %v4470
        %v4472 = vadd.f32 %v4468, %v4471
        %vm4473 = vweird.f32 %v4464
        %vm4474 = vweird.f32 %v4468
        %vm4475 = vmor %vm4473, %vm4474
        %v4476 = vsel %vm4475, %v4468, %v4472
        %v4477 = vand.u32 2147483647, %v4464
        %vm4478 = vcmp.eq.f32.partialorder %v4477, 8.507059e+37
        %v4479 = vand.u32 %v4464, 2147483648
        %v4480 = vor.u32 1.1754944e-38, %v4479
        %v4481 = vsel %vm4478, %v4480, %v4476
        %v4482 = vmul.f32 %v4459, %v4481
        %v4483 = vrcp.pop %v4467
        %v4484 = vmul.f32 %v4467, %v4483
        %v4485 = vsub.f32 1.0, %v4484
        %v4486 = vmul.f32 %v4483, %v4485
        %v4487 = vadd.f32 %v4483, %v4486
        %vm4488 = vweird.f32 %v4467
        %vm4489 = vweird.f32 %v4483
        %vm4490 = vmor %vm4488, %vm4489
        %v4491 = vsel %vm4490, %v4483, %v4487
        %v4492 = vand.u32 2147483647, %v4467
        %vm4493 = vcmp.eq.f32.partialorder %v4492, 8.507059e+37
        %v4494 = vand.u32 %v4467, 2147483648
        %v4495 = vor.u32 1.1754944e-38, %v4494
        %v4496 = vsel %vm4493, %v4495, %v4491
        %v4497 = vmul.f32 %v4461, %v4496
        %v4498 = vpack.c.bf16 %v4497, %v4482
        %v4501 = vunpack.c.h.b16 %v4405
        %v4502 = vunpack.c.h.b16 %v4408
        %v4503 = vpack.c.b16 %v4502, %v4501
        %v4506 = vsel %vm4449, %v4498, 0
        %4508 = vmatpush.bf16.msra.mxu0 0
        %4509 = vmatpush.bf16.msra.mxu0 0
        %4510 = vmatpush.bf16.msra.mxu0 0
        %4511 = vmatpush.bf16.msra.mxu0 0
        %4512 = vmatpush.bf16.msra.mxu0 0
        %4513 = vmatpush.bf16.msra.mxu0 0
        %4514 = vmatpush.bf16.msra.mxu0 0
        %4515 = vmatpush.bf16.msra.mxu0 %v4503
        %4516 = vmatmul.bf16.gmra.mxu0 %v4506
        %v4517 = vpop.f32.mrf.mxu0
        %v4518 = vadd.f32 0.0, %v4517
        %v4519 = vpop.f32.mrf.mxu0
        %v4520 = vadd.f32 0.0, %v4519
        %4521 = vdwg.mxu0
        %v4522 = vpack.c.bf16 %v4518, %v4518
        %v4523 = vpack.c.bf16 %v4520, %v4520
        %vm4524 = vcmask 781312
        %4525 = vst.msk [vmem:[#allocation2] sm:$0xf] %vm4524, %v4522
        %4526 = vst.msk [vmem:[#allocation2 + $0xc] sm:$0xf] %vm4524, %v4523
        %v4527 = vunpack.c.h.b16 %v1910
        %v4528 = vunpack.c.h.b16 %v1912
        %v4529 = vpack.c.b16 %v4528, %v4527
        %4530 = vrot.lane.b32.xlu0 %v4420, 32
        %v4531 = vpop.permute.xlu0 %4530
        %4532 = vrot.lane.b32.xlu0 %v4529, 32
        %v4533 = vpop.permute.xlu0 %4532
        %vm4534 = vcmask 261120
        %v4535 = vsel %vm4534, %v4531, %v4533
        %v4536 = vunpack.c.h.b16 %v4404
        %v4537 = vunpack.c.h.b16 %v4407
        %v4538 = vpack.c.b16 %v4537, %v4536
        %4539 = vrot.lane.b32.xlu0 %v4425, 32
        %v4540 = vpop.permute.xlu0 %4539
        %4541 = vrot.lane.b32.xlu0 %v4538, 32
        %v4542 = vpop.permute.xlu0 %4541
        %v4543 = vsel %vm4534, %v4540, %v4542
        %v4545 = vsel %vm4426, %v4535, 0
        %v4548 = vsel %vm4426, %v4543, 0
        %4550 = vmatpush.bf16.xpose.msra.mxu0 0
        %4551 = vmatpush.bf16.xpose.msra.mxu0 0
        %4552 = vmatpush.bf16.xpose.msra.mxu0 0
        %4553 = vmatpush.bf16.xpose.msra.mxu0 0
        %4554 = vmatpush.bf16.xpose.msra.mxu0 0
        %4555 = vmatpush.bf16.xpose.msra.mxu0 0
        %4556 = vmatpush.bf16.xpose.msra.mxu0 0
        %4557 = vmatpush.bf16.xpose.msra.mxu0 %v4548
        %4558 = vmatmul.bf16.gmra.mxu0 %v4545
        %v4559 = vpop.f32.mrf.mxu0
        %v4560 = vadd.f32 0.0, %v4559
        %v4561 = vpop.f32.mrf.mxu0
        %v4562 = vadd.f32 0.0, %v4561
        %4563 = vdwg.mxu0
        %v4564 = vmul.f32 %v4560, 0.10206208
        %v4565 = vmul.f32 %v4562, 0.10206208
        %v4566 = vsel %vm4449, %v4564, -inf
        %4567 = vmax.xlane.f32.xlu0 %v4566
        %v4568 = vpop.xlane.xlu0 %4567
        %v4569 = vsel %vm4449, %v4565, -inf
        %4570 = vmax.xlane.f32.xlu0 %v4569
        %v4571 = vpop.xlane.xlu0 %4570
        %v4572 = vsub.f32 %v4564, %v4568
        %v4573 = vsub.f32 %v4565, %v4571
        %v4574 = vmul.f32 %v4572, 1.442695
        %v4575 = vpow.pop %v4574
        %v4576 = vmul.f32 %v4573, 1.442695
        %v4577 = vpow.pop %v4576
        %v4578 = vsel %vm4449, %v4575, 0.0
        %4579 = vadd.xlane.f32.xlu0 %v4578
        %v4580 = vpop.xlane.xlu0 %4579
        %v4581 = vsel %vm4449, %v4577, 0.0
        %4582 = vadd.xlane.f32.xlu0 %v4581
        %v4583 = vpop.xlane.xlu0 %4582
        %v4584 = vrcp.pop %v4580
        %v4585 = vmul.f32 %v4580, %v4584
        %v4586 = vsub.f32 1.0, %v4585
        %v4587 = vmul.f32 %v4584, %v4586
        %v4588 = vadd.f32 %v4584, %v4587
        %vm4589 = vweird.f32 %v4580
        %vm4590 = vweird.f32 %v4584
        %vm4591 = vmor %vm4589, %vm4590
        %v4592 = vsel %vm4591, %v4584, %v4588
        %v4593 = vand.u32 2147483647, %v4580
        %vm4594 = vcmp.eq.f32.partialorder %v4593, 8.507059e+37
        %v4595 = vand.u32 %v4580, 2147483648
        %v4596 = vor.u32 1.1754944e-38, %v4595
        %v4597 = vsel %vm4594, %v4596, %v4592
        %v4598 = vmul.f32 %v4575, %v4597
        %v4599 = vrcp.pop %v4583
        %v4600 = vmul.f32 %v4583, %v4599
        %v4601 = vsub.f32 1.0, %v4600
        %v4602 = vmul.f32 %v4599, %v4601
        %v4603 = vadd.f32 %v4599, %v4602
        %vm4604 = vweird.f32 %v4583
        %vm4605 = vweird.f32 %v4599
        %vm4606 = vmor %vm4604, %vm4605
        %v4607 = vsel %vm4606, %v4599, %v4603
        %v4608 = vand.u32 2147483647, %v4583
        %vm4609 = vcmp.eq.f32.partialorder %v4608, 8.507059e+37
        %v4610 = vand.u32 %v4583, 2147483648
        %v4611 = vor.u32 1.1754944e-38, %v4610
        %v4612 = vsel %vm4609, %v4611, %v4607
        %v4613 = vmul.f32 %v4577, %v4612
        %v4614 = vpack.c.bf16 %v4613, %v4598
        %v4617 = vunpack.c.l.b16 %v4406
        %v4618 = vunpack.c.l.b16 %v4409
        %v4619 = vpack.c.b16 %v4618, %v4617
        %4620 = vrot.lane.b32.xlu0 %v4503, 32
        %v4621 = vpop.permute.xlu0 %4620
        %4622 = vrot.lane.b32.xlu0 %v4619, 32
        %v4623 = vpop.permute.xlu0 %4622
        %v4624 = vsel %vm4534, %v4621, %v4623
        %v4627 = vsel %vm4449, %v4614, 0
        %4629 = vmatpush.bf16.msra.mxu0 0
        %4630 = vmatpush.bf16.msra.mxu0 0
        %4631 = vmatpush.bf16.msra.mxu0 0
        %4632 = vmatpush.bf16.msra.mxu0 0
        %4633 = vmatpush.bf16.msra.mxu0 0
        %4634 = vmatpush.bf16.msra.mxu0 0
        %4635 = vmatpush.bf16.msra.mxu0 0
        %4636 = vmatpush.bf16.msra.mxu0 %v4624
        %4637 = vmatmul.bf16.gmra.mxu0 %v4627
        %v4638 = vpop.f32.mrf.mxu0
        %v4639 = vadd.f32 0.0, %v4638
        %v4640 = vpop.f32.mrf.mxu0
        %v4641 = vadd.f32 0.0, %v4640
        %4642 = vdwg.mxu0
        %v4643 = vpack.c.bf16 %v4639, %v4639
        %v4644 = vpack.c.bf16 %v4641, %v4641
        %4647 = vrot.lane.b32.xlu0 %v4643, 96
        %v4648 = vpop.permute.xlu0 %4647
        %4649 = vrot.lane.b32.xlu0 %v4644, 96
        %v4650 = vpop.permute.xlu0 %4649
        %v4651 = vrot.slane %v4648, 4
        %v4652 = vrot.slane %v4650, 4
        %vm4653 = vcmask 785408
        %v4654 = vsel %vm4653, %v4651, %v4648
        %v4655 = vsel %vm4653, %v4652, %v4650
        %vm4658 = vcmask 1044224
        %vm4659 = vcmask 523268
        %vm4660 = vmor %vm4659, %vm4658
        %4661 = vst.msk [vmem:[#allocation2] sm:$0xff] %vm4660, %v4654
        %4662 = vst.msk [vmem:[#allocation2 + $0xc] sm:$0xff] %vm4660, %v4655
        %v4665 = vunpack.c.l.b16 %v1911
        %v4666 = vunpack.c.l.b16 %v1913
        %v4667 = vpack.c.b16 %v4666, %v4665
        %4668 = vrot.lane.b32.xlu0 %v4529, 64
        %v4669 = vpop.permute.xlu0 %4668
        %4670 = vrot.lane.b32.xlu0 %v4667, 64
        %v4671 = vpop.permute.xlu0 %4670
        %vm4672 = vcmask 523264
        %v4673 = vsel %vm4672, %v4669, %v4671
        %v4674 = vunpack.c.l.b16 %v4405
        %v4675 = vunpack.c.l.b16 %v4408
        %v4676 = vpack.c.b16 %v4675, %v4674
        %4677 = vrot.lane.b32.xlu0 %v4538, 64
        %v4678 = vpop.permute.xlu0 %4677
        %4679 = vrot.lane.b32.xlu0 %v4676, 64
        %v4680 = vpop.permute.xlu0 %4679
        %v4681 = vsel %vm4672, %v4678, %v4680
        %v4683 = vsel %vm4426, %v4673, 0
        %v4686 = vsel %vm4426, %v4681, 0
        %4688 = vmatpush.bf16.xpose.msra.mxu0 0
        %4689 = vmatpush.bf16.xpose.msra.mxu0 0
        %4690 = vmatpush.bf16.xpose.msra.mxu0 0
        %4691 = vmatpush.bf16.xpose.msra.mxu0 0
        %4692 = vmatpush.bf16.xpose.msra.mxu0 0
        %4693 = vmatpush.bf16.xpose.msra.mxu0 0
        %4694 = vmatpush.bf16.xpose.msra.mxu0 0
        %4695 = vmatpush.bf16.xpose.msra.mxu0 %v4686
        %4696 = vmatmul.bf16.gmra.mxu0 %v4683
        %v4697 = vpop.f32.mrf.mxu0
        %v4698 = vadd.f32 0.0, %v4697
        %v4699 = vpop.f32.mrf.mxu0
        %v4700 = vadd.f32 0.0, %v4699
        %4701 = vdwg.mxu0
        %v4702 = vmul.f32 %v4698, 0.10206208
        %v4703 = vmul.f32 %v4700, 0.10206208
        %v4704 = vsel %vm4449, %v4702, -inf
        %4705 = vmax.xlane.f32.xlu0 %v4704
        %v4706 = vpop.xlane.xlu0 %4705
        %v4707 = vsel %vm4449, %v4703, -inf
        %4708 = vmax.xlane.f32.xlu0 %v4707
        %v4709 = vpop.xlane.xlu0 %4708
        %v4710 = vsub.f32 %v4702, %v4706
        %v4711 = vsub.f32 %v4703, %v4709
        %v4712 = vmul.f32 %v4710, 1.442695
        %v4713 = vpow.pop %v4712
        %v4714 = vmul.f32 %v4711, 1.442695
        %v4715 = vpow.pop %v4714
        %v4716 = vsel %vm4449, %v4713, 0.0
        %4717 = vadd.xlane.f32.xlu0 %v4716
        %v4718 = vpop.xlane.xlu0 %4717
        %v4719 = vsel %vm4449, %v4715, 0.0
        %4720 = vadd.xlane.f32.xlu0 %v4719
        %v4721 = vpop.xlane.xlu0 %4720
        %v4722 = vrcp.pop %v4718
        %v4723 = vmul.f32 %v4718, %v4722
        %v4724 = vsub.f32 1.0, %v4723
        %v4725 = vmul.f32 %v4722, %v4724
        %v4726 = vadd.f32 %v4722, %v4725
        %vm4727 = vweird.f32 %v4718
        %vm4728 = vweird.f32 %v4722
        %vm4729 = vmor %vm4727, %vm4728
        %v4730 = vsel %vm4729, %v4722, %v4726
        %v4731 = vand.u32 2147483647, %v4718
        %vm4732 = vcmp.eq.f32.partialorder %v4731, 8.507059e+37
        %v4733 = vand.u32 %v4718, 2147483648
        %v4734 = vor.u32 1.1754944e-38, %v4733
        %v4735 = vsel %vm4732, %v4734, %v4730
        %v4736 = vmul.f32 %v4713, %v4735
        %v4737 = vrcp.pop %v4721
        %v4738 = vmul.f32 %v4721, %v4737
        %v4739 = vsub.f32 1.0, %v4738
        %v4740 = vmul.f32 %v4737, %v4739
        %v4741 = vadd.f32 %v4737, %v4740
        %vm4742 = vweird.f32 %v4721
        %vm4743 = vweird.f32 %v4737
        %vm4744 = vmor %vm4742, %vm4743
        %v4745 = vsel %vm4744, %v4737, %v4741
        %v4746 = vand.u32 2147483647, %v4721
        %vm4747 = vcmp.eq.f32.partialorder %v4746, 8.507059e+37
        %v4748 = vand.u32 %v4721, 2147483648
        %v4749 = vor.u32 1.1754944e-38, %v4748
        %v4750 = vsel %vm4747, %v4749, %v4745
        %v4751 = vmul.f32 %v4715, %v4750
        %v4752 = vpack.c.bf16 %v4751, %v4736
        %v4753 = vunpack.c.h.b16 %v4406
        %v4754 = vunpack.c.h.b16 %v4409
        %v4755 = vpack.c.b16 %v4754, %v4753
        %4756 = vrot.lane.b32.xlu0 %v4619, 64
        %v4757 = vpop.permute.xlu0 %4756
        %4758 = vrot.lane.b32.xlu0 %v4755, 64
        %v4759 = vpop.permute.xlu0 %4758
        %v4760 = vsel %vm4672, %v4757, %v4759
        %v4763 = vsel %vm4449, %v4752, 0
        %4765 = vmatpush.bf16.msra.mxu0 0
        %4766 = vmatpush.bf16.msra.mxu0 0
        %4767 = vmatpush.bf16.msra.mxu0 0
        %4768 = vmatpush.bf16.msra.mxu0 0
        %4769 = vmatpush.bf16.msra.mxu0 0
        %4770 = vmatpush.bf16.msra.mxu0 0
        %4771 = vmatpush.bf16.msra.mxu0 0
        %4772 = vmatpush.bf16.msra.mxu0 %v4760
        %4773 = vmatmul.bf16.gmra.mxu0 %v4763
        %v4774 = vpop.f32.mrf.mxu0
        %v4775 = vadd.f32 0.0, %v4774
        %v4776 = vpop.f32.mrf.mxu0
        %v4777 = vadd.f32 0.0, %v4776
        %4778 = vdwg.mxu0
        %v4779 = vpack.c.bf16 %v4775, %v4775
        %v4780 = vpack.c.bf16 %v4777, %v4777
        %4783 = vrot.lane.b32.xlu0 %v4779, 64
        %v4784 = vpop.permute.xlu0 %4783
        %4785 = vrot.lane.b32.xlu0 %v4780, 64
        %v4786 = vpop.permute.xlu0 %4785
        %v4787 = vrot.slane %v4784, 4
        %v4788 = vrot.slane %v4786, 4
        %v4789 = vsel %vm4672, %v4787, %v4784
        %v4790 = vsel %vm4672, %v4788, %v4786
        %vm4793 = vcmask 1043968
        %vm4794 = vcmask 261124
        %vm4795 = vmor %vm4794, %vm4793
        %4796 = vst.msk [vmem:[#allocation2 + $0x4] sm:$0xff] %vm4795, %v4789
        %4797 = vst.msk [vmem:[#allocation2 + $0x10] sm:$0xff] %vm4795, %v4790
        %4798 = vrot.lane.b32.xlu0 %v4667, 96
        %v4799 = vpop.permute.xlu0 %4798
        %4800 = vrot.lane.b32.xlu0 %v4676, 96
        %v4801 = vpop.permute.xlu0 %4800
        %v4803 = vsel %vm4426, %v4799, 0
        %v4806 = vsel %vm4426, %v4801, 0
        %4808 = vmatpush.bf16.xpose.msra.mxu0 0
        %4809 = vmatpush.bf16.xpose.msra.mxu0 0
        %4810 = vmatpush.bf16.xpose.msra.mxu0 0
        %4811 = vmatpush.bf16.xpose.msra.mxu0 0
        %4812 = vmatpush.bf16.xpose.msra.mxu0 0
        %4813 = vmatpush.bf16.xpose.msra.mxu0 0
        %4814 = vmatpush.bf16.xpose.msra.mxu0 0
        %4815 = vmatpush.bf16.xpose.msra.mxu0 %v4806
        %4816 = vmatmul.bf16.gmra.mxu0 %v4803
        %v4817 = vpop.f32.mrf.mxu0
        %v4818 = vadd.f32 0.0, %v4817
        %v4819 = vpop.f32.mrf.mxu0
        %v4820 = vadd.f32 0.0, %v4819
        %4821 = vdwg.mxu0
        %v4822 = vmul.f32 %v4818, 0.10206208
        %v4823 = vmul.f32 %v4820, 0.10206208
        %v4824 = vsel %vm4449, %v4822, -inf
        %4825 = vmax.xlane.f32.xlu0 %v4824
        %v4826 = vpop.xlane.xlu0 %4825
        %v4827 = vsel %vm4449, %v4823, -inf
        %4828 = vmax.xlane.f32.xlu0 %v4827
        %v4829 = vpop.xlane.xlu0 %4828
        %v4830 = vsub.f32 %v4822, %v4826
        %v4831 = vsub.f32 %v4823, %v4829
        %v4832 = vmul.f32 %v4830, 1.442695
        %v4833 = vpow.pop %v4832
        %v4834 = vmul.f32 %v4831, 1.442695
        %v4835 = vpow.pop %v4834
        %v4836 = vsel %vm4449, %v4833, 0.0
        %4837 = vadd.xlane.f32.xlu0 %v4836
        %v4838 = vpop.xlane.xlu0 %4837
        %v4839 = vsel %vm4449, %v4835, 0.0
        %4840 = vadd.xlane.f32.xlu0 %v4839
        %v4841 = vpop.xlane.xlu0 %4840
        %v4842 = vrcp.pop %v4838
        %v4843 = vmul.f32 %v4838, %v4842
        %v4844 = vsub.f32 1.0, %v4843
        %v4845 = vmul.f32 %v4842, %v4844
        %v4846 = vadd.f32 %v4842, %v4845
        %vm4847 = vweird.f32 %v4838
        %vm4848 = vweird.f32 %v4842
        %vm4849 = vmor %vm4847, %vm4848
        %v4850 = vsel %vm4849, %v4842, %v4846
        %v4851 = vand.u32 2147483647, %v4838
        %vm4852 = vcmp.eq.f32.partialorder %v4851, 8.507059e+37
        %v4853 = vand.u32 %v4838, 2147483648
        %v4854 = vor.u32 1.1754944e-38, %v4853
        %v4855 = vsel %vm4852, %v4854, %v4850
        %v4856 = vmul.f32 %v4833, %v4855
        %v4857 = vrcp.pop %v4841
        %v4858 = vmul.f32 %v4841, %v4857
        %v4859 = vsub.f32 1.0, %v4858
        %v4860 = vmul.f32 %v4857, %v4859
        %v4861 = vadd.f32 %v4857, %v4860
        %vm4862 = vweird.f32 %v4841
        %vm4863 = vweird.f32 %v4857
        %vm4864 = vmor %vm4862, %vm4863
        %v4865 = vsel %vm4864, %v4857, %v4861
        %v4866 = vand.u32 2147483647, %v4841
        %vm4867 = vcmp.eq.f32.partialorder %v4866, 8.507059e+37
        %v4868 = vand.u32 %v4841, 2147483648
        %v4869 = vor.u32 1.1754944e-38, %v4868
        %v4870 = vsel %vm4867, %v4869, %v4865
        %v4871 = vmul.f32 %v4835, %v4870
        %v4872 = vpack.c.bf16 %v4871, %v4856
        %4873 = vrot.lane.b32.xlu0 %v4755, 96
        %v4874 = vpop.permute.xlu0 %4873
        %v4877 = vsel %vm4449, %v4872, 0
        %4879 = vmatpush.bf16.msra.mxu0 0
        %4880 = vmatpush.bf16.msra.mxu0 0
        %4881 = vmatpush.bf16.msra.mxu0 0
        %4882 = vmatpush.bf16.msra.mxu0 0
        %4883 = vmatpush.bf16.msra.mxu0 0
        %4884 = vmatpush.bf16.msra.mxu0 0
        %4885 = vmatpush.bf16.msra.mxu0 0
        %4886 = vmatpush.bf16.msra.mxu0 %v4874
        %4887 = vmatmul.bf16.gmra.mxu0 %v4877
        %v4888 = vpop.f32.mrf.mxu0
        %v4889 = vadd.f32 0.0, %v4888
        %v4890 = vpop.f32.mrf.mxu0
        %v4891 = vadd.f32 0.0, %v4890
        %4892 = vdwg.mxu0
        %v4893 = vpack.c.bf16 %v4889, %v4889
        %v4894 = vpack.c.bf16 %v4891, %v4891
        %4897 = vrot.lane.b32.xlu0 %v4893, 32
        %v4898 = vpop.permute.xlu0 %4897
        %4899 = vrot.lane.b32.xlu0 %v4894, 32
        %v4900 = vpop.permute.xlu0 %4899
        %vm4903 = vcmask 1043712
        %4904 = vst.msk [vmem:[#allocation2 + $0x8] sm:$0xf] %vm4903, %v4898
        %4905 = vst.msk [vmem:[#allocation2 + $0x14] sm:$0xf] %vm4903, %v4900
        %v4908 = vunpack.c.l.b16 %v1914
        %v4909 = vunpack.c.l.b16 %v1916
        %v4910 = vpack.c.b16 %v4909, %v4908
        %v4913 = vunpack.c.l.b16 %v4410
        %v4914 = vunpack.c.l.b16 %v4413
        %v4915 = vpack.c.b16 %v4914, %v4913
        %v4917 = vsel %vm4426, %v4910, 0
        %v4920 = vsel %vm4426, %v4915, 0
        %4922 = vmatpush.bf16.xpose.msra.mxu0 0
        %4923 = vmatpush.bf16.xpose.msra.mxu0 0
        %4924 = vmatpush.bf16.xpose.msra.mxu0 0
        %4925 = vmatpush.bf16.xpose.msra.mxu0 0
        %4926 = vmatpush.bf16.xpose.msra.mxu0 0
        %4927 = vmatpush.bf16.xpose.msra.mxu0 0
        %4928 = vmatpush.bf16.xpose.msra.mxu0 0
        %4929 = vmatpush.bf16.xpose.msra.mxu0 %v4920
        %4930 = vmatmul.bf16.gmra.mxu0 %v4917
        %v4931 = vpop.f32.mrf.mxu0
        %v4932 = vadd.f32 0.0, %v4931
        %v4933 = vpop.f32.mrf.mxu0
        %v4934 = vadd.f32 0.0, %v4933
        %4935 = vdwg.mxu0
        %v4936 = vmul.f32 %v4932, 0.10206208
        %v4937 = vmul.f32 %v4934, 0.10206208
        %v4938 = vsel %vm4449, %v4936, -inf
        %4939 = vmax.xlane.f32.xlu0 %v4938
        %v4940 = vpop.xlane.xlu0 %4939
        %v4941 = vsel %vm4449, %v4937, -inf
        %4942 = vmax.xlane.f32.xlu0 %v4941
        %v4943 = vpop.xlane.xlu0 %4942
        %v4944 = vsub.f32 %v4936, %v4940
        %v4945 = vsub.f32 %v4937, %v4943
        %v4946 = vmul.f32 %v4944, 1.442695
        %v4947 = vpow.pop %v4946
        %v4948 = vmul.f32 %v4945, 1.442695
        %v4949 = vpow.pop %v4948
        %v4950 = vsel %vm4449, %v4947, 0.0
        %4951 = vadd.xlane.f32.xlu0 %v4950
        %v4952 = vpop.xlane.xlu0 %4951
        %v4953 = vsel %vm4449, %v4949, 0.0
        %4954 = vadd.xlane.f32.xlu0 %v4953
        %v4955 = vpop.xlane.xlu0 %4954
        %v4956 = vrcp.pop %v4952
        %v4957 = vmul.f32 %v4952, %v4956
        %v4958 = vsub.f32 1.0, %v4957
        %v4959 = vmul.f32 %v4956, %v4958
        %v4960 = vadd.f32 %v4956, %v4959
        %vm4961 = vweird.f32 %v4952
        %vm4962 = vweird.f32 %v4956
        %vm4963 = vmor %vm4961, %vm4962
        %v4964 = vsel %vm4963, %v4956, %v4960
        %v4965 = vand.u32 2147483647, %v4952
        %vm4966 = vcmp.eq.f32.partialorder %v4965, 8.507059e+37
        %v4967 = vand.u32 %v4952, 2147483648
        %v4968 = vor.u32 1.1754944e-38, %v4967
        %v4969 = vsel %vm4966, %v4968, %v4964
        %v4970 = vmul.f32 %v4947, %v4969
        %v4971 = vrcp.pop %v4955
        %v4972 = vmul.f32 %v4955, %v4971
        %v4973 = vsub.f32 1.0, %v4972
        %v4974 = vmul.f32 %v4971, %v4973
        %v4975 = vadd.f32 %v4971, %v4974
        %vm4976 = vweird.f32 %v4955
        %vm4977 = vweird.f32 %v4971
        %vm4978 = vmor %vm4976, %vm4977
        %v4979 = vsel %vm4978, %v4971, %v4975
        %v4980 = vand.u32 2147483647, %v4955
        %vm4981 = vcmp.eq.f32.partialorder %v4980, 8.507059e+37
        %v4982 = vand.u32 %v4955, 2147483648
        %v4983 = vor.u32 1.1754944e-38, %v4982
        %v4984 = vsel %vm4981, %v4983, %v4979
        %v4985 = vmul.f32 %v4949, %v4984
        %v4986 = vpack.c.bf16 %v4985, %v4970
        %v4989 = vunpack.c.h.b16 %v4411
        %v4990 = vunpack.c.h.b16 %v4414
        %v4991 = vpack.c.b16 %v4990, %v4989
        %v4994 = vsel %vm4449, %v4986, 0
        %4996 = vmatpush.bf16.msra.mxu0 0
        %4997 = vmatpush.bf16.msra.mxu0 0
        %4998 = vmatpush.bf16.msra.mxu0 0
        %4999 = vmatpush.bf16.msra.mxu0 0
        %5000 = vmatpush.bf16.msra.mxu0 0
        %5001 = vmatpush.bf16.msra.mxu0 0
        %5002 = vmatpush.bf16.msra.mxu0 0
        %5003 = vmatpush.bf16.msra.mxu0 %v4991
        %5004 = vmatmul.bf16.gmra.mxu0 %v4994
        %v5005 = vpop.f32.mrf.mxu0
        %v5006 = vadd.f32 0.0, %v5005
        %v5007 = vpop.f32.mrf.mxu0
        %v5008 = vadd.f32 0.0, %v5007
        %5009 = vdwg.mxu0
        %v5010 = vpack.c.bf16 %v5006, %v5006
        %v5011 = vpack.c.bf16 %v5008, %v5008
        %5012 = vst.msk [vmem:[#allocation2 + $0x18] sm:$0xf] %vm4524, %v5010
        %5013 = vst.msk [vmem:[#allocation2 + $0x24] sm:$0xf] %vm4524, %v5011
        %v5014 = vunpack.c.h.b16 %v1914
        %v5015 = vunpack.c.h.b16 %v1916
        %v5016 = vpack.c.b16 %v5015, %v5014
        %5017 = vrot.lane.b32.xlu0 %v4910, 32
        %v5018 = vpop.permute.xlu0 %5017
        %5019 = vrot.lane.b32.xlu0 %v5016, 32
        %v5020 = vpop.permute.xlu0 %5019
        %v5021 = vsel %vm4534, %v5018, %v5020
        %v5022 = vunpack.c.h.b16 %v4410
        %v5023 = vunpack.c.h.b16 %v4413
        %v5024 = vpack.c.b16 %v5023, %v5022
        %5025 = vrot.lane.b32.xlu0 %v4915, 32
        %v5026 = vpop.permute.xlu0 %5025
        %5027 = vrot.lane.b32.xlu0 %v5024, 32
        %v5028 = vpop.permute.xlu0 %5027
        %v5029 = vsel %vm4534, %v5026, %v5028
        %v5031 = vsel %vm4426, %v5021, 0
        %v5034 = vsel %vm4426, %v5029, 0
        %5036 = vmatpush.bf16.xpose.msra.mxu0 0
        %5037 = vmatpush.bf16.xpose.msra.mxu0 0
        %5038 = vmatpush.bf16.xpose.msra.mxu0 0
        %5039 = vmatpush.bf16.xpose.msra.mxu0 0
        %5040 = vmatpush.bf16.xpose.msra.mxu0 0
        %5041 = vmatpush.bf16.xpose.msra.mxu0 0
        %5042 = vmatpush.bf16.xpose.msra.mxu0 0
        %5043 = vmatpush.bf16.xpose.msra.mxu0 %v5034
        %5044 = vmatmul.bf16.gmra.mxu0 %v5031
        %v5045 = vpop.f32.mrf.mxu0
        %v5046 = vadd.f32 0.0, %v5045
        %v5047 = vpop.f32.mrf.mxu0
        %v5048 = vadd.f32 0.0, %v5047
        %5049 = vdwg.mxu0
        %v5050 = vmul.f32 %v5046, 0.10206208
        %v5051 = vmul.f32 %v5048, 0.10206208
        %v5052 = vsel %vm4449, %v5050, -inf
        %5053 = vmax.xlane.f32.xlu0 %v5052
        %v5054 = vpop.xlane.xlu0 %5053
        %v5055 = vsel %vm4449, %v5051, -inf
        %5056 = vmax.xlane.f32.xlu0 %v5055
        %v5057 = vpop.xlane.xlu0 %5056
        %v5058 = vsub.f32 %v5050, %v5054
        %v5059 = vsub.f32 %v5051, %v5057
        %v5060 = vmul.f32 %v5058, 1.442695
        %v5061 = vpow.pop %v5060
        %v5062 = vmul.f32 %v5059, 1.442695
        %v5063 = vpow.pop %v5062
        %v5064 = vsel %vm4449, %v5061, 0.0
        %5065 = vadd.xlane.f32.xlu0 %v5064
        %v5066 = vpop.xlane.xlu0 %5065
        %v5067 = vsel %vm4449, %v5063, 0.0
        %5068 = vadd.xlane.f32.xlu0 %v5067
        %v5069 = vpop.xlane.xlu0 %5068
        %v5070 = vrcp.pop %v5066
        %v5071 = vmul.f32 %v5066, %v5070
        %v5072 = vsub.f32 1.0, %v5071
        %v5073 = vmul.f32 %v5070, %v5072
        %v5074 = vadd.f32 %v5070, %v5073
        %vm5075 = vweird.f32 %v5066
        %vm5076 = vweird.f32 %v5070
        %vm5077 = vmor %vm5075, %vm5076
        %v5078 = vsel %vm5077, %v5070, %v5074
        %v5079 = vand.u32 2147483647, %v5066
        %vm5080 = vcmp.eq.f32.partialorder %v5079, 8.507059e+37
        %v5081 = vand.u32 %v5066, 2147483648
        %v5082 = vor.u32 1.1754944e-38, %v5081
        %v5083 = vsel %vm5080, %v5082, %v5078
        %v5084 = vmul.f32 %v5061, %v5083
        %v5085 = vrcp.pop %v5069
        %v5086 = vmul.f32 %v5069, %v5085
        %v5087 = vsub.f32 1.0, %v5086
        %v5088 = vmul.f32 %v5085, %v5087
        %v5089 = vadd.f32 %v5085, %v5088
        %vm5090 = vweird.f32 %v5069
        %vm5091 = vweird.f32 %v5085
        %vm5092 = vmor %vm5090, %vm5091
        %v5093 = vsel %vm5092, %v5085, %v5089
        %v5094 = vand.u32 2147483647, %v5069
        %vm5095 = vcmp.eq.f32.partialorder %v5094, 8.507059e+37
        %v5096 = vand.u32 %v5069, 2147483648
        %v5097 = vor.u32 1.1754944e-38, %v5096
        %v5098 = vsel %vm5095, %v5097, %v5093
        %v5099 = vmul.f32 %v5063, %v5098
        %v5100 = vpack.c.bf16 %v5099, %v5084
        %v5103 = vunpack.c.l.b16 %v4412
        %v5104 = vunpack.c.l.b16 %v4415
        %v5105 = vpack.c.b16 %v5104, %v5103
        %5106 = vrot.lane.b32.xlu0 %v4991, 32
        %v5107 = vpop.permute.xlu0 %5106
        %5108 = vrot.lane.b32.xlu0 %v5105, 32
        %v5109 = vpop.permute.xlu0 %5108
        %v5110 = vsel %vm4534, %v5107, %v5109
        %v5113 = vsel %vm4449, %v5100, 0
        %5115 = vmatpush.bf16.msra.mxu0 0
        %5116 = vmatpush.bf16.msra.mxu0 0
        %5117 = vmatpush.bf16.msra.mxu0 0
        %5118 = vmatpush.bf16.msra.mxu0 0
        %5119 = vmatpush.bf16.msra.mxu0 0
        %5120 = vmatpush.bf16.msra.mxu0 0
        %5121 = vmatpush.bf16.msra.mxu0 0
        %5122 = vmatpush.bf16.msra.mxu0 %v5110
        %5123 = vmatmul.bf16.gmra.mxu0 %v5113
        %v5124 = vpop.f32.mrf.mxu0
        %v5125 = vadd.f32 0.0, %v5124
        %v5126 = vpop.f32.mrf.mxu0
        %v5127 = vadd.f32 0.0, %v5126
        %5128 = vdwg.mxu0
        %v5129 = vpack.c.bf16 %v5125, %v5125
        %v5130 = vpack.c.bf16 %v5127, %v5127
        %5133 = vrot.lane.b32.xlu0 %v5129, 96
        %v5134 = vpop.permute.xlu0 %5133
        %5135 = vrot.lane.b32.xlu0 %v5130, 96
        %v5136 = vpop.permute.xlu0 %5135
        %v5137 = vrot.slane %v5134, 4
        %v5138 = vrot.slane %v5136, 4
        %v5139 = vsel %vm4653, %v5137, %v5134
        %v5140 = vsel %vm4653, %v5138, %v5136
        %5143 = vst.msk [vmem:[#allocation2 + $0x18] sm:$0xff] %vm4660, %v5139
        %5144 = vst.msk [vmem:[#allocation2 + $0x24] sm:$0xff] %vm4660, %v5140
        %v5147 = vunpack.c.l.b16 %v1915
        %v5148 = vunpack.c.l.b16 %v1917
        %v5149 = vpack.c.b16 %v5148, %v5147
        %5150 = vrot.lane.b32.xlu0 %v5016, 64
        %v5151 = vpop.permute.xlu0 %5150
        %5152 = vrot.lane.b32.xlu0 %v5149, 64
        %v5153 = vpop.permute.xlu0 %5152
        %v5154 = vsel %vm4672, %v5151, %v5153
        %v5155 = vunpack.c.l.b16 %v4411
        %v5156 = vunpack.c.l.b16 %v4414
        %v5157 = vpack.c.b16 %v5156, %v5155
        %5158 = vrot.lane.b32.xlu0 %v5024, 64
        %v5159 = vpop.permute.xlu0 %5158
        %5160 = vrot.lane.b32.xlu0 %v5157, 64
        %v5161 = vpop.permute.xlu0 %5160
        %v5162 = vsel %vm4672, %v5159, %v5161
        %v5164 = vsel %vm4426, %v5154, 0
        %v5167 = vsel %vm4426, %v5162, 0
        %5169 = vmatpush.bf16.xpose.msra.mxu0 0
        %5170 = vmatpush.bf16.xpose.msra.mxu0 0
        %5171 = vmatpush.bf16.xpose.msra.mxu0 0
        %5172 = vmatpush.bf16.xpose.msra.mxu0 0
        %5173 = vmatpush.bf16.xpose.msra.mxu0 0
        %5174 = vmatpush.bf16.xpose.msra.mxu0 0
        %5175 = vmatpush.bf16.xpose.msra.mxu0 0
        %5176 = vmatpush.bf16.xpose.msra.mxu0 %v5167
        %5177 = vmatmul.bf16.gmra.mxu0 %v5164
        %v5178 = vpop.f32.mrf.mxu0
        %v5179 = vadd.f32 0.0, %v5178
        %v5180 = vpop.f32.mrf.mxu0
        %v5181 = vadd.f32 0.0, %v5180
        %5182 = vdwg.mxu0
        %v5183 = vmul.f32 %v5179, 0.10206208
        %v5184 = vmul.f32 %v5181, 0.10206208
        %v5185 = vsel %vm4449, %v5183, -inf
        %5186 = vmax.xlane.f32.xlu0 %v5185
        %v5187 = vpop.xlane.xlu0 %5186
        %v5188 = vsel %vm4449, %v5184, -inf
        %5189 = vmax.xlane.f32.xlu0 %v5188
        %v5190 = vpop.xlane.xlu0 %5189
        %v5191 = vsub.f32 %v5183, %v5187
        %v5192 = vsub.f32 %v5184, %v5190
        %v5193 = vmul.f32 %v5191, 1.442695
        %v5194 = vpow.pop %v5193
        %v5195 = vmul.f32 %v5192, 1.442695
        %v5196 = vpow.pop %v5195
        %v5197 = vsel %vm4449, %v5194, 0.0
        %5198 = vadd.xlane.f32.xlu0 %v5197
        %v5199 = vpop.xlane.xlu0 %5198
        %v5200 = vsel %vm4449, %v5196, 0.0
        %5201 = vadd.xlane.f32.xlu0 %v5200
        %v5202 = vpop.xlane.xlu0 %5201
        %v5203 = vrcp.pop %v5199
        %v5204 = vmul.f32 %v5199, %v5203
        %v5205 = vsub.f32 1.0, %v5204
        %v5206 = vmul.f32 %v5203, %v5205
        %v5207 = vadd.f32 %v5203, %v5206
        %vm5208 = vweird.f32 %v5199
        %vm5209 = vweird.f32 %v5203
        %vm5210 = vmor %vm5208, %vm5209
        %v5211 = vsel %vm5210, %v5203, %v5207
        %v5212 = vand.u32 2147483647, %v5199
        %vm5213 = vcmp.eq.f32.partialorder %v5212, 8.507059e+37
        %v5214 = vand.u32 %v5199, 2147483648
        %v5215 = vor.u32 1.1754944e-38, %v5214
        %v5216 = vsel %vm5213, %v5215, %v5211
        %v5217 = vmul.f32 %v5194, %v5216
        %v5218 = vrcp.pop %v5202
        %v5219 = vmul.f32 %v5202, %v5218
        %v5220 = vsub.f32 1.0, %v5219
        %v5221 = vmul.f32 %v5218, %v5220
        %v5222 = vadd.f32 %v5218, %v5221
        %vm5223 = vweird.f32 %v5202
        %vm5224 = vweird.f32 %v5218
        %vm5225 = vmor %vm5223, %vm5224
        %v5226 = vsel %vm5225, %v5218, %v5222
        %v5227 = vand.u32 2147483647, %v5202
        %vm5228 = vcmp.eq.f32.partialorder %v5227, 8.507059e+37
        %v5229 = vand.u32 %v5202, 2147483648
        %v5230 = vor.u32 1.1754944e-38, %v5229
        %v5231 = vsel %vm5228, %v5230, %v5226
        %v5232 = vmul.f32 %v5196, %v5231
        %v5233 = vpack.c.bf16 %v5232, %v5217
        %v5234 = vunpack.c.h.b16 %v4412
        %v5235 = vunpack.c.h.b16 %v4415
        %v5236 = vpack.c.b16 %v5235, %v5234
        %5237 = vrot.lane.b32.xlu0 %v5105, 64
        %v5238 = vpop.permute.xlu0 %5237
        %5239 = vrot.lane.b32.xlu0 %v5236, 64
        %v5240 = vpop.permute.xlu0 %5239
        %v5241 = vsel %vm4672, %v5238, %v5240
        %v5244 = vsel %vm4449, %v5233, 0
        %5246 = vmatpush.bf16.msra.mxu0 0
        %5247 = vmatpush.bf16.msra.mxu0 0
        %5248 = vmatpush.bf16.msra.mxu0 0
        %5249 = vmatpush.bf16.msra.mxu0 0
        %5250 = vmatpush.bf16.msra.mxu0 0
        %5251 = vmatpush.bf16.msra.mxu0 0
        %5252 = vmatpush.bf16.msra.mxu0 0
        %5253 = vmatpush.bf16.msra.mxu0 %v5241
        %5254 = vmatmul.bf16.gmra.mxu0 %v5244
        %v5255 = vpop.f32.mrf.mxu0
        %v5256 = vadd.f32 0.0, %v5255
        %v5257 = vpop.f32.mrf.mxu0
        %v5258 = vadd.f32 0.0, %v5257
        %5259 = vdwg.mxu0
        %v5260 = vpack.c.bf16 %v5256, %v5256
        %v5261 = vpack.c.bf16 %v5258, %v5258
        %5264 = vrot.lane.b32.xlu0 %v5260, 64
        %v5265 = vpop.permute.xlu0 %5264
        %5266 = vrot.lane.b32.xlu0 %v5261, 64
        %v5267 = vpop.permute.xlu0 %5266
        %v5268 = vrot.slane %v5265, 4
        %v5269 = vrot.slane %v5267, 4
        %v5270 = vsel %vm4672, %v5268, %v5265
        %v5271 = vsel %vm4672, %v5269, %v5267
        %5274 = vst.msk [vmem:[#allocation2 + $0x1c] sm:$0xff] %vm4795, %v5270
        %5275 = vst.msk [vmem:[#allocation2 + $0x28] sm:$0xff] %vm4795, %v5271
        %5276 = vrot.lane.b32.xlu0 %v5149, 96
        %v5277 = vpop.permute.xlu0 %5276
        %5278 = vrot.lane.b32.xlu0 %v5157, 96
        %v5279 = vpop.permute.xlu0 %5278
        %v5281 = vsel %vm4426, %v5277, 0
        %v5284 = vsel %vm4426, %v5279, 0
        %5286 = vmatpush.bf16.xpose.msra.mxu0 0
        %5287 = vmatpush.bf16.xpose.msra.mxu0 0
        %5288 = vmatpush.bf16.xpose.msra.mxu0 0
        %5289 = vmatpush.bf16.xpose.msra.mxu0 0
        %5290 = vmatpush.bf16.xpose.msra.mxu0 0
        %5291 = vmatpush.bf16.xpose.msra.mxu0 0
        %5292 = vmatpush.bf16.xpose.msra.mxu0 0
        %5293 = vmatpush.bf16.xpose.msra.mxu0 %v5284
        %5294 = vmatmul.bf16.gmra.mxu0 %v5281
        %v5295 = vpop.f32.mrf.mxu0
        %v5296 = vadd.f32 0.0, %v5295
        %v5297 = vpop.f32.mrf.mxu0
        %v5298 = vadd.f32 0.0, %v5297
        %5299 = vdwg.mxu0
        %v5300 = vmul.f32 %v5296, 0.10206208
        %v5301 = vmul.f32 %v5298, 0.10206208
        %v5302 = vsel %vm4449, %v5300, -inf
        %5303 = vmax.xlane.f32.xlu0 %v5302
        %v5304 = vpop.xlane.xlu0 %5303
        %v5305 = vsel %vm4449, %v5301, -inf
        %5306 = vmax.xlane.f32.xlu0 %v5305
        %v5307 = vpop.xlane.xlu0 %5306
        %v5308 = vsub.f32 %v5300, %v5304
        %v5309 = vsub.f32 %v5301, %v5307
        %v5310 = vmul.f32 %v5308, 1.442695
        %v5311 = vpow.pop %v5310
        %v5312 = vmul.f32 %v5309, 1.442695
        %v5313 = vpow.pop %v5312
        %v5314 = vsel %vm4449, %v5311, 0.0
        %5315 = vadd.xlane.f32.xlu0 %v5314
        %v5316 = vpop.xlane.xlu0 %5315
        %v5317 = vsel %vm4449, %v5313, 0.0
        %5318 = vadd.xlane.f32.xlu0 %v5317
        %v5319 = vpop.xlane.xlu0 %5318
        %v5320 = vrcp.pop %v5316
        %v5321 = vmul.f32 %v5316, %v5320
        %v5322 = vsub.f32 1.0, %v5321
        %v5323 = vmul.f32 %v5320, %v5322
        %v5324 = vadd.f32 %v5320, %v5323
        %vm5325 = vweird.f32 %v5316
        %vm5326 = vweird.f32 %v5320
        %vm5327 = vmor %vm5325, %vm5326
        %v5328 = vsel %vm5327, %v5320, %v5324
        %v5329 = vand.u32 2147483647, %v5316
        %vm5330 = vcmp.eq.f32.partialorder %v5329, 8.507059e+37
        %v5331 = vand.u32 %v5316, 2147483648
        %v5332 = vor.u32 1.1754944e-38, %v5331
        %v5333 = vsel %vm5330, %v5332, %v5328
        %v5334 = vmul.f32 %v5311, %v5333
        %v5335 = vrcp.pop %v5319
        %v5336 = vmul.f32 %v5319, %v5335
        %v5337 = vsub.f32 1.0, %v5336
        %v5338 = vmul.f32 %v5335, %v5337
        %v5339 = vadd.f32 %v5335, %v5338
        %vm5340 = vweird.f32 %v5319
        %vm5341 = vweird.f32 %v5335
        %vm5342 = vmor %vm5340, %vm5341
        %v5343 = vsel %vm5342, %v5335, %v5339
        %v5344 = vand.u32 2147483647, %v5319
        %vm5345 = vcmp.eq.f32.partialorder %v5344, 8.507059e+37
        %v5346 = vand.u32 %v5319, 2147483648
        %v5347 = vor.u32 1.1754944e-38, %v5346
        %v5348 = vsel %vm5345, %v5347, %v5343
        %v5349 = vmul.f32 %v5313, %v5348
        %v5350 = vpack.c.bf16 %v5349, %v5334
        %5351 = vrot.lane.b32.xlu0 %v5236, 96
        %v5352 = vpop.permute.xlu0 %5351
        %v5355 = vsel %vm4449, %v5350, 0
        %5357 = vmatpush.bf16.msra.mxu0 0
        %5358 = vmatpush.bf16.msra.mxu0 0
        %5359 = vmatpush.bf16.msra.mxu0 0
        %5360 = vmatpush.bf16.msra.mxu0 0
        %5361 = vmatpush.bf16.msra.mxu0 0
        %5362 = vmatpush.bf16.msra.mxu0 0
        %5363 = vmatpush.bf16.msra.mxu0 0
        %5364 = vmatpush.bf16.msra.mxu0 %v5352
        %5365 = vmatmul.bf16.gmra.mxu0 %v5355
        %v5366 = vpop.f32.mrf.mxu0
        %v5367 = vadd.f32 0.0, %v5366
        %v5368 = vpop.f32.mrf.mxu0
        %v5369 = vadd.f32 0.0, %v5368
        %5370 = vdwg.mxu0
        %v5371 = vpack.c.bf16 %v5367, %v5367
        %v5372 = vpack.c.bf16 %v5369, %v5369
        %5375 = vrot.lane.b32.xlu0 %v5371, 32
        %v5376 = vpop.permute.xlu0 %5375
        %5377 = vrot.lane.b32.xlu0 %v5372, 32
        %v5378 = vpop.permute.xlu0 %5377
        %5381 = vst.msk [vmem:[#allocation2 + $0x20] sm:$0xf] %vm4903, %v5376
        %5382 = vst.msk [vmem:[#allocation2 + $0x2c] sm:$0xf] %vm4903, %v5378
        %v5383 = vld [vmem:[#allocation2] sm:$0xff]
        %v5384 = vld [vmem:[#allocation2 + $0x8] sm:$0xf]
        %v5385 = vld [vmem:[#allocation2 + $0xc] sm:$0xff]
        %v5386 = vld [vmem:[#allocation2 + $0x14] sm:$0xf]
        %v5387 = vld [vmem:[#allocation2 + $0x18] sm:$0xff]
        %v5388 = vld [vmem:[#allocation2 + $0x20] sm:$0xf]
        %v5389 = vld [vmem:[#allocation2 + $0x24] sm:$0xff]
        %v5390 = vld [vmem:[#allocation2 + $0x2c] sm:$0xf]
        %v5391 = vld [vmem:[%s456] sm:$0xff]
        %v5392 = vld [vmem:[%s456 + $0x8] sm:$0xff]
        %v5393 = vld [vmem:[%s456 + $0x10] sm:$0xff]
        %v5394 = vld [vmem:[%s456 + $0x18] sm:$0xff]
        %v5395 = vld [vmem:[%s456 + $0x20] sm:$0xff]
        %v5396 = vld [vmem:[%s456 + $0x28] sm:$0xff]
        %v5397 = vld [vmem:[%s456 + $0x30] sm:$0xff]
        %v5398 = vld [vmem:[%s456 + $0x38] sm:$0xff]
        %v5399 = vld [vmem:[%s456 + $0x40] sm:$0xff]
        %v5400 = vld [vmem:[%s456 + $0x48] sm:$0xff]
        %v5401 = vld [vmem:[%s456 + $0x50] sm:$0xff]
        %v5402 = vld [vmem:[%s456 + $0x58] sm:$0xff]
        %v5403 = vld [vmem:[%s456 + $0x60] sm:$0xff]
        %v5404 = vld [vmem:[%s456 + $0x68] sm:$0xff]
        %v5405 = vld [vmem:[%s456 + $0x70] sm:$0xff]
        %v5406 = vld [vmem:[%s456 + $0x78] sm:$0xff]
        %v5407 = vld [vmem:[%s456 + $0x80] sm:$0xff]
        %v5408 = vld [vmem:[%s456 + $0x88] sm:$0xff]
        %v5409 = vld [vmem:[%s456 + $0x90] sm:$0xff]
        %v5410 = vld [vmem:[%s456 + $0x98] sm:$0xff]
        %v5411 = vld [vmem:[%s456 + $0xa0] sm:$0xff]
        %v5412 = vld [vmem:[%s456 + $0xa8] sm:$0xff]
        %v5413 = vld [vmem:[%s456 + $0xb0] sm:$0xff]
        %v5414 = vld [vmem:[%s456 + $0xb8] sm:$0xff]
        %v5415 = vld [vmem:[%s456 + $0xc0] sm:$0xff]
        %v5416 = vld [vmem:[%s456 + $0xc8] sm:$0xff]
        %v5417 = vld [vmem:[%s456 + $0xd0] sm:$0xff]
        %v5418 = vld [vmem:[%s456 + $0xd8] sm:$0xff]
        %v5419 = vld [vmem:[%s456 + $0xe0] sm:$0xff]
        %v5420 = vld [vmem:[%s456 + $0xe8] sm:$0xff]
        %v5421 = vld [vmem:[%s456 + $0xf0] sm:$0xff]
        %v5422 = vld [vmem:[%s456 + $0xf8] sm:$0xff]
        %v5423 = vld [vmem:[%s456 + $0x100] sm:$0xff]
        %v5424 = vld [vmem:[%s456 + $0x108] sm:$0xff]
        %v5425 = vld [vmem:[%s456 + $0x110] sm:$0xff]
        %v5426 = vld [vmem:[%s456 + $0x118] sm:$0xff]
        %v5427 = vld [vmem:[%s456 + $0x120] sm:$0xff]
        %v5428 = vld [vmem:[%s456 + $0x128] sm:$0xff]
        %v5429 = vld [vmem:[%s456 + $0x130] sm:$0xff]
        %v5430 = vld [vmem:[%s456 + $0x138] sm:$0xff]
        %v5431 = vld [vmem:[%s456 + $0x140] sm:$0xff]
        %v5432 = vld [vmem:[%s456 + $0x148] sm:$0xff]
        %v5433 = vld [vmem:[%s456 + $0x150] sm:$0xff]
        %v5434 = vld [vmem:[%s456 + $0x158] sm:$0xff]
        %v5435 = vld [vmem:[%s456 + $0x160] sm:$0xff]
        %v5436 = vld [vmem:[%s456 + $0x168] sm:$0xff]
        %v5437 = vld [vmem:[%s456 + $0x170] sm:$0xff]
        %v5438 = vld [vmem:[%s456 + $0x178] sm:$0xff]
        %v5439 = vld [vmem:[%s456 + $0x180] sm:$0xff]
        %v5440 = vld [vmem:[%s456 + $0x188] sm:$0xff]
        %v5441 = vld [vmem:[%s456 + $0x190] sm:$0xff]
        %v5442 = vld [vmem:[%s456 + $0x198] sm:$0xff]
        %v5443 = vld [vmem:[%s456 + $0x1a0] sm:$0xff]
        %v5444 = vld [vmem:[%s456 + $0x1a8] sm:$0xff]
        %v5445 = vld [vmem:[%s456 + $0x1b0] sm:$0xff]
        %v5446 = vld [vmem:[%s456 + $0x1b8] sm:$0xff]
        %v5447 = vld [vmem:[%s456 + $0x1c0] sm:$0xff]
        %v5448 = vld [vmem:[%s456 + $0x1c8] sm:$0xff]
        %v5449 = vld [vmem:[%s456 + $0x1d0] sm:$0xff]
        %v5450 = vld [vmem:[%s456 + $0x1d8] sm:$0xff]
        %v5451 = vld [vmem:[%s456 + $0x1e0] sm:$0xff]
        %v5452 = vld [vmem:[%s456 + $0x1e8] sm:$0xff]
        %v5453 = vld [vmem:[%s456 + $0x1f0] sm:$0xff]
        %v5454 = vld [vmem:[%s456 + $0x1f8] sm:$0xff]
        %v5455 = vld [vmem:[%s456 + $0x200] sm:$0xff]
        %v5456 = vld [vmem:[%s456 + $0x208] sm:$0xff]
        %v5457 = vld [vmem:[%s456 + $0x210] sm:$0xff]
        %v5458 = vld [vmem:[%s456 + $0x218] sm:$0xff]
        %v5459 = vld [vmem:[%s456 + $0x220] sm:$0xff]
        %v5460 = vld [vmem:[%s456 + $0x228] sm:$0xff]
        %v5461 = vld [vmem:[%s456 + $0x230] sm:$0xff]
        %v5462 = vld [vmem:[%s456 + $0x238] sm:$0xff]
        %v5463 = vld [vmem:[%s456 + $0x240] sm:$0xff]
        %v5464 = vld [vmem:[%s456 + $0x248] sm:$0xff]
        %v5465 = vld [vmem:[%s456 + $0x250] sm:$0xff]
        %v5466 = vld [vmem:[%s456 + $0x258] sm:$0xff]
        %v5467 = vld [vmem:[%s456 + $0x260] sm:$0xff]
        %v5468 = vld [vmem:[%s456 + $0x268] sm:$0xff]
        %v5469 = vld [vmem:[%s456 + $0x270] sm:$0xff]
        %v5470 = vld [vmem:[%s456 + $0x278] sm:$0xff]
        %v5471 = vld [vmem:[%s456 + $0x280] sm:$0xff]
        %v5472 = vld [vmem:[%s456 + $0x288] sm:$0xff]
        %v5473 = vld [vmem:[%s456 + $0x290] sm:$0xff]
        %v5474 = vld [vmem:[%s456 + $0x298] sm:$0xff]
        %v5475 = vld [vmem:[%s456 + $0x2a0] sm:$0xff]
        %v5476 = vld [vmem:[%s456 + $0x2a8] sm:$0xff]
        %v5477 = vld [vmem:[%s456 + $0x2b0] sm:$0xff]
        %v5478 = vld [vmem:[%s456 + $0x2b8] sm:$0xff]
        %v5479 = vld [vmem:[%s456 + $0x2c0] sm:$0xff]
        %v5480 = vld [vmem:[%s456 + $0x2c8] sm:$0xff]
        %v5481 = vld [vmem:[%s456 + $0x2d0] sm:$0xff]
        %v5482 = vld [vmem:[%s456 + $0x2d8] sm:$0xff]
        %v5483 = vld [vmem:[%s456 + $0x2e0] sm:$0xff]
        %v5484 = vld [vmem:[%s456 + $0x2e8] sm:$0xff]
        %v5485 = vld [vmem:[%s456 + $0x2f0] sm:$0xff]
        %v5486 = vld [vmem:[%s456 + $0x2f8] sm:$0xff]
        %v5487 = vld [vmem:[%s456 + $0x300] sm:$0xff]
        %v5488 = vld [vmem:[%s456 + $0x308] sm:$0xff]
        %v5489 = vld [vmem:[%s456 + $0x310] sm:$0xff]
        %v5490 = vld [vmem:[%s456 + $0x318] sm:$0xff]
        %v5491 = vld [vmem:[%s456 + $0x320] sm:$0xff]
        %v5492 = vld [vmem:[%s456 + $0x328] sm:$0xff]
        %v5493 = vld [vmem:[%s456 + $0x330] sm:$0xff]
        %v5494 = vld [vmem:[%s456 + $0x338] sm:$0xff]
        %v5495 = vld [vmem:[%s456 + $0x340] sm:$0xff]
        %v5496 = vld [vmem:[%s456 + $0x348] sm:$0xff]
        %v5497 = vld [vmem:[%s456 + $0x350] sm:$0xff]
        %v5498 = vld [vmem:[%s456 + $0x358] sm:$0xff]
        %v5499 = vld [vmem:[%s456 + $0x360] sm:$0xff]
        %v5500 = vld [vmem:[%s456 + $0x368] sm:$0xff]
        %v5501 = vld [vmem:[%s456 + $0x370] sm:$0xff]
        %v5502 = vld [vmem:[%s456 + $0x378] sm:$0xff]
        %v5503 = vld [vmem:[%s456 + $0x380] sm:$0xff]
        %v5504 = vld [vmem:[%s456 + $0x388] sm:$0xff]
        %v5505 = vld [vmem:[%s456 + $0x390] sm:$0xff]
        %v5506 = vld [vmem:[%s456 + $0x398] sm:$0xff]
        %v5507 = vld [vmem:[%s456 + $0x3a0] sm:$0xff]
        %v5508 = vld [vmem:[%s456 + $0x3a8] sm:$0xff]
        %v5509 = vld [vmem:[%s456 + $0x3b0] sm:$0xff]
        %v5510 = vld [vmem:[%s456 + $0x3b8] sm:$0xff]
        %v5511 = vld [vmem:[%s456 + $0x3c0] sm:$0xff]
        %v5512 = vld [vmem:[%s456 + $0x3c8] sm:$0xff]
        %v5513 = vld [vmem:[%s456 + $0x3d0] sm:$0xff]
        %v5514 = vld [vmem:[%s456 + $0x3d8] sm:$0xff]
        %v5515 = vld [vmem:[%s456 + $0x3e0] sm:$0xff]
        %v5516 = vld [vmem:[%s456 + $0x3e8] sm:$0xff]
        %v5517 = vld [vmem:[%s456 + $0x3f0] sm:$0xff]
        %v5518 = vld [vmem:[%s456 + $0x3f8] sm:$0xff]
        %v5519 = vld [vmem:[%s456 + $0x400] sm:$0xff]
        %v5520 = vld [vmem:[%s456 + $0x408] sm:$0xff]
        %v5521 = vld [vmem:[%s456 + $0x410] sm:$0xff]
        %v5522 = vld [vmem:[%s456 + $0x418] sm:$0xff]
        %v5523 = vld [vmem:[%s456 + $0x420] sm:$0xff]
        %v5524 = vld [vmem:[%s456 + $0x428] sm:$0xff]
        %v5525 = vld [vmem:[%s456 + $0x430] sm:$0xff]
        %v5526 = vld [vmem:[%s456 + $0x438] sm:$0xff]
        %v5527 = vld [vmem:[%s456 + $0x440] sm:$0xff]
        %v5528 = vld [vmem:[%s456 + $0x448] sm:$0xff]
        %v5529 = vld [vmem:[%s456 + $0x450] sm:$0xff]
        %v5530 = vld [vmem:[%s456 + $0x458] sm:$0xff]
        %v5531 = vld [vmem:[%s456 + $0x460] sm:$0xff]
        %v5532 = vld [vmem:[%s456 + $0x468] sm:$0xff]
        %v5533 = vld [vmem:[%s456 + $0x470] sm:$0xff]
        %v5534 = vld [vmem:[%s456 + $0x478] sm:$0xff]
        %v5543 = vunpack.c.l.b16 %v5383
        %v5544 = vunpack.c.h.b16 %v5383
        %v5545 = vunpack.c.l.b16 %v5384
        %v5546 = vunpack.c.l.b16 %v5385
        %v5547 = vunpack.c.h.b16 %v5385
        %v5548 = vunpack.c.l.b16 %v5386
        %v5549 = vunpack.c.l.b16 %v5387
        %v5550 = vunpack.c.h.b16 %v5387
        %v5551 = vunpack.c.l.b16 %v5388
        %v5552 = vunpack.c.l.b16 %v5389
        %v5553 = vunpack.c.h.b16 %v5389
        %v5554 = vunpack.c.l.b16 %v5390
        %v5555 = vpack.c.b16 %v5546, %v5543
        %v5556 = vpack.c.b16 %v5547, %v5544
        %v5557 = vpack.c.b16 %v5548, %v5545
        %v5558 = vpack.c.b16 %v5552, %v5549
        %v5559 = vpack.c.b16 %v5553, %v5550
        %v5560 = vpack.c.b16 %v5554, %v5551
        %v5711 = vunpack.c.l.b16 %v5391
        %v5712 = vunpack.c.h.b16 %v5391
        %v5713 = vunpack.c.l.b16 %v5392
        %v5714 = vunpack.c.h.b16 %v5392
        %v5715 = vunpack.c.l.b16 %v5393
        %v5716 = vunpack.c.h.b16 %v5393
        %v5717 = vunpack.c.l.b16 %v5394
        %v5718 = vunpack.c.h.b16 %v5394
        %v5719 = vunpack.c.l.b16 %v5395
        %v5720 = vunpack.c.h.b16 %v5395
        %v5721 = vunpack.c.l.b16 %v5396
        %v5722 = vunpack.c.h.b16 %v5396
        %v5723 = vunpack.c.l.b16 %v5397
        %v5724 = vunpack.c.h.b16 %v5397
        %v5725 = vunpack.c.l.b16 %v5398
        %v5726 = vunpack.c.h.b16 %v5398
        %v5727 = vunpack.c.l.b16 %v5399
        %v5728 = vunpack.c.h.b16 %v5399
        %v5729 = vunpack.c.l.b16 %v5400
        %v5730 = vunpack.c.h.b16 %v5400
        %v5731 = vunpack.c.l.b16 %v5401
        %v5732 = vunpack.c.h.b16 %v5401
        %v5733 = vunpack.c.l.b16 %v5402
        %v5734 = vunpack.c.h.b16 %v5402
        %v5735 = vunpack.c.l.b16 %v5403
        %v5736 = vunpack.c.h.b16 %v5403
        %v5737 = vunpack.c.l.b16 %v5404
        %v5738 = vunpack.c.h.b16 %v5404
        %v5739 = vunpack.c.l.b16 %v5405
        %v5740 = vunpack.c.h.b16 %v5405
        %v5741 = vunpack.c.l.b16 %v5406
        %v5742 = vunpack.c.h.b16 %v5406
        %v5743 = vunpack.c.l.b16 %v5407
        %v5744 = vunpack.c.h.b16 %v5407
        %v5745 = vunpack.c.l.b16 %v5408
        %v5746 = vunpack.c.h.b16 %v5408
        %v5747 = vunpack.c.l.b16 %v5409
        %v5748 = vunpack.c.h.b16 %v5409
        %v5749 = vunpack.c.l.b16 %v5410
        %v5750 = vunpack.c.h.b16 %v5410
        %v5751 = vunpack.c.l.b16 %v5411
        %v5752 = vunpack.c.h.b16 %v5411
        %v5753 = vunpack.c.l.b16 %v5412
        %v5754 = vunpack.c.h.b16 %v5412
        %v5755 = vunpack.c.l.b16 %v5413
        %v5756 = vunpack.c.h.b16 %v5413
        %v5757 = vunpack.c.l.b16 %v5414
        %v5758 = vunpack.c.h.b16 %v5414
        %v5759 = vunpack.c.l.b16 %v5415
        %v5760 = vunpack.c.h.b16 %v5415
        %v5761 = vunpack.c.l.b16 %v5416
        %v5762 = vunpack.c.h.b16 %v5416
        %v5763 = vunpack.c.l.b16 %v5417
        %v5764 = vunpack.c.h.b16 %v5417
        %v5765 = vunpack.c.l.b16 %v5418
        %v5766 = vunpack.c.h.b16 %v5418
        %v5767 = vunpack.c.l.b16 %v5419
        %v5768 = vunpack.c.h.b16 %v5419
        %v5769 = vunpack.c.l.b16 %v5420
        %v5770 = vunpack.c.h.b16 %v5420
        %v5771 = vunpack.c.l.b16 %v5421
        %v5772 = vunpack.c.h.b16 %v5421
        %v5773 = vunpack.c.l.b16 %v5422
        %v5774 = vunpack.c.h.b16 %v5422
        %v5775 = vunpack.c.l.b16 %v5423
        %v5776 = vunpack.c.h.b16 %v5423
        %v5777 = vunpack.c.l.b16 %v5424
        %v5778 = vunpack.c.h.b16 %v5424
        %v5779 = vunpack.c.l.b16 %v5425
        %v5780 = vunpack.c.h.b16 %v5425
        %v5781 = vunpack.c.l.b16 %v5426
        %v5782 = vunpack.c.h.b16 %v5426
        %v5783 = vunpack.c.l.b16 %v5427
        %v5784 = vunpack.c.h.b16 %v5427
        %v5785 = vunpack.c.l.b16 %v5428
        %v5786 = vunpack.c.h.b16 %v5428
        %v5787 = vunpack.c.l.b16 %v5429
        %v5788 = vunpack.c.h.b16 %v5429
        %v5789 = vunpack.c.l.b16 %v5430
        %v5790 = vunpack.c.h.b16 %v5430
        %v5791 = vunpack.c.l.b16 %v5431
        %v5792 = vunpack.c.h.b16 %v5431
        %v5793 = vunpack.c.l.b16 %v5432
        %v5794 = vunpack.c.h.b16 %v5432
        %v5795 = vunpack.c.l.b16 %v5433
        %v5796 = vunpack.c.h.b16 %v5433
        %v5797 = vunpack.c.l.b16 %v5434
        %v5798 = vunpack.c.h.b16 %v5434
        %v5799 = vunpack.c.l.b16 %v5435
        %v5800 = vunpack.c.h.b16 %v5435
        %v5801 = vunpack.c.l.b16 %v5436
        %v5802 = vunpack.c.h.b16 %v5436
        %v5803 = vunpack.c.l.b16 %v5437
        %v5804 = vunpack.c.h.b16 %v5437
        %v5805 = vunpack.c.l.b16 %v5438
        %v5806 = vunpack.c.h.b16 %v5438
        %v5807 = vunpack.c.l.b16 %v5439
        %v5808 = vunpack.c.h.b16 %v5439
        %v5809 = vunpack.c.l.b16 %v5440
        %v5810 = vunpack.c.h.b16 %v5440
        %v5811 = vunpack.c.l.b16 %v5441
        %v5812 = vunpack.c.h.b16 %v5441
        %v5813 = vunpack.c.l.b16 %v5442
        %v5814 = vunpack.c.h.b16 %v5442
        %v5815 = vunpack.c.l.b16 %v5443
        %v5816 = vunpack.c.h.b16 %v5443
        %v5817 = vunpack.c.l.b16 %v5444
        %v5818 = vunpack.c.h.b16 %v5444
        %v5819 = vunpack.c.l.b16 %v5445
        %v5820 = vunpack.c.h.b16 %v5445
        %v5821 = vunpack.c.l.b16 %v5446
        %v5822 = vunpack.c.h.b16 %v5446
        %v5823 = vunpack.c.l.b16 %v5447
        %v5824 = vunpack.c.h.b16 %v5447
        %v5825 = vunpack.c.l.b16 %v5448
        %v5826 = vunpack.c.h.b16 %v5448
        %v5827 = vunpack.c.l.b16 %v5449
        %v5828 = vunpack.c.h.b16 %v5449
        %v5829 = vunpack.c.l.b16 %v5450
        %v5830 = vunpack.c.h.b16 %v5450
        %v5831 = vunpack.c.l.b16 %v5451
        %v5832 = vunpack.c.h.b16 %v5451
        %v5833 = vunpack.c.l.b16 %v5452
        %v5834 = vunpack.c.h.b16 %v5452
        %v5835 = vunpack.c.l.b16 %v5453
        %v5836 = vunpack.c.h.b16 %v5453
        %v5837 = vunpack.c.l.b16 %v5454
        %v5838 = vunpack.c.h.b16 %v5454
        %v5839 = vunpack.c.l.b16 %v5455
        %v5840 = vunpack.c.h.b16 %v5455
        %v5841 = vunpack.c.l.b16 %v5456
        %v5842 = vunpack.c.h.b16 %v5456
        %v5843 = vunpack.c.l.b16 %v5457
        %v5844 = vunpack.c.h.b16 %v5457
        %v5845 = vunpack.c.l.b16 %v5458
        %v5846 = vunpack.c.h.b16 %v5458
        %v5847 = vunpack.c.l.b16 %v5459
        %v5848 = vunpack.c.h.b16 %v5459
        %v5849 = vunpack.c.l.b16 %v5460
        %v5850 = vunpack.c.h.b16 %v5460
        %v5851 = vunpack.c.l.b16 %v5461
        %v5852 = vunpack.c.h.b16 %v5461
        %v5853 = vunpack.c.l.b16 %v5462
        %v5854 = vunpack.c.h.b16 %v5462
        %v5855 = vunpack.c.l.b16 %v5463
        %v5856 = vunpack.c.h.b16 %v5463
        %v5857 = vunpack.c.l.b16 %v5464
        %v5858 = vunpack.c.h.b16 %v5464
        %v5859 = vunpack.c.l.b16 %v5465
        %v5860 = vunpack.c.h.b16 %v5465
        %v5861 = vunpack.c.l.b16 %v5466
        %v5862 = vunpack.c.h.b16 %v5466
        %v5863 = vunpack.c.l.b16 %v5467
        %v5864 = vunpack.c.h.b16 %v5467
        %v5865 = vunpack.c.l.b16 %v5468
        %v5866 = vunpack.c.h.b16 %v5468
        %v5867 = vunpack.c.l.b16 %v5469
        %v5868 = vunpack.c.h.b16 %v5469
        %v5869 = vunpack.c.l.b16 %v5470
        %v5870 = vunpack.c.h.b16 %v5470
        %v5871 = vunpack.c.l.b16 %v5471
        %v5872 = vunpack.c.h.b16 %v5471
        %v5873 = vunpack.c.l.b16 %v5472
        %v5874 = vunpack.c.h.b16 %v5472
        %v5875 = vunpack.c.l.b16 %v5473
        %v5876 = vunpack.c.h.b16 %v5473
        %v5877 = vunpack.c.l.b16 %v5474
        %v5878 = vunpack.c.h.b16 %v5474
        %v5879 = vunpack.c.l.b16 %v5475
        %v5880 = vunpack.c.h.b16 %v5475
        %v5881 = vunpack.c.l.b16 %v5476
        %v5882 = vunpack.c.h.b16 %v5476
        %v5883 = vunpack.c.l.b16 %v5477
        %v5884 = vunpack.c.h.b16 %v5477
        %v5885 = vunpack.c.l.b16 %v5478
        %v5886 = vunpack.c.h.b16 %v5478
        %v5887 = vunpack.c.l.b16 %v5479
        %v5888 = vunpack.c.h.b16 %v5479
        %v5889 = vunpack.c.l.b16 %v5480
        %v5890 = vunpack.c.h.b16 %v5480
        %v5891 = vunpack.c.l.b16 %v5481
        %v5892 = vunpack.c.h.b16 %v5481
        %v5893 = vunpack.c.l.b16 %v5482
        %v5894 = vunpack.c.h.b16 %v5482
        %v5895 = vunpack.c.l.b16 %v5483
        %v5896 = vunpack.c.h.b16 %v5483
        %v5897 = vunpack.c.l.b16 %v5484
        %v5898 = vunpack.c.h.b16 %v5484
        %v5899 = vunpack.c.l.b16 %v5485
        %v5900 = vunpack.c.h.b16 %v5485
        %v5901 = vunpack.c.l.b16 %v5486
        %v5902 = vunpack.c.h.b16 %v5486
        %v5903 = vunpack.c.l.b16 %v5487
        %v5904 = vunpack.c.h.b16 %v5487
        %v5905 = vunpack.c.l.b16 %v5488
        %v5906 = vunpack.c.h.b16 %v5488
        %v5907 = vunpack.c.l.b16 %v5489
        %v5908 = vunpack.c.h.b16 %v5489
        %v5909 = vunpack.c.l.b16 %v5490
        %v5910 = vunpack.c.h.b16 %v5490
        %v5911 = vunpack.c.l.b16 %v5491
        %v5912 = vunpack.c.h.b16 %v5491
        %v5913 = vunpack.c.l.b16 %v5492
        %v5914 = vunpack.c.h.b16 %v5492
        %v5915 = vunpack.c.l.b16 %v5493
        %v5916 = vunpack.c.h.b16 %v5493
        %v5917 = vunpack.c.l.b16 %v5494
        %v5918 = vunpack.c.h.b16 %v5494
        %v5919 = vunpack.c.l.b16 %v5495
        %v5920 = vunpack.c.h.b16 %v5495
        %v5921 = vunpack.c.l.b16 %v5496
        %v5922 = vunpack.c.h.b16 %v5496
        %v5923 = vunpack.c.l.b16 %v5497
        %v5924 = vunpack.c.h.b16 %v5497
        %v5925 = vunpack.c.l.b16 %v5498
        %v5926 = vunpack.c.h.b16 %v5498
        %v5927 = vunpack.c.l.b16 %v5499
        %v5928 = vunpack.c.h.b16 %v5499
        %v5929 = vunpack.c.l.b16 %v5500
        %v5930 = vunpack.c.h.b16 %v5500
        %v5931 = vunpack.c.l.b16 %v5501
        %v5932 = vunpack.c.h.b16 %v5501
        %v5933 = vunpack.c.l.b16 %v5502
        %v5934 = vunpack.c.h.b16 %v5502
        %v5935 = vunpack.c.l.b16 %v5503
        %v5936 = vunpack.c.h.b16 %v5503
        %v5937 = vunpack.c.l.b16 %v5504
        %v5938 = vunpack.c.h.b16 %v5504
        %v5939 = vunpack.c.l.b16 %v5505
        %v5940 = vunpack.c.h.b16 %v5505
        %v5941 = vunpack.c.l.b16 %v5506
        %v5942 = vunpack.c.h.b16 %v5506
        %v5943 = vunpack.c.l.b16 %v5507
        %v5944 = vunpack.c.h.b16 %v5507
        %v5945 = vunpack.c.l.b16 %v5508
        %v5946 = vunpack.c.h.b16 %v5508
        %v5947 = vunpack.c.l.b16 %v5509
        %v5948 = vunpack.c.h.b16 %v5509
        %v5949 = vunpack.c.l.b16 %v5510
        %v5950 = vunpack.c.h.b16 %v5510
        %v5951 = vunpack.c.l.b16 %v5511
        %v5952 = vunpack.c.h.b16 %v5511
        %v5953 = vunpack.c.l.b16 %v5512
        %v5954 = vunpack.c.h.b16 %v5512
        %v5955 = vunpack.c.l.b16 %v5513
        %v5956 = vunpack.c.h.b16 %v5513
        %v5957 = vunpack.c.l.b16 %v5514
        %v5958 = vunpack.c.h.b16 %v5514
        %v5959 = vunpack.c.l.b16 %v5515
        %v5960 = vunpack.c.h.b16 %v5515
        %v5961 = vunpack.c.l.b16 %v5516
        %v5962 = vunpack.c.h.b16 %v5516
        %v5963 = vunpack.c.l.b16 %v5517
        %v5964 = vunpack.c.h.b16 %v5517
        %v5965 = vunpack.c.l.b16 %v5518
        %v5966 = vunpack.c.h.b16 %v5518
        %v5967 = vunpack.c.l.b16 %v5519
        %v5968 = vunpack.c.h.b16 %v5519
        %v5969 = vunpack.c.l.b16 %v5520
        %v5970 = vunpack.c.h.b16 %v5520
        %v5971 = vunpack.c.l.b16 %v5521
        %v5972 = vunpack.c.h.b16 %v5521
        %v5973 = vunpack.c.l.b16 %v5522
        %v5974 = vunpack.c.h.b16 %v5522
        %v5975 = vunpack.c.l.b16 %v5523
        %v5976 = vunpack.c.h.b16 %v5523
        %v5977 = vunpack.c.l.b16 %v5524
        %v5978 = vunpack.c.h.b16 %v5524
        %v5979 = vunpack.c.l.b16 %v5525
        %v5980 = vunpack.c.h.b16 %v5525
        %v5981 = vunpack.c.l.b16 %v5526
        %v5982 = vunpack.c.h.b16 %v5526
        %v5983 = vunpack.c.l.b16 %v5527
        %v5984 = vunpack.c.h.b16 %v5527
        %v5985 = vunpack.c.l.b16 %v5528
        %v5986 = vunpack.c.h.b16 %v5528
        %v5987 = vunpack.c.l.b16 %v5529
        %v5988 = vunpack.c.h.b16 %v5529
        %v5989 = vunpack.c.l.b16 %v5530
        %v5990 = vunpack.c.h.b16 %v5530
        %v5991 = vunpack.c.l.b16 %v5531
        %v5992 = vunpack.c.h.b16 %v5531
        %v5993 = vunpack.c.l.b16 %v5532
        %v5994 = vunpack.c.h.b16 %v5532
        %v5995 = vunpack.c.l.b16 %v5533
        %v5996 = vunpack.c.h.b16 %v5533
        %v5997 = vunpack.c.l.b16 %v5534
        %v5998 = vunpack.c.h.b16 %v5534
        %v5999 = vpack.c.b16 %v5717, %v5711
        %v6000 = vpack.c.b16 %v5718, %v5712
        %v6001 = vpack.c.b16 %v5719, %v5713
        %v6002 = vpack.c.b16 %v5720, %v5714
        %v6003 = vpack.c.b16 %v5721, %v5715
        %v6004 = vpack.c.b16 %v5722, %v5716
        %v6005 = vpack.c.b16 %v5729, %v5723
        %v6006 = vpack.c.b16 %v5730, %v5724
        %v6007 = vpack.c.b16 %v5731, %v5725
        %v6008 = vpack.c.b16 %v5732, %v5726
        %v6009 = vpack.c.b16 %v5733, %v5727
        %v6010 = vpack.c.b16 %v5734, %v5728
        %v6011 = vpack.c.b16 %v5741, %v5735
        %v6012 = vpack.c.b16 %v5742, %v5736
        %v6013 = vpack.c.b16 %v5743, %v5737
        %v6014 = vpack.c.b16 %v5744, %v5738
        %v6015 = vpack.c.b16 %v5745, %v5739
        %v6016 = vpack.c.b16 %v5746, %v5740
        %v6017 = vpack.c.b16 %v5753, %v5747
        %v6018 = vpack.c.b16 %v5754, %v5748
        %v6019 = vpack.c.b16 %v5755, %v5749
        %v6020 = vpack.c.b16 %v5756, %v5750
        %v6021 = vpack.c.b16 %v5757, %v5751
        %v6022 = vpack.c.b16 %v5758, %v5752
        %v6023 = vpack.c.b16 %v5765, %v5759
        %v6024 = vpack.c.b16 %v5766, %v5760
        %v6025 = vpack.c.b16 %v5767, %v5761
        %v6026 = vpack.c.b16 %v5768, %v5762
        %v6027 = vpack.c.b16 %v5769, %v5763
        %v6028 = vpack.c.b16 %v5770, %v5764
        %v6029 = vpack.c.b16 %v5777, %v5771
        %v6030 = vpack.c.b16 %v5778, %v5772
        %v6031 = vpack.c.b16 %v5779, %v5773
        %v6032 = vpack.c.b16 %v5780, %v5774
        %v6033 = vpack.c.b16 %v5781, %v5775
        %v6034 = vpack.c.b16 %v5782, %v5776
        %v6035 = vpack.c.b16 %v5789, %v5783
        %v6036 = vpack.c.b16 %v5790, %v5784
        %v6037 = vpack.c.b16 %v5791, %v5785
        %v6038 = vpack.c.b16 %v5792, %v5786
        %v6039 = vpack.c.b16 %v5793, %v5787
        %v6040 = vpack.c.b16 %v5794, %v5788
        %v6041 = vpack.c.b16 %v5801, %v5795
        %v6042 = vpack.c.b16 %v5802, %v5796
        %v6043 = vpack.c.b16 %v5803, %v5797
        %v6044 = vpack.c.b16 %v5804, %v5798
        %v6045 = vpack.c.b16 %v5805, %v5799
        %v6046 = vpack.c.b16 %v5806, %v5800
        %v6047 = vpack.c.b16 %v5813, %v5807
        %v6048 = vpack.c.b16 %v5814, %v5808
        %v6049 = vpack.c.b16 %v5815, %v5809
        %v6050 = vpack.c.b16 %v5816, %v5810
        %v6051 = vpack.c.b16 %v5817, %v5811
        %v6052 = vpack.c.b16 %v5818, %v5812
        %v6053 = vpack.c.b16 %v5825, %v5819
        %v6054 = vpack.c.b16 %v5826, %v5820
        %v6055 = vpack.c.b16 %v5827, %v5821
        %v6056 = vpack.c.b16 %v5828, %v5822
        %v6057 = vpack.c.b16 %v5829, %v5823
        %v6058 = vpack.c.b16 %v5830, %v5824
        %v6059 = vpack.c.b16 %v5837, %v5831
        %v6060 = vpack.c.b16 %v5838, %v5832
        %v6061 = vpack.c.b16 %v5839, %v5833
        %v6062 = vpack.c.b16 %v5840, %v5834
        %v6063 = vpack.c.b16 %v5841, %v5835
        %v6064 = vpack.c.b16 %v5842, %v5836
        %v6065 = vpack.c.b16 %v5849, %v5843
        %v6066 = vpack.c.b16 %v5850, %v5844
        %v6067 = vpack.c.b16 %v5851, %v5845
        %v6068 = vpack.c.b16 %v5852, %v5846
        %v6069 = vpack.c.b16 %v5853, %v5847
        %v6070 = vpack.c.b16 %v5854, %v5848
        %v6071 = vpack.c.b16 %v5861, %v5855
        %v6072 = vpack.c.b16 %v5862, %v5856
        %v6073 = vpack.c.b16 %v5863, %v5857
        %v6074 = vpack.c.b16 %v5864, %v5858
        %v6075 = vpack.c.b16 %v5865, %v5859
        %v6076 = vpack.c.b16 %v5866, %v5860
        %v6077 = vpack.c.b16 %v5873, %v5867
        %v6078 = vpack.c.b16 %v5874, %v5868
        %v6079 = vpack.c.b16 %v5875, %v5869
        %v6080 = vpack.c.b16 %v5876, %v5870
        %v6081 = vpack.c.b16 %v5877, %v5871
        %v6082 = vpack.c.b16 %v5878, %v5872
        %v6083 = vpack.c.b16 %v5885, %v5879
        %v6084 = vpack.c.b16 %v5886, %v5880
        %v6085 = vpack.c.b16 %v5887, %v5881
        %v6086 = vpack.c.b16 %v5888, %v5882
        %v6087 = vpack.c.b16 %v5889, %v5883
        %v6088 = vpack.c.b16 %v5890, %v5884
        %v6089 = vpack.c.b16 %v5897, %v5891
        %v6090 = vpack.c.b16 %v5898, %v5892
        %v6091 = vpack.c.b16 %v5899, %v5893
        %v6092 = vpack.c.b16 %v5900, %v5894
        %v6093 = vpack.c.b16 %v5901, %v5895
        %v6094 = vpack.c.b16 %v5902, %v5896
        %v6095 = vpack.c.b16 %v5909, %v5903
        %v6096 = vpack.c.b16 %v5910, %v5904
        %v6097 = vpack.c.b16 %v5911, %v5905
        %v6098 = vpack.c.b16 %v5912, %v5906
        %v6099 = vpack.c.b16 %v5913, %v5907
        %v6100 = vpack.c.b16 %v5914, %v5908
        %v6101 = vpack.c.b16 %v5921, %v5915
        %v6102 = vpack.c.b16 %v5922, %v5916
        %v6103 = vpack.c.b16 %v5923, %v5917
        %v6104 = vpack.c.b16 %v5924, %v5918
        %v6105 = vpack.c.b16 %v5925, %v5919
        %v6106 = vpack.c.b16 %v5926, %v5920
        %v6107 = vpack.c.b16 %v5933, %v5927
        %v6108 = vpack.c.b16 %v5934, %v5928
        %v6109 = vpack.c.b16 %v5935, %v5929
        %v6110 = vpack.c.b16 %v5936, %v5930
        %v6111 = vpack.c.b16 %v5937, %v5931
        %v6112 = vpack.c.b16 %v5938, %v5932
        %v6113 = vpack.c.b16 %v5945, %v5939
        %v6114 = vpack.c.b16 %v5946, %v5940
        %v6115 = vpack.c.b16 %v5947, %v5941
        %v6116 = vpack.c.b16 %v5948, %v5942
        %v6117 = vpack.c.b16 %v5949, %v5943
        %v6118 = vpack.c.b16 %v5950, %v5944
        %v6119 = vpack.c.b16 %v5957, %v5951
        %v6120 = vpack.c.b16 %v5958, %v5952
        %v6121 = vpack.c.b16 %v5959, %v5953
        %v6122 = vpack.c.b16 %v5960, %v5954
        %v6123 = vpack.c.b16 %v5961, %v5955
        %v6124 = vpack.c.b16 %v5962, %v5956
        %v6125 = vpack.c.b16 %v5969, %v5963
        %v6126 = vpack.c.b16 %v5970, %v5964
        %v6127 = vpack.c.b16 %v5971, %v5965
        %v6128 = vpack.c.b16 %v5972, %v5966
        %v6129 = vpack.c.b16 %v5973, %v5967
        %v6130 = vpack.c.b16 %v5974, %v5968
        %v6131 = vpack.c.b16 %v5981, %v5975
        %v6132 = vpack.c.b16 %v5982, %v5976
        %v6133 = vpack.c.b16 %v5983, %v5977
        %v6134 = vpack.c.b16 %v5984, %v5978
        %v6135 = vpack.c.b16 %v5985, %v5979
        %v6136 = vpack.c.b16 %v5986, %v5980
        %v6137 = vpack.c.b16 %v5993, %v5987
        %v6138 = vpack.c.b16 %v5994, %v5988
        %v6139 = vpack.c.b16 %v5995, %v5989
        %v6140 = vpack.c.b16 %v5996, %v5990
        %v6141 = vpack.c.b16 %v5997, %v5991
        %v6142 = vpack.c.b16 %v5998, %v5992
        %6287 = vmatpush.bf16.msra.mxu0 %v6041
        %6288 = vmatpush.bf16.msra.mxu0 %v6035
        %6289 = vmatpush.bf16.msra.mxu0 %v6029
        %6290 = vmatpush.bf16.msra.mxu0 %v6023
        %6291 = vmatpush.bf16.msra.mxu0 %v6017
        %6292 = vmatpush.bf16.msra.mxu0 %v6011
        %6293 = vmatpush.bf16.msra.mxu0 %v6005
        %6294 = vmatpush.bf16.msra.mxu0 %v5999
        %6295 = vmatmul.bf16.gmra.mxu0 %v5555
        %v6296 = vpop.f32.mrf.mxu0
        %v6297 = vadd.f32 0.0, %v6296
        %v6298 = vpop.f32.mrf.mxu0
        %v6299 = vadd.f32 0.0, %v6298
        %6300 = vmatmul.bf16.gmra.mxu0 %v5558
        %v6301 = vpop.f32.mrf.mxu0
        %v6302 = vadd.f32 0.0, %v6301
        %v6303 = vpop.f32.mrf.mxu0
        %v6304 = vadd.f32 0.0, %v6303
        %6305 = vdwg.mxu0
        %6306 = vmatpush.bf16.msra.mxu0 %v6089
        %6307 = vmatpush.bf16.msra.mxu0 %v6083
        %6308 = vmatpush.bf16.msra.mxu0 %v6077
        %6309 = vmatpush.bf16.msra.mxu0 %v6071
        %6310 = vmatpush.bf16.msra.mxu0 %v6065
        %6311 = vmatpush.bf16.msra.mxu0 %v6059
        %6312 = vmatpush.bf16.msra.mxu0 %v6053
        %6313 = vmatpush.bf16.msra.mxu0 %v6047
        %6314 = vmatmul.bf16.gmra.mxu0 %v5556
        %v6315 = vpop.f32.mrf.mxu0
        %v6316 = vadd.f32 %v6297, %v6315
        %v6317 = vpop.f32.mrf.mxu0
        %v6318 = vadd.f32 %v6299, %v6317
        %6319 = vmatmul.bf16.gmra.mxu0 %v5559
        %v6320 = vpop.f32.mrf.mxu0
        %v6321 = vadd.f32 %v6302, %v6320
        %v6322 = vpop.f32.mrf.mxu0
        %v6323 = vadd.f32 %v6304, %v6322
        %6324 = vdwg.mxu0
        %6325 = vmatpush.bf16.msra.mxu0 %v6137
        %6326 = vmatpush.bf16.msra.mxu0 %v6131
        %6327 = vmatpush.bf16.msra.mxu0 %v6125
        %6328 = vmatpush.bf16.msra.mxu0 %v6119
        %6329 = vmatpush.bf16.msra.mxu0 %v6113
        %6330 = vmatpush.bf16.msra.mxu0 %v6107
        %6331 = vmatpush.bf16.msra.mxu0 %v6101
        %6332 = vmatpush.bf16.msra.mxu0 %v6095
        %6333 = vmatmul.bf16.gmra.mxu0 %v5557
        %v6334 = vpop.f32.mrf.mxu0
        %v6335 = vadd.f32 %v6316, %v6334
        %v6336 = vpop.f32.mrf.mxu0
        %v6337 = vadd.f32 %v6318, %v6336
        %6338 = vmatmul.bf16.gmra.mxu0 %v5560
        %v6339 = vpop.f32.mrf.mxu0
        %v6340 = vadd.f32 %v6321, %v6339
        %v6341 = vpop.f32.mrf.mxu0
        %v6342 = vadd.f32 %v6323, %v6341
        %6343 = vdwg.mxu0
        %6344 = vmatpush.bf16.msra.mxu0 %v6042
        %6345 = vmatpush.bf16.msra.mxu0 %v6036
        %6346 = vmatpush.bf16.msra.mxu0 %v6030
        %6347 = vmatpush.bf16.msra.mxu0 %v6024
        %6348 = vmatpush.bf16.msra.mxu0 %v6018
        %6349 = vmatpush.bf16.msra.mxu0 %v6012
        %6350 = vmatpush.bf16.msra.mxu0 %v6006
        %6351 = vmatpush.bf16.msra.mxu0 %v6000
        %6352 = vmatmul.bf16.gmra.mxu0 %v5555
        %v6353 = vpop.f32.mrf.mxu0
        %v6354 = vadd.f32 0.0, %v6353
        %v6355 = vpop.f32.mrf.mxu0
        %v6356 = vadd.f32 0.0, %v6355
        %6357 = vmatmul.bf16.gmra.mxu0 %v5558
        %v6358 = vpop.f32.mrf.mxu0
        %v6359 = vadd.f32 0.0, %v6358
        %v6360 = vpop.f32.mrf.mxu0
        %v6361 = vadd.f32 0.0, %v6360
        %6362 = vdwg.mxu0
        %6363 = vmatpush.bf16.msra.mxu0 %v6090
        %6364 = vmatpush.bf16.msra.mxu0 %v6084
        %6365 = vmatpush.bf16.msra.mxu0 %v6078
        %6366 = vmatpush.bf16.msra.mxu0 %v6072
        %6367 = vmatpush.bf16.msra.mxu0 %v6066
        %6368 = vmatpush.bf16.msra.mxu0 %v6060
        %6369 = vmatpush.bf16.msra.mxu0 %v6054
        %6370 = vmatpush.bf16.msra.mxu0 %v6048
        %6371 = vmatmul.bf16.gmra.mxu0 %v5556
        %v6372 = vpop.f32.mrf.mxu0
        %v6373 = vadd.f32 %v6354, %v6372
        %v6374 = vpop.f32.mrf.mxu0
        %v6375 = vadd.f32 %v6356, %v6374
        %6376 = vmatmul.bf16.gmra.mxu0 %v5559
        %v6377 = vpop.f32.mrf.mxu0
        %v6378 = vadd.f32 %v6359, %v6377
        %v6379 = vpop.f32.mrf.mxu0
        %v6380 = vadd.f32 %v6361, %v6379
        %6381 = vdwg.mxu0
        %6382 = vmatpush.bf16.msra.mxu0 %v6138
        %6383 = vmatpush.bf16.msra.mxu0 %v6132
        %6384 = vmatpush.bf16.msra.mxu0 %v6126
        %6385 = vmatpush.bf16.msra.mxu0 %v6120
        %6386 = vmatpush.bf16.msra.mxu0 %v6114
        %6387 = vmatpush.bf16.msra.mxu0 %v6108
        %6388 = vmatpush.bf16.msra.mxu0 %v6102
        %6389 = vmatpush.bf16.msra.mxu0 %v6096
        %6390 = vmatmul.bf16.gmra.mxu0 %v5557
        %v6391 = vpop.f32.mrf.mxu0
        %v6392 = vadd.f32 %v6373, %v6391
        %v6393 = vpop.f32.mrf.mxu0
        %v6394 = vadd.f32 %v6375, %v6393
        %6395 = vmatmul.bf16.gmra.mxu0 %v5560
        %v6396 = vpop.f32.mrf.mxu0
        %v6397 = vadd.f32 %v6378, %v6396
        %v6398 = vpop.f32.mrf.mxu0
        %v6399 = vadd.f32 %v6380, %v6398
        %6400 = vdwg.mxu0
        %6401 = vmatpush.bf16.msra.mxu0 %v6043
        %6402 = vmatpush.bf16.msra.mxu0 %v6037
        %6403 = vmatpush.bf16.msra.mxu0 %v6031
        %6404 = vmatpush.bf16.msra.mxu0 %v6025
        %6405 = vmatpush.bf16.msra.mxu0 %v6019
        %6406 = vmatpush.bf16.msra.mxu0 %v6013
        %6407 = vmatpush.bf16.msra.mxu0 %v6007
        %6408 = vmatpush.bf16.msra.mxu0 %v6001
        %6409 = vmatmul.bf16.gmra.mxu0 %v5555
        %v6410 = vpop.f32.mrf.mxu0
        %v6411 = vadd.f32 0.0, %v6410
        %v6412 = vpop.f32.mrf.mxu0
        %v6413 = vadd.f32 0.0, %v6412
        %6414 = vmatmul.bf16.gmra.mxu0 %v5558
        %v6415 = vpop.f32.mrf.mxu0
        %v6416 = vadd.f32 0.0, %v6415
        %v6417 = vpop.f32.mrf.mxu0
        %v6418 = vadd.f32 0.0, %v6417
        %6419 = vdwg.mxu0
        %6420 = vmatpush.bf16.msra.mxu0 %v6091
        %6421 = vmatpush.bf16.msra.mxu0 %v6085
        %6422 = vmatpush.bf16.msra.mxu0 %v6079
        %6423 = vmatpush.bf16.msra.mxu0 %v6073
        %6424 = vmatpush.bf16.msra.mxu0 %v6067
        %6425 = vmatpush.bf16.msra.mxu0 %v6061
        %6426 = vmatpush.bf16.msra.mxu0 %v6055
        %6427 = vmatpush.bf16.msra.mxu0 %v6049
        %6428 = vmatmul.bf16.gmra.mxu0 %v5556
        %v6429 = vpop.f32.mrf.mxu0
        %v6430 = vadd.f32 %v6411, %v6429
        %v6431 = vpop.f32.mrf.mxu0
        %v6432 = vadd.f32 %v6413, %v6431
        %6433 = vmatmul.bf16.gmra.mxu0 %v5559
        %v6434 = vpop.f32.mrf.mxu0
        %v6435 = vadd.f32 %v6416, %v6434
        %v6436 = vpop.f32.mrf.mxu0
        %v6437 = vadd.f32 %v6418, %v6436
        %6438 = vdwg.mxu0
        %6439 = vmatpush.bf16.msra.mxu0 %v6139
        %6440 = vmatpush.bf16.msra.mxu0 %v6133
        %6441 = vmatpush.bf16.msra.mxu0 %v6127
        %6442 = vmatpush.bf16.msra.mxu0 %v6121
        %6443 = vmatpush.bf16.msra.mxu0 %v6115
        %6444 = vmatpush.bf16.msra.mxu0 %v6109
        %6445 = vmatpush.bf16.msra.mxu0 %v6103
        %6446 = vmatpush.bf16.msra.mxu0 %v6097
        %6447 = vmatmul.bf16.gmra.mxu0 %v5557
        %v6448 = vpop.f32.mrf.mxu0
        %v6449 = vadd.f32 %v6430, %v6448
        %v6450 = vpop.f32.mrf.mxu0
        %v6451 = vadd.f32 %v6432, %v6450
        %6452 = vmatmul.bf16.gmra.mxu0 %v5560
        %v6453 = vpop.f32.mrf.mxu0
        %v6454 = vadd.f32 %v6435, %v6453
        %v6455 = vpop.f32.mrf.mxu0
        %v6456 = vadd.f32 %v6437, %v6455
        %6457 = vdwg.mxu0
        %6458 = vmatpush.bf16.msra.mxu0 %v6044
        %6459 = vmatpush.bf16.msra.mxu0 %v6038
        %6460 = vmatpush.bf16.msra.mxu0 %v6032
        %6461 = vmatpush.bf16.msra.mxu0 %v6026
        %6462 = vmatpush.bf16.msra.mxu0 %v6020
        %6463 = vmatpush.bf16.msra.mxu0 %v6014
        %6464 = vmatpush.bf16.msra.mxu0 %v6008
        %6465 = vmatpush.bf16.msra.mxu0 %v6002
        %6466 = vmatmul.bf16.gmra.mxu0 %v5555
        %v6467 = vpop.f32.mrf.mxu0
        %v6468 = vadd.f32 0.0, %v6467
        %v6469 = vpop.f32.mrf.mxu0
        %v6470 = vadd.f32 0.0, %v6469
        %6471 = vmatmul.bf16.gmra.mxu0 %v5558
        %v6472 = vpop.f32.mrf.mxu0
        %v6473 = vadd.f32 0.0, %v6472
        %v6474 = vpop.f32.mrf.mxu0
        %v6475 = vadd.f32 0.0, %v6474
        %6476 = vdwg.mxu0
        %6477 = vmatpush.bf16.msra.mxu0 %v6092
        %6478 = vmatpush.bf16.msra.mxu0 %v6086
        %6479 = vmatpush.bf16.msra.mxu0 %v6080
        %6480 = vmatpush.bf16.msra.mxu0 %v6074
        %6481 = vmatpush.bf16.msra.mxu0 %v6068
        %6482 = vmatpush.bf16.msra.mxu0 %v6062
        %6483 = vmatpush.bf16.msra.mxu0 %v6056
        %6484 = vmatpush.bf16.msra.mxu0 %v6050
        %6485 = vmatmul.bf16.gmra.mxu0 %v5556
        %v6486 = vpop.f32.mrf.mxu0
        %v6487 = vadd.f32 %v6468, %v6486
        %v6488 = vpop.f32.mrf.mxu0
        %v6489 = vadd.f32 %v6470, %v6488
        %6490 = vmatmul.bf16.gmra.mxu0 %v5559
        %v6491 = vpop.f32.mrf.mxu0
        %v6492 = vadd.f32 %v6473, %v6491
        %v6493 = vpop.f32.mrf.mxu0
        %v6494 = vadd.f32 %v6475, %v6493
        %6495 = vdwg.mxu0
        %6496 = vmatpush.bf16.msra.mxu0 %v6140
        %6497 = vmatpush.bf16.msra.mxu0 %v6134
        %6498 = vmatpush.bf16.msra.mxu0 %v6128
        %6499 = vmatpush.bf16.msra.mxu0 %v6122
        %6500 = vmatpush.bf16.msra.mxu0 %v6116
        %6501 = vmatpush.bf16.msra.mxu0 %v6110
        %6502 = vmatpush.bf16.msra.mxu0 %v6104
        %6503 = vmatpush.bf16.msra.mxu0 %v6098
        %6504 = vmatmul.bf16.gmra.mxu0 %v5557
        %v6505 = vpop.f32.mrf.mxu0
        %v6506 = vadd.f32 %v6487, %v6505
        %v6507 = vpop.f32.mrf.mxu0
        %v6508 = vadd.f32 %v6489, %v6507
        %6509 = vmatmul.bf16.gmra.mxu0 %v5560
        %v6510 = vpop.f32.mrf.mxu0
        %v6511 = vadd.f32 %v6492, %v6510
        %v6512 = vpop.f32.mrf.mxu0
        %v6513 = vadd.f32 %v6494, %v6512
        %6514 = vdwg.mxu0
        %6515 = vmatpush.bf16.msra.mxu0 %v6045
        %6516 = vmatpush.bf16.msra.mxu0 %v6039
        %6517 = vmatpush.bf16.msra.mxu0 %v6033
        %6518 = vmatpush.bf16.msra.mxu0 %v6027
        %6519 = vmatpush.bf16.msra.mxu0 %v6021
        %6520 = vmatpush.bf16.msra.mxu0 %v6015
        %6521 = vmatpush.bf16.msra.mxu0 %v6009
        %6522 = vmatpush.bf16.msra.mxu0 %v6003
        %6523 = vmatmul.bf16.gmra.mxu0 %v5555
        %v6524 = vpop.f32.mrf.mxu0
        %v6525 = vadd.f32 0.0, %v6524
        %v6526 = vpop.f32.mrf.mxu0
        %v6527 = vadd.f32 0.0, %v6526
        %6528 = vmatmul.bf16.gmra.mxu0 %v5558
        %v6529 = vpop.f32.mrf.mxu0
        %v6530 = vadd.f32 0.0, %v6529
        %v6531 = vpop.f32.mrf.mxu0
        %v6532 = vadd.f32 0.0, %v6531
        %6533 = vdwg.mxu0
        %6534 = vmatpush.bf16.msra.mxu0 %v6093
        %6535 = vmatpush.bf16.msra.mxu0 %v6087
        %6536 = vmatpush.bf16.msra.mxu0 %v6081
        %6537 = vmatpush.bf16.msra.mxu0 %v6075
        %6538 = vmatpush.bf16.msra.mxu0 %v6069
        %6539 = vmatpush.bf16.msra.mxu0 %v6063
        %6540 = vmatpush.bf16.msra.mxu0 %v6057
        %6541 = vmatpush.bf16.msra.mxu0 %v6051
        %6542 = vmatmul.bf16.gmra.mxu0 %v5556
        %v6543 = vpop.f32.mrf.mxu0
        %v6544 = vadd.f32 %v6525, %v6543
        %v6545 = vpop.f32.mrf.mxu0
        %v6546 = vadd.f32 %v6527, %v6545
        %6547 = vmatmul.bf16.gmra.mxu0 %v5559
        %v6548 = vpop.f32.mrf.mxu0
        %v6549 = vadd.f32 %v6530, %v6548
        %v6550 = vpop.f32.mrf.mxu0
        %v6551 = vadd.f32 %v6532, %v6550
        %6552 = vdwg.mxu0
        %6553 = vmatpush.bf16.msra.mxu0 %v6141
        %6554 = vmatpush.bf16.msra.mxu0 %v6135
        %6555 = vmatpush.bf16.msra.mxu0 %v6129
        %6556 = vmatpush.bf16.msra.mxu0 %v6123
        %6557 = vmatpush.bf16.msra.mxu0 %v6117
        %6558 = vmatpush.bf16.msra.mxu0 %v6111
        %6559 = vmatpush.bf16.msra.mxu0 %v6105
        %6560 = vmatpush.bf16.msra.mxu0 %v6099
        %6561 = vmatmul.bf16.gmra.mxu0 %v5557
        %v6562 = vpop.f32.mrf.mxu0
        %v6563 = vadd.f32 %v6544, %v6562
        %v6564 = vpop.f32.mrf.mxu0
        %v6565 = vadd.f32 %v6546, %v6564
        %6566 = vmatmul.bf16.gmra.mxu0 %v5560
        %v6567 = vpop.f32.mrf.mxu0
        %v6568 = vadd.f32 %v6549, %v6567
        %v6569 = vpop.f32.mrf.mxu0
        %v6570 = vadd.f32 %v6551, %v6569
        %6571 = vdwg.mxu0
        %6572 = vmatpush.bf16.msra.mxu0 %v6046
        %6573 = vmatpush.bf16.msra.mxu0 %v6040
        %6574 = vmatpush.bf16.msra.mxu0 %v6034
        %6575 = vmatpush.bf16.msra.mxu0 %v6028
        %6576 = vmatpush.bf16.msra.mxu0 %v6022
        %6577 = vmatpush.bf16.msra.mxu0 %v6016
        %6578 = vmatpush.bf16.msra.mxu0 %v6010
        %6579 = vmatpush.bf16.msra.mxu0 %v6004
        %6580 = vmatmul.bf16.gmra.mxu0 %v5555
        %v6581 = vpop.f32.mrf.mxu0
        %v6582 = vadd.f32 0.0, %v6581
        %v6583 = vpop.f32.mrf.mxu0
        %v6584 = vadd.f32 0.0, %v6583
        %6585 = vmatmul.bf16.gmra.mxu0 %v5558
        %v6586 = vpop.f32.mrf.mxu0
        %v6587 = vadd.f32 0.0, %v6586
        %v6588 = vpop.f32.mrf.mxu0
        %v6589 = vadd.f32 0.0, %v6588
        %6590 = vdwg.mxu0
        %6591 = vmatpush.bf16.msra.mxu0 %v6094
        %6592 = vmatpush.bf16.msra.mxu0 %v6088
        %6593 = vmatpush.bf16.msra.mxu0 %v6082
        %6594 = vmatpush.bf16.msra.mxu0 %v6076
        %6595 = vmatpush.bf16.msra.mxu0 %v6070
        %6596 = vmatpush.bf16.msra.mxu0 %v6064
        %6597 = vmatpush.bf16.msra.mxu0 %v6058
        %6598 = vmatpush.bf16.msra.mxu0 %v6052
        %6599 = vmatmul.bf16.gmra.mxu0 %v5556
        %v6600 = vpop.f32.mrf.mxu0
        %v6601 = vadd.f32 %v6582, %v6600
        %v6602 = vpop.f32.mrf.mxu0
        %v6603 = vadd.f32 %v6584, %v6602
        %6604 = vmatmul.bf16.gmra.mxu0 %v5559
        %v6605 = vpop.f32.mrf.mxu0
        %v6606 = vadd.f32 %v6587, %v6605
        %v6607 = vpop.f32.mrf.mxu0
        %v6608 = vadd.f32 %v6589, %v6607
        %6609 = vdwg.mxu0
        %6610 = vmatpush.bf16.msra.mxu0 %v6142
        %6611 = vmatpush.bf16.msra.mxu0 %v6136
        %6612 = vmatpush.bf16.msra.mxu0 %v6130
        %6613 = vmatpush.bf16.msra.mxu0 %v6124
        %6614 = vmatpush.bf16.msra.mxu0 %v6118
        %6615 = vmatpush.bf16.msra.mxu0 %v6112
        %6616 = vmatpush.bf16.msra.mxu0 %v6106
        %6617 = vmatpush.bf16.msra.mxu0 %v6100
        %6618 = vmatmul.bf16.gmra.mxu0 %v5557
        %v6619 = vpop.f32.mrf.mxu0
        %v6620 = vadd.f32 %v6601, %v6619
        %v6621 = vpop.f32.mrf.mxu0
        %v6622 = vadd.f32 %v6603, %v6621
        %6623 = vmatmul.bf16.gmra.mxu0 %v5560
        %v6624 = vpop.f32.mrf.mxu0
        %v6625 = vadd.f32 %v6606, %v6624
        %v6626 = vpop.f32.mrf.mxu0
        %v6627 = vadd.f32 %v6608, %v6626
        %6628 = vdwg.mxu0
        %p6629 = scmp.eq.s32.totalorder %s22, 0
        // Predicated region
        $region85: #{tpu_custom_call.1} parent=51 // pred_check
          %p6630 = pneg %p6629
        $region86: #{tpu_custom_call.1} parent=51 // pred_check_branch
          %6632 = sbr.rel (%p6630) target = $region88
        $region87: #{tpu_custom_call.1} parent=51 // pred_region
          %v6633 = vld [vmem:[#allocation13] sm:$0x3f]
          %v6635 = vperm.slane %v6633, 0
          %v6636 = vperm.slane %v6633, 1
          %v6637 = vperm.slane %v6633, 2
          %v6638 = vperm.slane %v6633, 3
          %v6639 = vperm.slane %v6633, 4
          %v6640 = vperm.slane %v6633, 5
          %v6647 = vadd.f32 %v6335, %v6635
          %v6648 = vadd.f32 %v6392, %v6636
          %v6649 = vadd.f32 %v6449, %v6637
          %v6650 = vadd.f32 %v6506, %v6638
          %v6651 = vadd.f32 %v6563, %v6639
          %v6652 = vadd.f32 %v6620, %v6640
          %v6653 = vadd.f32 %v6337, %v6635
          %v6654 = vadd.f32 %v6394, %v6636
          %v6655 = vadd.f32 %v6451, %v6637
          %v6656 = vadd.f32 %v6508, %v6638
          %v6657 = vadd.f32 %v6565, %v6639
          %v6658 = vadd.f32 %v6622, %v6640
          %v6659 = vadd.f32 %v6340, %v6635
          %v6660 = vadd.f32 %v6397, %v6636
          %v6661 = vadd.f32 %v6454, %v6637
          %v6662 = vadd.f32 %v6511, %v6638
          %v6663 = vadd.f32 %v6568, %v6639
          %v6664 = vadd.f32 %v6625, %v6640
          %v6665 = vadd.f32 %v6342, %v6635
          %v6666 = vadd.f32 %v6399, %v6636
          %v6667 = vadd.f32 %v6456, %v6637
          %v6668 = vadd.f32 %v6513, %v6638
          %v6669 = vadd.f32 %v6570, %v6639
          %v6670 = vadd.f32 %v6627, %v6640
          %6671 = vst [vmem:[#allocation14] sm:$0xff] %v6647
          %6672 = vst [vmem:[#allocation14 + $0x8] sm:$0xff] %v6648
          %6673 = vst [vmem:[#allocation14 + $0x10] sm:$0xff] %v6649
          %6674 = vst [vmem:[#allocation14 + $0x18] sm:$0xff] %v6650
          %6675 = vst [vmem:[#allocation14 + $0x20] sm:$0xff] %v6651
          %6676 = vst [vmem:[#allocation14 + $0x28] sm:$0xff] %v6652
          %6677 = vst [vmem:[#allocation14 + $0x30] sm:$0xff] %v6653
          %6678 = vst [vmem:[#allocation14 + $0x38] sm:$0xff] %v6654
          %6679 = vst [vmem:[#allocation14 + $0x40] sm:$0xff] %v6655
          %6680 = vst [vmem:[#allocation14 + $0x48] sm:$0xff] %v6656
          %6681 = vst [vmem:[#allocation14 + $0x50] sm:$0xff] %v6657
          %6682 = vst [vmem:[#allocation14 + $0x58] sm:$0xff] %v6658
          %6683 = vst [vmem:[#allocation14 + $0x60] sm:$0xff] %v6659
          %6684 = vst [vmem:[#allocation14 + $0x68] sm:$0xff] %v6660
          %6685 = vst [vmem:[#allocation14 + $0x70] sm:$0xff] %v6661
          %6686 = vst [vmem:[#allocation14 + $0x78] sm:$0xff] %v6662
          %6687 = vst [vmem:[#allocation14 + $0x80] sm:$0xff] %v6663
          %6688 = vst [vmem:[#allocation14 + $0x88] sm:$0xff] %v6664
          %6689 = vst [vmem:[#allocation14 + $0x90] sm:$0xff] %v6665
          %6690 = vst [vmem:[#allocation14 + $0x98] sm:$0xff] %v6666
          %6691 = vst [vmem:[#allocation14 + $0xa0] sm:$0xff] %v6667
          %6692 = vst [vmem:[#allocation14 + $0xa8] sm:$0xff] %v6668
          %6693 = vst [vmem:[#allocation14 + $0xb0] sm:$0xff] %v6669
          %6694 = vst [vmem:[#allocation14 + $0xb8] sm:$0xff] %v6670
        $region88: #{tpu_custom_call.1} parent=51 // pred_fallthru
          _
        %p6695 = scmp.gt.s32.totalorder %s22, 0
        // Predicated region
        $region89: #{tpu_custom_call.1} parent=51 // pred_check
          %p6696 = pneg %p6695
        $region90: #{tpu_custom_call.1} parent=51 // pred_check_branch
          %6698 = sbr.rel (%p6696) target = $region92
        $region91: #{tpu_custom_call.1} parent=51 // pred_region
          %v6699 = vld [vmem:[#allocation14] sm:$0xff]
          %v6700 = vld [vmem:[#allocation14 + $0x8] sm:$0xff]
          %v6701 = vld [vmem:[#allocation14 + $0x10] sm:$0xff]
          %v6702 = vld [vmem:[#allocation14 + $0x18] sm:$0xff]
          %v6703 = vld [vmem:[#allocation14 + $0x20] sm:$0xff]
          %v6704 = vld [vmem:[#allocation14 + $0x28] sm:$0xff]
          %v6705 = vld [vmem:[#allocation14 + $0x30] sm:$0xff]
          %v6706 = vld [vmem:[#allocation14 + $0x38] sm:$0xff]
          %v6707 = vld [vmem:[#allocation14 + $0x40] sm:$0xff]
          %v6708 = vld [vmem:[#allocation14 + $0x48] sm:$0xff]
          %v6709 = vld [vmem:[#allocation14 + $0x50] sm:$0xff]
          %v6710 = vld [vmem:[#allocation14 + $0x58] sm:$0xff]
          %v6711 = vld [vmem:[#allocation14 + $0x60] sm:$0xff]
          %v6712 = vld [vmem:[#allocation14 + $0x68] sm:$0xff]
          %v6713 = vld [vmem:[#allocation14 + $0x70] sm:$0xff]
          %v6714 = vld [vmem:[#allocation14 + $0x78] sm:$0xff]
          %v6715 = vld [vmem:[#allocation14 + $0x80] sm:$0xff]
          %v6716 = vld [vmem:[#allocation14 + $0x88] sm:$0xff]
          %v6717 = vld [vmem:[#allocation14 + $0x90] sm:$0xff]
          %v6718 = vld [vmem:[#allocation14 + $0x98] sm:$0xff]
          %v6719 = vld [vmem:[#allocation14 + $0xa0] sm:$0xff]
          %v6720 = vld [vmem:[#allocation14 + $0xa8] sm:$0xff]
          %v6721 = vld [vmem:[#allocation14 + $0xb0] sm:$0xff]
          %v6722 = vld [vmem:[#allocation14 + $0xb8] sm:$0xff]
          %v6723 = vadd.f32 %v6699, %v6335
          %v6724 = vadd.f32 %v6700, %v6392
          %v6725 = vadd.f32 %v6701, %v6449
          %v6726 = vadd.f32 %v6702, %v6506
          %v6727 = vadd.f32 %v6703, %v6563
          %v6728 = vadd.f32 %v6704, %v6620
          %v6729 = vadd.f32 %v6705, %v6337
          %v6730 = vadd.f32 %v6706, %v6394
          %v6731 = vadd.f32 %v6707, %v6451
          %v6732 = vadd.f32 %v6708, %v6508
          %v6733 = vadd.f32 %v6709, %v6565
          %v6734 = vadd.f32 %v6710, %v6622
          %v6735 = vadd.f32 %v6711, %v6340
          %v6736 = vadd.f32 %v6712, %v6397
          %v6737 = vadd.f32 %v6713, %v6454
          %v6738 = vadd.f32 %v6714, %v6511
          %v6739 = vadd.f32 %v6715, %v6568
          %v6740 = vadd.f32 %v6716, %v6625
          %v6741 = vadd.f32 %v6717, %v6342
          %v6742 = vadd.f32 %v6718, %v6399
          %v6743 = vadd.f32 %v6719, %v6456
          %v6744 = vadd.f32 %v6720, %v6513
          %v6745 = vadd.f32 %v6721, %v6570
          %v6746 = vadd.f32 %v6722, %v6627
          %6747 = vst [vmem:[#allocation14] sm:$0xff] %v6723
          %6748 = vst [vmem:[#allocation14 + $0x8] sm:$0xff] %v6724
          %6749 = vst [vmem:[#allocation14 + $0x10] sm:$0xff] %v6725
          %6750 = vst [vmem:[#allocation14 + $0x18] sm:$0xff] %v6726
          %6751 = vst [vmem:[#allocation14 + $0x20] sm:$0xff] %v6727
          %6752 = vst [vmem:[#allocation14 + $0x28] sm:$0xff] %v6728
          %6753 = vst [vmem:[#allocation14 + $0x30] sm:$0xff] %v6729
          %6754 = vst [vmem:[#allocation14 + $0x38] sm:$0xff] %v6730
          %6755 = vst [vmem:[#allocation14 + $0x40] sm:$0xff] %v6731
          %6756 = vst [vmem:[#allocation14 + $0x48] sm:$0xff] %v6732
          %6757 = vst [vmem:[#allocation14 + $0x50] sm:$0xff] %v6733
          %6758 = vst [vmem:[#allocation14 + $0x58] sm:$0xff] %v6734
          %6759 = vst [vmem:[#allocation14 + $0x60] sm:$0xff] %v6735
          %6760 = vst [vmem:[#allocation14 + $0x68] sm:$0xff] %v6736
          %6761 = vst [vmem:[#allocation14 + $0x70] sm:$0xff] %v6737
          %6762 = vst [vmem:[#allocation14 + $0x78] sm:$0xff] %v6738
          %6763 = vst [vmem:[#allocation14 + $0x80] sm:$0xff] %v6739
          %6764 = vst [vmem:[#allocation14 + $0x88] sm:$0xff] %v6740
          %6765 = vst [vmem:[#allocation14 + $0x90] sm:$0xff] %v6741
          %6766 = vst [vmem:[#allocation14 + $0x98] sm:$0xff] %v6742
          %6767 = vst [vmem:[#allocation14 + $0xa0] sm:$0xff] %v6743
          %6768 = vst [vmem:[#allocation14 + $0xa8] sm:$0xff] %v6744
          %6769 = vst [vmem:[#allocation14 + $0xb0] sm:$0xff] %v6745
          %6770 = vst [vmem:[#allocation14 + $0xb8] sm:$0xff] %v6746
        $region92: #{tpu_custom_call.1} parent=51 // pred_fallthru
          _
        // Predicated region
        $region93: #{tpu_custom_call.1} parent=51 // pred_check
          %p6771 = pneg %p228
        $region94: #{tpu_custom_call.1} parent=51 // pred_check_branch
          %6773 = sbr.rel (%p6771) target = $region96
        $region95: #{tpu_custom_call.1} parent=51 // pred_region
          %6775 = vsyncadd [#allocation5], 0
          %s6776 = sshll.u32 [#allocation14], 4
          %s6777 = int_to_ptr.vmem [resolvable:$true] %s6776
          %s6778 = sshll.u32 %s8, 4
          %s6779 = int_to_ptr.hbm [resolvable:$true] %s6778
          %6784 = dma.vmem_to_hbm [thread:$0]  %s6777, 3072, %s6779, [#allocation5], 768, 768, 48
        $region96: #{tpu_custom_call.1} parent=51 // pred_fallthru
          _
        // Predicated region
        $region97: #{tpu_custom_call.1} parent=51 // pred_check
          %p6785 = pneg %p228
        $region98: #{tpu_custom_call.1} parent=51 // pred_check_branch
          %6787 = sbr.rel (%p6785) target = $region100
        $region99: #{tpu_custom_call.1} parent=51 // pred_region
          %6789 = dma.done [#allocation5], 3072
        $region100: #{tpu_custom_call.1} parent=51 // pred_fallthru
          _
      $region52: #{tpu_custom_call.1} parent=5 // pred_fallthru
        _
      %p6790 = scmp.le.s32.totalorder 2, %s17
      // Predicated region
      $region101: #{tpu_custom_call.1} parent=5 // pred_check
        %p6791 = pneg %p6790
      $region102: #{tpu_custom_call.1} parent=5 // pred_check_branch
        %6793 = sbr.rel (%p6791) target = $region104
      $region103: #{tpu_custom_call.1} parent=5 // pred_region
        %s6794 = ssub.s32 %s17, 2
      $region104: #{tpu_custom_call.1} parent=5 // pred_fallthru
        _
    $region6: #{tpu_custom_call.1} parent=1 // loop_footer
      %s21 = sadd.s32 1, %s17
    $region7: #{tpu_custom_call.1} parent=1 // loop_footer_branch
      %16 = sbr.rel target = $region3
    $region8: #{tpu_custom_call.1} parent=1 // loop_exit
      _
    %6795 = vsyncpa [#allocation4], 1
    %s6796 = scalar_lea.sflag [#allocation4], 1
    %6797 = vsyncpa %s6796, 1
    %6798 = vsyncpa [#allocation7], 1
    %6799 = vsyncpa [#allocation5], 1
    %s6800 = scalar_lea.sflag [#allocation5], 1
    %6801 = vsyncpa %s6800, 1

</llo_original>
